<compile_context>
chip_gen: v7x
topology: tpu7x:2x2x1
jax: 0.10.0
libtpu: 0.0.40
codegen_flags: <defaults>
</compile_context>

<pallas_src>
import jax
import jax.numpy as jnp
from jax.experimental import pallas as pl
from jax.experimental.pallas import tpu as pltpu

K = 64                                   # FeatureTransform k -> output (B, 64, 64)
STAGE1_VMEM_LIMIT = 48 * 1024 * 1024     # v7x-safe (<64 MiB/TC), roomy for v5e/v6e
FC_VMEM_LIMIT = 32 * 1024 * 1024


# ----------------------------- stage 1 kernel ------------------------------ #

def _make_point_mlp_kernel(acc_w, folds):
    """Channel-major point MLP on a (64, TN) tile + running max over points."""
    def kernel(x_ref, w1_ref, b1_ref, w2_ref, b2_ref, w3_ref, b3_ref,
               o_ref, acc_ref):
        n_idx = pl.program_id(1)

        @pl.when(n_idx == 0)
        def _():
            acc_ref[...] = jnp.full_like(acc_ref, -jnp.inf)

        x = x_ref[0].astype(jnp.bfloat16)                         # (64, TN)
        h = jnp.dot(w1_ref[...], x,
                    preferred_element_type=jnp.float32) + b1_ref[...]
        h = jnp.maximum(h, 0.0).astype(jnp.bfloat16)              # (128, TN)
        h = jnp.dot(w2_ref[...], h,
                    preferred_element_type=jnp.float32) + b2_ref[...]
        h = jnp.maximum(h, 0.0).astype(jnp.bfloat16)              # (256, TN)
        h = jnp.dot(w3_ref[...], h,
                    preferred_element_type=jnp.float32) + b3_ref[...]
        h = jnp.maximum(h, 0.0)                                   # (1024, TN) f32

        # Fold the point axis into the lane-width accumulator: lane-tile-aligned
        # static slices, pure VPU maxes (hidden under the MXU).
        m = acc_ref[...]
        for j in range(folds):
            m = jnp.maximum(m, h[:, j * acc_w:(j + 1) * acc_w])
        acc_ref[...] = m

        @pl.when(n_idx == pl.num_programs(1) - 1)
        def _():
            # Single cross-lane reduce, once per batch.
            o_ref[0] = jnp.max(acc_ref[...], axis=1, keepdims=True)   # (1024, 1)
    return kernel


# ----------------------------- stage 2 kernel ------------------------------ #

def fc_head_kernel(alpha_ref, g_ref, fw1_ref, fb1_ref, fw2_ref, fb2_ref, o_ref):
    """fc1 + PReLU + fc2 (identity folded into fb2).

    fc1+PReLU is recomputed on every column-tile step (fw1 is VMEM resident,
    the recompute is a few MFLOPs under an HBM-bound weight stream), so there
    is no cross-step state and the grid axis can be "parallel" (v7x megacore)."""
    y1 = jnp.dot(g_ref[...].astype(jnp.bfloat16), fw1_ref[...],
                 preferred_element_type=jnp.float32) + fb1_ref[...]
    a = alpha_ref[0, 0]
    h = jnp.where(y1 > 0.0, y1, a * y1).astype(jnp.bfloat16)      # PReLU
    o_ref[...] = jnp.dot(h, fw2_ref[...],
                         preferred_element_type=jnp.float32) + fb2_ref[...]


# ----------------------------- wrappers ------------------------------------ #

def _prepare_points(x_ncw):
    """Edge-pad the point axis to a lane multiple (max-pool invariant) and pick
    the largest point tile that fits comfortably in VMEM."""
    N = x_ncw.shape[2]
    n_pad = -(-N // 128) * 128
    if n_pad != N:
        x_ncw = jnp.pad(x_ncw, ((0, 0), (0, 0), (0, n_pad - N)), mode="edge")
    for t in (2048, 1024, 512, 256, 128):
        if n_pad % t == 0:
            return x_ncw, t
    return x_ncw, n_pad


def point_mlp_max(x_ncw, w1, b1, w2, b2, w3, b3, tn):
    """x_ncw: (B, 64, N) f32 (N % tn == 0) -> g: (B, 1024) f32."""
    B, Cin, N = x_ncw.shape
    assert N % tn == 0
    acc_w = 128 if tn % 128 == 0 else tn
    folds = tn // acc_w

    out = pl.pallas_call(
        _make_point_mlp_kernel(acc_w, folds),
        out_shape=jax.ShapeDtypeStruct((B, 1024, 1), jnp.float32),
        grid_spec=pltpu.PrefetchScalarGridSpec(
            num_scalar_prefetch=0,
            grid=(B, N // tn),
            in_specs=[
                pl.BlockSpec((1, Cin, tn), lambda b, n: (b, 0, n)),
                pl.BlockSpec(w1.shape, lambda b, n: (0, 0)),
                pl.BlockSpec(b1.shape, lambda b, n: (0, 0)),
                pl.BlockSpec(w2.shape, lambda b, n: (0, 0)),
                pl.BlockSpec(b2.shape, lambda b, n: (0, 0)),
                pl.BlockSpec(w3.shape, lambda b, n: (0, 0)),
                pl.BlockSpec(b3.shape, lambda b, n: (0, 0)),
            ],
            out_specs=pl.BlockSpec((1, 1024, 1), lambda b, n: (b, 0, 0)),
            scratch_shapes=[pltpu.VMEM((1024, acc_w), jnp.float32)],
        ),
        compiler_params=pltpu.CompilerParams(
            dimension_semantics=("parallel", "arbitrary"),
            vmem_limit_bytes=STAGE1_VMEM_LIMIT),
    )(x_ncw, w1, b1, w2, b2, w3, b3)
    return out.reshape(B, 1024)


def fc_head(g, fw1, fb1, fw2, fb2_eff, alpha, tn=1024):
    """g:(B,1024) f32 -> (B, K*K) f32.  fw1/fw2 bf16, identity folded in fb2."""
    B, C1 = g.shape
    C2 = fw1.shape[1]
    KK = fw2.shape[1]
    tn = min(tn, KK)
    assert KK % tn == 0, "fc2 output dim must be divisible by the column tile"

    cost = pl.CostEstimate(
        flops=2 * B * (C1 * C2 * (KK // tn) + C2 * KK),
        transcendentals=0,
        bytes_accessed=(fw1.size * fw1.dtype.itemsize
                        + fw2.size * fw2.dtype.itemsize
                        + g.size * g.dtype.itemsize
                        + B * KK * 4 + (C2 + KK) * 4))

    return pl.pallas_call(
        fc_head_kernel,
        out_shape=jax.ShapeDtypeStruct((B, KK), jnp.float32),
        grid_spec=pltpu.PrefetchScalarGridSpec(
            num_scalar_prefetch=0,
            grid=(KK // tn,),
            in_specs=[
                pl.BlockSpec(memory_space=pltpu.MemorySpace.SMEM),   # alpha (1,1)
                pl.BlockSpec((B, C1), lambda j: (0, 0)),             # g
                pl.BlockSpec((C1, C2), lambda j: (0, 0)),            # fw1 (resident)
                pl.BlockSpec((1, C2), lambda j: (0, 0)),             # fb1
                pl.BlockSpec((C2, tn), lambda j: (0, j)),            # fw2 column tile
                pl.BlockSpec((1, tn), lambda j: (0, j)),             # fb2+iden tile
            ],
            out_specs=pl.BlockSpec((B, tn), lambda j: (0, j)),
        ),
        compiler_params=pltpu.CompilerParams(
            dimension_semantics=("parallel",),
            vmem_limit_bytes=FC_VMEM_LIMIT),
        cost_estimate=cost,
    )(alpha, g, fw1, fb1, fw2, fb2_eff)


def feature_transform_forward(x_ncw, Q):
    """x_ncw: (B, 64, N) like the PyTorch module; returns (B, K, K)."""
    x_p, tn = _prepare_points(x_ncw)
    g = point_mlp_max(x_p, Q["w1"], Q["b1"], Q["w2"], Q["b2"],
                      Q["w3"], Q["b3"], tn)                        # (B, 1024)
    # dropout1 / dropout2: identity in eval mode
    y = fc_head(g, Q["fw1"], Q["fb1"], Q["fw2"], Q["fb2"], Q["alpha"])
    return y.reshape(-1, K, K)


# ----------------------------- parameters ---------------------------------- #

def _xavier(key, shape, fan_in, fan_out):
    limit = jnp.sqrt(6.0 / (fan_in + fan_out))
    return jax.random.uniform(key, shape, jnp.float32, -limit, limit)


def _fold_bn(w_oi, b, gamma, beta, mean, var, eps=1e-5):
    # Conv1d(kernel_size=1) + inference-mode BatchNorm1d folds into one affine
    # map on channels; w_oi is (out, in).
    scale = gamma / jnp.sqrt(var + eps)
    return w_oi * scale[:, None], (b - mean) * scale + beta


def make_params(key):
    """f32 master parameters (the true PyTorch-module numerics)."""
    ks = iter(jax.random.split(key, 32))
    P = {}
    for i, (ci, co) in enumerate([(64, 128), (128, 256), (256, 1024)], start=1):
        w = _xavier(next(ks), (co, ci), ci, co)
        b = 0.01 * jax.random.normal(next(ks), (co,), jnp.float32)
        gamma = 1.0 + 0.05 * jax.random.normal(next(ks), (co,), jnp.float32)
        beta = 0.05 * jax.random.normal(next(ks), (co,), jnp.float32)
        mean = 0.1 * jax.random.normal(next(ks), (co,), jnp.float32)
        var = 1.0 + 0.1 * jnp.abs(jax.random.normal(next(ks), (co,), jnp.float32))
        P[f"w{i}"], P[f"b{i}"] = _fold_bn(w, b, gamma, beta, mean, var)
    P["fw1"] = _xavier(next(ks), (1024, 2048), 1024, 2048)
    P["fb1"] = 0.01 * jax.random.normal(next(ks), (2048,), jnp.float32)
    P["fw2"] = _xavier(next(ks), (2048, K * K), 2048, K * K)
    P["fb2"] = 0.01 * jax.random.normal(next(ks), (K * K,), jnp.float32)
    P["alpha"] = 0.1                                   # nn.PReLU(init=0.1), scalar
    return P


def prepare_kernel_params(P):
    """Kernel-side params: bf16 weights, channel-major biases, iden folded."""
    Q = {}
    for i in (1, 2, 3):
        Q[f"w{i}"] = P[f"w{i}"].astype(jnp.bfloat16)            # (out, in)
        Q[f"b{i}"] = P[f"b{i}"][:, None]                        # (out, 1) f32
    Q["fw1"] = P["fw1"].astype(jnp.bfloat16)
    Q["fb1"] = P["fb1"][None, :]
    Q["fw2"] = P["fw2"].astype(jnp.bfloat16)
    Q["fb2"] = (P["fb2"] + jnp.eye(K, dtype=jnp.float32).reshape(K * K))[None, :]
    Q["alpha"] = jnp.full((1, 1), P["alpha"], jnp.float32)
    return Q


def jax_reference(x_ncw, P):
    """Pure-f32 reference (master params, no bf16) of the PyTorch forward."""
    x = jnp.transpose(x_ncw, (0, 2, 1))                          # (B, N, 64)
    h = jnp.maximum(x @ P["w1"].T + P["b1"], 0.0)
    h = jnp.maximum(h @ P["w2"].T + P["b2"], 0.0)
    h = jnp.maximum(h @ P["w3"].T + P["b3"], 0.0)
    g = jnp.max(h, axis=1)                                       # (B, 1024)
    y = g @ P["fw1"] + P["fb1"]
    y = jnp.where(y > 0.0, y, P["alpha"] * y)
    y = y @ P["fw2"] + P["fb2"]
    y = y + jnp.eye(K, dtype=jnp.float32).reshape(1, K * K)
    return y.reshape(-1, K, K)


# ----------------------------- main ----------------------------------------- #

if __name__ == "__main__":
    key = jax.random.PRNGKey(0)
    kx, kp = jax.random.split(key)
    B, N = 2, 16                                     # small: batch=2, 16 points
    x = jax.random.normal(kx, (B, 64, N), jnp.float32)     # PyTorch NCW layout

    P = make_params(kp)                 # f32 masters (reference numerics)
    Q = prepare_kernel_params(P)        # bf16 kernel params

    out = jax.block_until_ready(feature_transform_forward(x, Q))
    assert out.shape == (B, K, K), out.shape

    ref = jax.block_until_ready(jax_reference(x, P))
    err = float(jnp.max(jnp.abs(out - ref)))
    if not jnp.allclose(out, ref, rtol=2e-2, atol=2e-2):
        raise AssertionError(f"Pallas output mismatch vs f32 reference, max|diff|={err}")

    print("KERNEL_OK")
</pallas_src>

<mosaic_0001>
module attributes {stable_mosaic.version = 11 : i64} {
  func.func @kernel(%arg0: i32, %arg1: i32, %arg2: memref<1x64x128xf32, #tpu.memory_space<vmem>>, %arg3: memref<128x64xbf16, #tpu.memory_space<vmem>>, %arg4: memref<128x1xf32, #tpu.memory_space<vmem>>, %arg5: memref<256x128xbf16, #tpu.memory_space<vmem>>, %arg6: memref<256x1xf32, #tpu.memory_space<vmem>>, %arg7: memref<1024x256xbf16, #tpu.memory_space<vmem>>, %arg8: memref<1024x1xf32, #tpu.memory_space<vmem>>, %arg9: memref<1x1024x1xf32, #tpu.memory_space<vmem>>, %arg10: memref<1024x128xf32, #tpu.memory_space<vmem>>) attributes {dimension_semantics = [#tpu.dimension_semantics<parallel>, #tpu.dimension_semantics<arbitrary>], iteration_bounds = array<i64: 2, 1>, scalar_prefetch = 0 : i64, scratch_operands = 1 : i64, tpu.core_type = #tpu.core_type<tc>, window_params = [{transform_indices = @transform_0, window_bounds = array<i64: 1, 64, 128>}, {pipeline_mode = #tpu.pipeline_mode<synchronous>, transform_indices = @transform_1, window_bounds = array<i64: 128, 64>}, {pipeline_mode = #tpu.pipeline_mode<synchronous>, transform_indices = @transform_2, window_bounds = array<i64: 128, 1>}, {pipeline_mode = #tpu.pipeline_mode<synchronous>, transform_indices = @transform_3, window_bounds = array<i64: 256, 128>}, {pipeline_mode = #tpu.pipeline_mode<synchronous>, transform_indices = @transform_4, window_bounds = array<i64: 256, 1>}, {pipeline_mode = #tpu.pipeline_mode<synchronous>, transform_indices = @transform_5, window_bounds = array<i64: 1024, 256>}, {pipeline_mode = #tpu.pipeline_mode<synchronous>, transform_indices = @transform_6, window_bounds = array<i64: 1024, 1>}, {transform_indices = @transform_7, window_bounds = array<i64: 1, 1024, 1>}]} {
    %c0_i32 = arith.constant 0 : i32
    %0 = arith.cmpi eq, %arg1, %c0_i32 : i32
    %1 = arith.extui %0 : i1 to i32
    %c0_i32_0 = arith.constant 0 : i32
    %2 = arith.cmpi ne, %1, %c0_i32_0 : i32
    scf.if %2 {
      %cst_26 = arith.constant 0xFF800000 : f32
      %35 = vector.broadcast %cst_26 : f32 to vector<1024x128xf32>
      %c0_27 = arith.constant 0 : index
      %c0_28 = arith.constant 0 : index
      %36 = vector.load %arg10[%c0_27, %c0_28] : memref<1024x128xf32, #tpu.memory_space<vmem>>, vector<1024x128xf32>
      tpu.vector_store %arg10[%c0_27, %c0_28], %35 {strides = array<i32>} : memref<1024x128xf32, #tpu.memory_space<vmem>>, vector<1024x128xf32>,
    } else {
    }
    %c0 = arith.constant 0 : index
    %c0_1 = arith.constant 0 : index
    %c0_2 = arith.constant 0 : index
    %3 = vector.load %arg2[%c0, %c0_1, %c0_2] : memref<1x64x128xf32, #tpu.memory_space<vmem>>, vector<1x64x128xf32>
    %4 = vector.shape_cast %3 : vector<1x64x128xf32> to vector<64x128xf32>
    %5 = arith.truncf %4 : vector<64x128xf32> to vector<64x128xbf16>
    %c0_3 = arith.constant 0 : index
    %c0_4 = arith.constant 0 : index
    %6 = vector.load %arg3[%c0_3, %c0_4] : memref<128x64xbf16, #tpu.memory_space<vmem>>, vector<128x64xbf16>
    %cst = arith.constant dense<0.000000e+00> : vector<128x128xf32>
    %7 = tpu.matmul %6, %5, %cst {dimension_numbers = #tpu.dot_dimension_numbers<[1], [0], [0], [1], [0, 0, 1, 1], [], []>} : vector<128x64xbf16>, vector<64x128xbf16>, vector<128x128xf32> -> vector<128x128xf32>
    %c0_5 = arith.constant 0 : index
    %c0_6 = arith.constant 0 : index
    %8 = vector.load %arg4[%c0_5, %c0_6] : memref<128x1xf32, #tpu.memory_space<vmem>>, vector<128x1xf32>
    %9 = vector.broadcast %8 : vector<128x1xf32> to vector<128x128xf32>
    %10 = arith.addf %7, %9 : vector<128x128xf32>
    %cst_7 = arith.constant 0.000000e+00 : f32
    %11 = vector.broadcast %cst_7 : f32 to vector<128x128xf32>
    %12 = arith.maximumf %10, %11 : vector<128x128xf32>
    %13 = arith.truncf %12 : vector<128x128xf32> to vector<128x128xbf16>
    %c0_8 = arith.constant 0 : index
    %c0_9 = arith.constant 0 : index
    %14 = vector.load %arg5[%c0_8, %c0_9] : memref<256x128xbf16, #tpu.memory_space<vmem>>, vector<256x128xbf16>
    %cst_10 = arith.constant dense<0.000000e+00> : vector<256x128xf32>
    %15 = tpu.matmul %14, %13, %cst_10 {dimension_numbers = #tpu.dot_dimension_numbers<[1], [0], [0], [1], [0, 0, 1, 1], [], []>} : vector<256x128xbf16>, vector<128x128xbf16>, vector<256x128xf32> -> vector<256x128xf32>
    %c0_11 = arith.constant 0 : index
    %c0_12 = arith.constant 0 : index
    %16 = vector.load %arg6[%c0_11, %c0_12] : memref<256x1xf32, #tpu.memory_space<vmem>>, vector<256x1xf32>
    %17 = vector.broadcast %16 : vector<256x1xf32> to vector<256x128xf32>
    %18 = arith.addf %15, %17 : vector<256x128xf32>
    %cst_13 = arith.constant 0.000000e+00 : f32
    %19 = vector.broadcast %cst_13 : f32 to vector<256x128xf32>
    %20 = arith.maximumf %18, %19 : vector<256x128xf32>
    %21 = arith.truncf %20 : vector<256x128xf32> to vector<256x128xbf16>
    %c0_14 = arith.constant 0 : index
    %c0_15 = arith.constant 0 : index
    %22 = vector.load %arg7[%c0_14, %c0_15] : memref<1024x256xbf16, #tpu.memory_space<vmem>>, vector<1024x256xbf16>
    %cst_16 = arith.constant dense<0.000000e+00> : vector<1024x128xf32>
    %23 = tpu.matmul %22, %21, %cst_16 {dimension_numbers = #tpu.dot_dimension_numbers<[1], [0], [0], [1], [0, 0, 1, 1], [], []>} : vector<1024x256xbf16>, vector<256x128xbf16>, vector<1024x128xf32> -> vector<1024x128xf32>
    %c0_17 = arith.constant 0 : index
    %c0_18 = arith.constant 0 : index
    %24 = vector.load %arg8[%c0_17, %c0_18] : memref<1024x1xf32, #tpu.memory_space<vmem>>, vector<1024x1xf32>
    %25 = vector.broadcast %24 : vector<1024x1xf32> to vector<1024x128xf32>
    %26 = arith.addf %23, %25 : vector<1024x128xf32>
    %cst_19 = arith.constant 0.000000e+00 : f32
    %27 = vector.broadcast %cst_19 : f32 to vector<1024x128xf32>
    %28 = arith.maximumf %26, %27 : vector<1024x128xf32>
    %c0_20 = arith.constant 0 : index
    %c0_21 = arith.constant 0 : index
    %29 = vector.load %arg10[%c0_20, %c0_21] : memref<1024x128xf32, #tpu.memory_space<vmem>>, vector<1024x128xf32>
    %30 = arith.maximumf %29, %28 : vector<1024x128xf32>
    %c0_22 = arith.constant 0 : index
    %c0_23 = arith.constant 0 : index
    %31 = vector.load %arg10[%c0_22, %c0_23] : memref<1024x128xf32, #tpu.memory_space<vmem>>, vector<1024x128xf32>
    tpu.vector_store %arg10[%c0_22, %c0_23], %30 {strides = array<i32>} : memref<1024x128xf32, #tpu.memory_space<vmem>>, vector<1024x128xf32>,
    %c0_i32_24 = arith.constant 0 : i32
    %32 = arith.cmpi eq, %arg1, %c0_i32_24 : i32
    %33 = arith.extui %32 : i1 to i32
    %c0_i32_25 = arith.constant 0 : i32
    %34 = arith.cmpi ne, %33, %c0_i32_25 : i32
    scf.if %34 {
      %c0_26 = arith.constant 0 : index
      %c0_27 = arith.constant 0 : index
      %35 = vector.load %arg10[%c0_26, %c0_27] : memref<1024x128xf32, #tpu.memory_space<vmem>>, vector<1024x128xf32>
      %cst_28 = arith.constant dense<0xFF800000> : vector<1024xf32>
      %36 = vector.multi_reduction <maximumf>, %35, %cst_28 [1] : vector<1024x128xf32> to vector<1024xf32>
      %37 = vector.shape_cast %36 : vector<1024xf32> to vector<1024x1xf32>
      %c0_29 = arith.constant 0 : index
      %c0_30 = arith.constant 0 : index
      %c0_31 = arith.constant 0 : index
      %38 = vector.load %arg9[%c0_29, %c0_30, %c0_31] : memref<1x1024x1xf32, #tpu.memory_space<vmem>>, vector<1x1024x1xf32>
      %39 = vector.shape_cast %38 : vector<1x1024x1xf32> to vector<1024x1xf32>
      %40 = vector.shape_cast %37 : vector<1024x1xf32> to vector<1x1024x1xf32>
      tpu.vector_store %arg9[%c0_29, %c0_30, %c0_31], %40 {strides = array<i32>} : memref<1x1024x1xf32, #tpu.memory_space<vmem>>, vector<1x1024x1xf32>,
    } else {
    }
    return
  }
  func.func @transform_0(%arg0: i32, %arg1: i32) -> (i32, i32, i32) {
    %c0_i32 = arith.constant 0 : i32
    %c0_i32_0 = arith.constant 0 : i32
    return %arg0, %c0_i32, %arg1 : i32, i32, i32
  }
  func.func @transform_1(%arg0: i32, %arg1: i32) -> (i32, i32) {
    %c0_i32 = arith.constant 0 : i32
    %c0_i32_0 = arith.constant 0 : i32
    %c0_i32_1 = arith.constant 0 : i32
    return %c0_i32, %c0_i32_0 : i32, i32
  }
  func.func @transform_2(%arg0: i32, %arg1: i32) -> (i32, i32) {
    %c0_i32 = arith.constant 0 : i32
    %c0_i32_0 = arith.constant 0 : i32
    %c0_i32_1 = arith.constant 0 : i32
    return %c0_i32, %c0_i32_0 : i32, i32
  }
  func.func @transform_3(%arg0: i32, %arg1: i32) -> (i32, i32) {
    %c0_i32 = arith.constant 0 : i32
    %c0_i32_0 = arith.constant 0 : i32
    %c0_i32_1 = arith.constant 0 : i32
    return %c0_i32, %c0_i32_0 : i32, i32
  }
  func.func @transform_4(%arg0: i32, %arg1: i32) -> (i32, i32) {
    %c0_i32 = arith.constant 0 : i32
    %c0_i32_0 = arith.constant 0 : i32
    %c0_i32_1 = arith.constant 0 : i32
    return %c0_i32, %c0_i32_0 : i32, i32
  }
  func.func @transform_5(%arg0: i32, %arg1: i32) -> (i32, i32) {
    %c0_i32 = arith.constant 0 : i32
    %c0_i32_0 = arith.constant 0 : i32
    %c0_i32_1 = arith.constant 0 : i32
    return %c0_i32, %c0_i32_0 : i32, i32
  }
  func.func @transform_6(%arg0: i32, %arg1: i32) -> (i32, i32) {
    %c0_i32 = arith.constant 0 : i32
    %c0_i32_0 = arith.constant 0 : i32
    %c0_i32_1 = arith.constant 0 : i32
    return %c0_i32, %c0_i32_0 : i32, i32
  }
  func.func @transform_7(%arg0: i32, %arg1: i32) -> (i32, i32, i32) {
    %c0_i32 = arith.constant 0 : i32
    %c0_i32_0 = arith.constant 0 : i32
    %c0_i32_1 = arith.constant 0 : i32
    return %arg0, %c0_i32, %c0_i32_0 : i32, i32, i32
  }
}

</mosaic_0001>

<llo_original>
// kernel: tpu_custom_call.1
$region0: #{tpu_custom_call.1}
  #allocation0 [shape = 'u32[]', space=smem, size = 0x4, offset = 0x4, fixed_abs, tag = 'smem constant byte address 0x4 - core index']
  #allocation1 [shape = 'u32[144,128]{1,0:T(1,128)}', space=vmem, size = 0x12000, scoped, tag = 'internal scratch']
  #allocation2 [shape = 'f32[1024,128]{1,0:T(8,128)}', space=vmem, size = 0x80000, scoped, tag = 'scratch operand']
  %s0 = inlined_call_operand.vmem [shape: f32[2,64,128], index: 0, kind: input, shape index: {}]
  %s1 = inlined_call_operand.vmem [shape: bf16[128,64], index: 1, kind: input, shape index: {}]
  %s2 = inlined_call_operand.vmem [shape: f32[128,1], index: 2, kind: input, shape index: {}]
  %s3 = inlined_call_operand.vmem [shape: bf16[256,128], index: 3, kind: input, shape index: {}]
  %s4 = inlined_call_operand.vmem [shape: f32[256,1], index: 4, kind: input, shape index: {}]
  %s5 = inlined_call_operand.vmem [shape: bf16[1024,256], index: 5, kind: input, shape index: {}]
  %s6 = inlined_call_operand.vmem [shape: f32[1024,1], index: 6, kind: input, shape index: {}]
  %s7 = inlined_call_operand.vmem [shape: f32[2,1024,1], index: 7, kind: output, shape index: {}]
  %s8 = sld [smem:[#allocation0]]
  $region69: #{tpu_custom_call.1} parent=0
    _
  %s10 = ssub.s32 1, %s8
  %s11 = scalar_select 0, %s10, %s8
  loop: start=0, step=1, limit=4
  $region2: #{tpu_custom_call.1} parent=0 // loop_pre_header
    _
  $region3: #{tpu_custom_call.1} parent=0 // loop_header
    %s13 = sphi 0, %s17
    %p14 = scmp.ge.s32.totalorder %s13, 4
    %s20 = sphi 0, %s32
    %s21 = sphi 0, %s28
    %s22 = sphi 0, %s20
    %s23 = sphi 0, %s21
    %s24 = sphi 0, %s22
    %s25 = sphi 0, %s23
    %s37 = sphi 0, %s39
    %s40 = sphi 0, %s37
    %s41 = sphi 0, %s40
    %s57 = sphi 0, %s41
    %s61 = sphi 0, %s61
    %s63 = sphi 0, %s61
    %s64 = sphi 0, %s63
    %s78 = sphi 0, %s64
    %s82 = sphi 0, %s82
    %s84 = sphi 0, %s82
    %s85 = sphi 0, %s84
    %s99 = sphi 0, %s85
    %s103 = sphi 0, %s103
    %s105 = sphi 0, %s103
    %s106 = sphi 0, %s105
    %s120 = sphi 0, %s106
    %s124 = sphi 0, %s124
    %s126 = sphi 0, %s124
    %s127 = sphi 0, %s126
    %s141 = sphi 0, %s127
    %s145 = sphi 0, %s145
    %s147 = sphi 0, %s145
    %s148 = sphi 0, %s147
    %s162 = sphi 0, %s148
    %s166 = sphi 0, %s166
    %s168 = sphi 0, %s166
    %s169 = sphi 0, %s168
    %s183 = sphi 0, %s169
    %s189 = sphi 0, %s191
    %s192 = sphi 0, %s189
    %s193 = sphi 0, %s192
    %s209 = sphi 0, %s193
  $region4: #{tpu_custom_call.1} parent=0 // loop_header_branch
    %16 = sbr.rel (%p14) target = $region8
  $region5: #{tpu_custom_call.1} parent=0 // loop_body
    %s18 = ssub.s32 %s13, 1
    %s19 = ssub.s32 %s13, 2
    %s26 = sadd.s32 1, %s21
    %p27 = scmp.ge.s32.totalorder %s26, 1
    %s28 = scalar_select %p27, 0, %s26
    %s29 = sadd.s32 1, %s20
    %s30 = scalar_select %p27, %s29, %s20
    %p31 = scmp.ge.s32.totalorder %s30, 2
    %s32 = scalar_select %p31, 0, %s30
    %s33 = ssub.s32 %s20, %s32
    %s34 = ssub.s32 %s21, %s28
    %s35 = sor.u32 %s33, %s34
    %p36 = scmp.eq.s32.totalorder %s35, 0
    %s38 = sadd.s32 %s37, 1
    %s39 = scalar_select %p36, %s37, %s38
    %p42 = pneg %p36
    %p43 = scmp.eq.s32.totalorder %s13, 1
    %p44 = por %p42, %p43
    %p45 = scmp.ne.s32.totalorder %s37, %s40
    %p46 = scmp.eq.s32.totalorder %s13, 0
    %p47 = por %p45, %p46
    %p48 = scmp.ne.s32.totalorder %s37, %s40
    %p49 = scmp.eq.s32.totalorder %s18, 1
    %p50 = por %p48, %p49
    %p51 = scmp.ne.s32.totalorder %s40, %s41
    %p52 = scmp.eq.s32.totalorder %s18, 0
    %p53 = por %p51, %p52
    %p54 = scmp.ne.s32.totalorder %s40, %s41
    %p55 = scmp.eq.s32.totalorder %s19, 1
    %p56 = por %p54, %p55
    %p58 = scmp.ne.s32.totalorder %s41, %s57
    %p59 = scmp.eq.s32.totalorder %s19, 0
    %p60 = por %p58, %p59
    %s62 = sadd.s32 %s61, 1
    %p65 = scmp.eq.s32.totalorder %s13, 1
    %p66 = scmp.ne.s32.totalorder %s61, %s63
    %p67 = scmp.eq.s32.totalorder %s13, 0
    %p68 = por %p66, %p67
    %p69 = scmp.ne.s32.totalorder %s61, %s63
    %p70 = scmp.eq.s32.totalorder %s18, 1
    %p71 = por %p69, %p70
    %p72 = scmp.ne.s32.totalorder %s63, %s64
    %p73 = scmp.eq.s32.totalorder %s18, 0
    %p74 = por %p72, %p73
    %p75 = scmp.ne.s32.totalorder %s63, %s64
    %p76 = scmp.eq.s32.totalorder %s19, 1
    %p77 = por %p75, %p76
    %p79 = scmp.ne.s32.totalorder %s64, %s78
    %p80 = scmp.eq.s32.totalorder %s19, 0
    %p81 = por %p79, %p80
    %s83 = sadd.s32 %s82, 1
    %p86 = scmp.eq.s32.totalorder %s13, 1
    %p87 = scmp.ne.s32.totalorder %s82, %s84
    %p88 = scmp.eq.s32.totalorder %s13, 0
    %p89 = por %p87, %p88
    %p90 = scmp.ne.s32.totalorder %s82, %s84
    %p91 = scmp.eq.s32.totalorder %s18, 1
    %p92 = por %p90, %p91
    %p93 = scmp.ne.s32.totalorder %s84, %s85
    %p94 = scmp.eq.s32.totalorder %s18, 0
    %p95 = por %p93, %p94
    %p96 = scmp.ne.s32.totalorder %s84, %s85
    %p97 = scmp.eq.s32.totalorder %s19, 1
    %p98 = por %p96, %p97
    %p100 = scmp.ne.s32.totalorder %s85, %s99
    %p101 = scmp.eq.s32.totalorder %s19, 0
    %p102 = por %p100, %p101
    %s104 = sadd.s32 %s103, 1
    %p107 = scmp.eq.s32.totalorder %s13, 1
    %p108 = scmp.ne.s32.totalorder %s103, %s105
    %p109 = scmp.eq.s32.totalorder %s13, 0
    %p110 = por %p108, %p109
    %p111 = scmp.ne.s32.totalorder %s103, %s105
    %p112 = scmp.eq.s32.totalorder %s18, 1
    %p113 = por %p111, %p112
    %p114 = scmp.ne.s32.totalorder %s105, %s106
    %p115 = scmp.eq.s32.totalorder %s18, 0
    %p116 = por %p114, %p115
    %p117 = scmp.ne.s32.totalorder %s105, %s106
    %p118 = scmp.eq.s32.totalorder %s19, 1
    %p119 = por %p117, %p118
    %p121 = scmp.ne.s32.totalorder %s106, %s120
    %p122 = scmp.eq.s32.totalorder %s19, 0
    %p123 = por %p121, %p122
    %s125 = sadd.s32 %s124, 1
    %p128 = scmp.eq.s32.totalorder %s13, 1
    %p129 = scmp.ne.s32.totalorder %s124, %s126
    %p130 = scmp.eq.s32.totalorder %s13, 0
    %p131 = por %p129, %p130
    %p132 = scmp.ne.s32.totalorder %s124, %s126
    %p133 = scmp.eq.s32.totalorder %s18, 1
    %p134 = por %p132, %p133
    %p135 = scmp.ne.s32.totalorder %s126, %s127
    %p136 = scmp.eq.s32.totalorder %s18, 0
    %p137 = por %p135, %p136
    %p138 = scmp.ne.s32.totalorder %s126, %s127
    %p139 = scmp.eq.s32.totalorder %s19, 1
    %p140 = por %p138, %p139
    %p142 = scmp.ne.s32.totalorder %s127, %s141
    %p143 = scmp.eq.s32.totalorder %s19, 0
    %p144 = por %p142, %p143
    %s146 = sadd.s32 %s145, 1
    %p149 = scmp.eq.s32.totalorder %s13, 1
    %p150 = scmp.ne.s32.totalorder %s145, %s147
    %p151 = scmp.eq.s32.totalorder %s13, 0
    %p152 = por %p150, %p151
    %p153 = scmp.ne.s32.totalorder %s145, %s147
    %p154 = scmp.eq.s32.totalorder %s18, 1
    %p155 = por %p153, %p154
    %p156 = scmp.ne.s32.totalorder %s147, %s148
    %p157 = scmp.eq.s32.totalorder %s18, 0
    %p158 = por %p156, %p157
    %p159 = scmp.ne.s32.totalorder %s147, %s148
    %p160 = scmp.eq.s32.totalorder %s19, 1
    %p161 = por %p159, %p160
    %p163 = scmp.ne.s32.totalorder %s148, %s162
    %p164 = scmp.eq.s32.totalorder %s19, 0
    %p165 = por %p163, %p164
    %s167 = sadd.s32 %s166, 1
    %p170 = scmp.eq.s32.totalorder %s13, 1
    %p171 = scmp.ne.s32.totalorder %s166, %s168
    %p172 = scmp.eq.s32.totalorder %s13, 0
    %p173 = por %p171, %p172
    %p174 = scmp.ne.s32.totalorder %s166, %s168
    %p175 = scmp.eq.s32.totalorder %s18, 1
    %p176 = por %p174, %p175
    %p177 = scmp.ne.s32.totalorder %s168, %s169
    %p178 = scmp.eq.s32.totalorder %s18, 0
    %p179 = por %p177, %p178
    %p180 = scmp.ne.s32.totalorder %s168, %s169
    %p181 = scmp.eq.s32.totalorder %s19, 1
    %p182 = por %p180, %p181
    %p184 = scmp.ne.s32.totalorder %s169, %s183
    %p185 = scmp.eq.s32.totalorder %s19, 0
    %p186 = por %p184, %p185
    %s187 = ssub.s32 %s20, %s32
    %p188 = scmp.eq.s32.totalorder %s187, 0
    %s190 = sadd.s32 %s189, 1
    %s191 = scalar_select %p188, %s189, %s190
    %p194 = pneg %p188
    %p195 = scmp.eq.s32.totalorder %s13, 1
    %p196 = por %p194, %p195
    %p197 = scmp.ne.s32.totalorder %s189, %s192
    %p198 = scmp.eq.s32.totalorder %s13, 0
    %p199 = por %p197, %p198
    %p200 = scmp.ne.s32.totalorder %s189, %s192
    %p201 = scmp.eq.s32.totalorder %s18, 1
    %p202 = por %p200, %p201
    %p203 = scmp.ne.s32.totalorder %s192, %s193
    %p204 = scmp.eq.s32.totalorder %s18, 0
    %p205 = por %p203, %p204
    %p206 = scmp.ne.s32.totalorder %s192, %s193
    %p207 = scmp.eq.s32.totalorder %s19, 1
    %p208 = por %p206, %p207
    %p210 = scmp.ne.s32.totalorder %s193, %s209
    %p211 = scmp.eq.s32.totalorder %s19, 0
    %p212 = por %p210, %p211
    %p213 = scmp.le.s32.totalorder 1, %s13
    %p214 = scmp.lt.s32.totalorder %s13, 3
    %p215 = pnand %p213, %p214
    %p216 = pneg %p215
    // Predicated region
    $region9: #{tpu_custom_call.1} parent=5 // pred_check
      _
    $region10: #{tpu_custom_call.1} parent=5 // pred_check_branch
      %218 = sbr.rel (%p215) target = $region12
    $region11: #{tpu_custom_call.1} parent=5 // pred_region
      %s219 = ssub.s32 %s13, 1
      // Predicated region
      $region13: #{tpu_custom_call.1} parent=11 // pred_check
        %p220 = pneg %p74
      $region14: #{tpu_custom_call.1} parent=11 // pred_check_branch
        %222 = sbr.rel (%p220) target = $region16
      $region15: #{tpu_custom_call.1} parent=11 // pred_region
        _
      $region16: #{tpu_custom_call.1} parent=11 // pred_fallthru
        _
      // Predicated region
      $region17: #{tpu_custom_call.1} parent=11 // pred_check
        %p223 = pneg %p95
      $region18: #{tpu_custom_call.1} parent=11 // pred_check_branch
        %225 = sbr.rel (%p223) target = $region20
      $region19: #{tpu_custom_call.1} parent=11 // pred_region
        _
      $region20: #{tpu_custom_call.1} parent=11 // pred_fallthru
        _
      // Predicated region
      $region21: #{tpu_custom_call.1} parent=11 // pred_check
        %p226 = pneg %p116
      $region22: #{tpu_custom_call.1} parent=11 // pred_check_branch
        %228 = sbr.rel (%p226) target = $region24
      $region23: #{tpu_custom_call.1} parent=11 // pred_region
        _
      $region24: #{tpu_custom_call.1} parent=11 // pred_fallthru
        _
      // Predicated region
      $region25: #{tpu_custom_call.1} parent=11 // pred_check
        %p229 = pneg %p137
      $region26: #{tpu_custom_call.1} parent=11 // pred_check_branch
        %231 = sbr.rel (%p229) target = $region28
      $region27: #{tpu_custom_call.1} parent=11 // pred_region
        _
      $region28: #{tpu_custom_call.1} parent=11 // pred_fallthru
        _
      // Predicated region
      $region29: #{tpu_custom_call.1} parent=11 // pred_check
        %p232 = pneg %p158
      $region30: #{tpu_custom_call.1} parent=11 // pred_check_branch
        %234 = sbr.rel (%p232) target = $region32
      $region31: #{tpu_custom_call.1} parent=11 // pred_region
        _
      $region32: #{tpu_custom_call.1} parent=11 // pred_fallthru
        _
      // Predicated region
      $region33: #{tpu_custom_call.1} parent=11 // pred_check
        %p235 = pneg %p179
      $region34: #{tpu_custom_call.1} parent=11 // pred_check_branch
        %237 = sbr.rel (%p235) target = $region36
      $region35: #{tpu_custom_call.1} parent=11 // pred_region
        _
      $region36: #{tpu_custom_call.1} parent=11 // pred_fallthru
        _
    $region12: #{tpu_custom_call.1} parent=5 // pred_fallthru
      _
    %p238 = scmp.lt.s32.totalorder %s13, 2
    // Predicated region
    $region37: #{tpu_custom_call.1} parent=5 // pred_check
      %p239 = pneg %p238
    $region38: #{tpu_custom_call.1} parent=5 // pred_check_branch
      %241 = sbr.rel (%p239) target = $region40
    $region39: #{tpu_custom_call.1} parent=5 // pred_region
      // Predicated region
      $region41: #{tpu_custom_call.1} parent=39 // pred_check
        %p242 = pneg %p47
      $region42: #{tpu_custom_call.1} parent=39 // pred_check_branch
        %244 = sbr.rel (%p242) target = $region44
      $region43: #{tpu_custom_call.1} parent=39 // pred_region
        %p245 = scmp.lt.s32.totalorder %s20, 1
        %s246 = scalar_select %p245, %s20, 1
        %p247 = scmp.lt.s32.totalorder %s21, 0
        %s248 = scalar_select %p247, %s21, 0
        %s249 = smul.addr %s246, 8
        %s250 = sadd.s32 %s248, %s249
        %s251 = smul.addr %s250, 8
        %s252 = scalar_lea.vmem %s0, %s251
      $region44: #{tpu_custom_call.1} parent=39 // pred_fallthru
        _
    $region40: #{tpu_custom_call.1} parent=5 // pred_fallthru
      _
    %p253 = scmp.le.s32.totalorder 1, %s13
    %p254 = scmp.lt.s32.totalorder %s13, 3
    %p255 = pnand %p253, %p254
    %p256 = pneg %p255
    // Predicated region
    $region45: #{tpu_custom_call.1} parent=5 // pred_check
      _
    $region46: #{tpu_custom_call.1} parent=5 // pred_check_branch
      %258 = sbr.rel (%p255) target = $region48
    $region47: #{tpu_custom_call.1} parent=5 // pred_region
      %s259 = ssub.s32 %s13, 1
      %p260 = scmp.lt.s32.totalorder %s22, 1
      %s261 = scalar_select %p260, %s22, 1
      %p262 = scmp.lt.s32.totalorder %s23, 0
      %s263 = scalar_select %p262, %s23, 0
      %s264 = smul.addr %s261, 8
      %s265 = sadd.s32 %s263, %s264
      %s266 = smul.addr %s265, 8
      %s267 = scalar_lea.vmem %s0, %s266
      %p268 = pneg %p53
      %p269 = pneg %p50
      %p270 = pneg %p74
      %p271 = pneg %p71
      %p272 = pneg %p95
      %p273 = pneg %p92
      %p274 = pneg %p116
      %p275 = pneg %p113
      %p276 = pneg %p137
      %p277 = pneg %p134
      %p278 = pneg %p158
      %p279 = pneg %p155
      %p280 = pneg %p179
      %p281 = pneg %p176
      %p282 = pneg %p205
      %p283 = pneg %p202
      %p284 = scmp.lt.s32.totalorder %s22, 1
      %s285 = scalar_select %p284, %s22, 1
      %s286 = smul.addr %s285, 128
      %s287 = smul.addr %s286, 8
      %s288 = scalar_lea.vmem %s7, %s287
      %p289 = scmp.lt.s32.totalorder %s22, 1
      %s290 = scalar_select %p289, %s22, 1
      %p291 = scmp.lt.s32.totalorder %s23, 0
      %s292 = scalar_select %p291, %s23, 0
      %s293 = smul.addr %s290, 8
      %s294 = sadd.s32 %s292, %s293
      %s295 = smul.addr %s294, 8
      %s296 = scalar_lea.vmem %s0, %s295
      %p297 = scmp.lt.s32.totalorder %s22, 1
      %s298 = scalar_select %p297, %s22, 1
      %s299 = smul.addr %s298, 128
      %s300 = smul.addr %s299, 8
      %s301 = scalar_lea.vmem %s7, %s300
      %p303 = scmp.eq.s32.totalorder %s23, 0
      // Predicated region
      $region49: #{tpu_custom_call.1} parent=47 // pred_check
        %p304 = pneg %p303
      $region50: #{tpu_custom_call.1} parent=47 // pred_check_branch
        %306 = sbr.rel (%p304) target = $region52
      $region51: #{tpu_custom_call.1} parent=47 // pred_region
        %307 = vst [vmem:[#allocation2] sm:$0xff] -inf
        %308 = vst [vmem:[#allocation2 + $0x8] sm:$0xff] -inf
        %309 = vst [vmem:[#allocation2 + $0x10] sm:$0xff] -inf
        %310 = vst [vmem:[#allocation2 + $0x18] sm:$0xff] -inf
        %311 = vst [vmem:[#allocation2 + $0x20] sm:$0xff] -inf
        %312 = vst [vmem:[#allocation2 + $0x28] sm:$0xff] -inf
        %313 = vst [vmem:[#allocation2 + $0x30] sm:$0xff] -inf
        %314 = vst [vmem:[#allocation2 + $0x38] sm:$0xff] -inf
        %315 = vst [vmem:[#allocation2 + $0x40] sm:$0xff] -inf
        %316 = vst [vmem:[#allocation2 + $0x48] sm:$0xff] -inf
        %317 = vst [vmem:[#allocation2 + $0x50] sm:$0xff] -inf
        %318 = vst [vmem:[#allocation2 + $0x58] sm:$0xff] -inf
        %319 = vst [vmem:[#allocation2 + $0x60] sm:$0xff] -inf
        %320 = vst [vmem:[#allocation2 + $0x68] sm:$0xff] -inf
        %321 = vst [vmem:[#allocation2 + $0x70] sm:$0xff] -inf
        %322 = vst [vmem:[#allocation2 + $0x78] sm:$0xff] -inf
        %323 = vst [vmem:[#allocation2 + $0x80] sm:$0xff] -inf
        %324 = vst [vmem:[#allocation2 + $0x88] sm:$0xff] -inf
        %325 = vst [vmem:[#allocation2 + $0x90] sm:$0xff] -inf
        %326 = vst [vmem:[#allocation2 + $0x98] sm:$0xff] -inf
        %327 = vst [vmem:[#allocation2 + $0xa0] sm:$0xff] -inf
        %328 = vst [vmem:[#allocation2 + $0xa8] sm:$0xff] -inf
        %329 = vst [vmem:[#allocation2 + $0xb0] sm:$0xff] -inf
        %330 = vst [vmem:[#allocation2 + $0xb8] sm:$0xff] -inf
        %331 = vst [vmem:[#allocation2 + $0xc0] sm:$0xff] -inf
        %332 = vst [vmem:[#allocation2 + $0xc8] sm:$0xff] -inf
        %333 = vst [vmem:[#allocation2 + $0xd0] sm:$0xff] -inf
        %334 = vst [vmem:[#allocation2 + $0xd8] sm:$0xff] -inf
        %335 = vst [vmem:[#allocation2 + $0xe0] sm:$0xff] -inf
        %336 = vst [vmem:[#allocation2 + $0xe8] sm:$0xff] -inf
        %337 = vst [vmem:[#allocation2 + $0xf0] sm:$0xff] -inf
        %338 = vst [vmem:[#allocation2 + $0xf8] sm:$0xff] -inf
        %339 = vst [vmem:[#allocation2 + $0x100] sm:$0xff] -inf
        %340 = vst [vmem:[#allocation2 + $0x108] sm:$0xff] -inf
        %341 = vst [vmem:[#allocation2 + $0x110] sm:$0xff] -inf
        %342 = vst [vmem:[#allocation2 + $0x118] sm:$0xff] -inf
        %343 = vst [vmem:[#allocation2 + $0x120] sm:$0xff] -inf
        %344 = vst [vmem:[#allocation2 + $0x128] sm:$0xff] -inf
        %345 = vst [vmem:[#allocation2 + $0x130] sm:$0xff] -inf
        %346 = vst [vmem:[#allocation2 + $0x138] sm:$0xff] -inf
        %347 = vst [vmem:[#allocation2 + $0x140] sm:$0xff] -inf
        %348 = vst [vmem:[#allocation2 + $0x148] sm:$0xff] -inf
        %349 = vst [vmem:[#allocation2 + $0x150] sm:$0xff] -inf
        %350 = vst [vmem:[#allocation2 + $0x158] sm:$0xff] -inf
        %351 = vst [vmem:[#allocation2 + $0x160] sm:$0xff] -inf
        %352 = vst [vmem:[#allocation2 + $0x168] sm:$0xff] -inf
        %353 = vst [vmem:[#allocation2 + $0x170] sm:$0xff] -inf
        %354 = vst [vmem:[#allocation2 + $0x178] sm:$0xff] -inf
        %355 = vst [vmem:[#allocation2 + $0x180] sm:$0xff] -inf
        %356 = vst [vmem:[#allocation2 + $0x188] sm:$0xff] -inf
        %357 = vst [vmem:[#allocation2 + $0x190] sm:$0xff] -inf
        %358 = vst [vmem:[#allocation2 + $0x198] sm:$0xff] -inf
        %359 = vst [vmem:[#allocation2 + $0x1a0] sm:$0xff] -inf
        %360 = vst [vmem:[#allocation2 + $0x1a8] sm:$0xff] -inf
        %361 = vst [vmem:[#allocation2 + $0x1b0] sm:$0xff] -inf
        %362 = vst [vmem:[#allocation2 + $0x1b8] sm:$0xff] -inf
        %363 = vst [vmem:[#allocation2 + $0x1c0] sm:$0xff] -inf
        %364 = vst [vmem:[#allocation2 + $0x1c8] sm:$0xff] -inf
        %365 = vst [vmem:[#allocation2 + $0x1d0] sm:$0xff] -inf
        %366 = vst [vmem:[#allocation2 + $0x1d8] sm:$0xff] -inf
        %367 = vst [vmem:[#allocation2 + $0x1e0] sm:$0xff] -inf
        %368 = vst [vmem:[#allocation2 + $0x1e8] sm:$0xff] -inf
        %369 = vst [vmem:[#allocation2 + $0x1f0] sm:$0xff] -inf
        %370 = vst [vmem:[#allocation2 + $0x1f8] sm:$0xff] -inf
        %371 = vst [vmem:[#allocation2 + $0x200] sm:$0xff] -inf
        %372 = vst [vmem:[#allocation2 + $0x208] sm:$0xff] -inf
        %373 = vst [vmem:[#allocation2 + $0x210] sm:$0xff] -inf
        %374 = vst [vmem:[#allocation2 + $0x218] sm:$0xff] -inf
        %375 = vst [vmem:[#allocation2 + $0x220] sm:$0xff] -inf
        %376 = vst [vmem:[#allocation2 + $0x228] sm:$0xff] -inf
        %377 = vst [vmem:[#allocation2 + $0x230] sm:$0xff] -inf
        %378 = vst [vmem:[#allocation2 + $0x238] sm:$0xff] -inf
        %379 = vst [vmem:[#allocation2 + $0x240] sm:$0xff] -inf
        %380 = vst [vmem:[#allocation2 + $0x248] sm:$0xff] -inf
        %381 = vst [vmem:[#allocation2 + $0x250] sm:$0xff] -inf
        %382 = vst [vmem:[#allocation2 + $0x258] sm:$0xff] -inf
        %383 = vst [vmem:[#allocation2 + $0x260] sm:$0xff] -inf
        %384 = vst [vmem:[#allocation2 + $0x268] sm:$0xff] -inf
        %385 = vst [vmem:[#allocation2 + $0x270] sm:$0xff] -inf
        %386 = vst [vmem:[#allocation2 + $0x278] sm:$0xff] -inf
        %387 = vst [vmem:[#allocation2 + $0x280] sm:$0xff] -inf
        %388 = vst [vmem:[#allocation2 + $0x288] sm:$0xff] -inf
        %389 = vst [vmem:[#allocation2 + $0x290] sm:$0xff] -inf
        %390 = vst [vmem:[#allocation2 + $0x298] sm:$0xff] -inf
        %391 = vst [vmem:[#allocation2 + $0x2a0] sm:$0xff] -inf
        %392 = vst [vmem:[#allocation2 + $0x2a8] sm:$0xff] -inf
        %393 = vst [vmem:[#allocation2 + $0x2b0] sm:$0xff] -inf
        %394 = vst [vmem:[#allocation2 + $0x2b8] sm:$0xff] -inf
        %395 = vst [vmem:[#allocation2 + $0x2c0] sm:$0xff] -inf
        %396 = vst [vmem:[#allocation2 + $0x2c8] sm:$0xff] -inf
        %397 = vst [vmem:[#allocation2 + $0x2d0] sm:$0xff] -inf
        %398 = vst [vmem:[#allocation2 + $0x2d8] sm:$0xff] -inf
        %399 = vst [vmem:[#allocation2 + $0x2e0] sm:$0xff] -inf
        %400 = vst [vmem:[#allocation2 + $0x2e8] sm:$0xff] -inf
        %401 = vst [vmem:[#allocation2 + $0x2f0] sm:$0xff] -inf
        %402 = vst [vmem:[#allocation2 + $0x2f8] sm:$0xff] -inf
        %403 = vst [vmem:[#allocation2 + $0x300] sm:$0xff] -inf
        %404 = vst [vmem:[#allocation2 + $0x308] sm:$0xff] -inf
        %405 = vst [vmem:[#allocation2 + $0x310] sm:$0xff] -inf
        %406 = vst [vmem:[#allocation2 + $0x318] sm:$0xff] -inf
        %407 = vst [vmem:[#allocation2 + $0x320] sm:$0xff] -inf
        %408 = vst [vmem:[#allocation2 + $0x328] sm:$0xff] -inf
        %409 = vst [vmem:[#allocation2 + $0x330] sm:$0xff] -inf
        %410 = vst [vmem:[#allocation2 + $0x338] sm:$0xff] -inf
        %411 = vst [vmem:[#allocation2 + $0x340] sm:$0xff] -inf
        %412 = vst [vmem:[#allocation2 + $0x348] sm:$0xff] -inf
        %413 = vst [vmem:[#allocation2 + $0x350] sm:$0xff] -inf
        %414 = vst [vmem:[#allocation2 + $0x358] sm:$0xff] -inf
        %415 = vst [vmem:[#allocation2 + $0x360] sm:$0xff] -inf
        %416 = vst [vmem:[#allocation2 + $0x368] sm:$0xff] -inf
        %417 = vst [vmem:[#allocation2 + $0x370] sm:$0xff] -inf
        %418 = vst [vmem:[#allocation2 + $0x378] sm:$0xff] -inf
        %419 = vst [vmem:[#allocation2 + $0x380] sm:$0xff] -inf
        %420 = vst [vmem:[#allocation2 + $0x388] sm:$0xff] -inf
        %421 = vst [vmem:[#allocation2 + $0x390] sm:$0xff] -inf
        %422 = vst [vmem:[#allocation2 + $0x398] sm:$0xff] -inf
        %423 = vst [vmem:[#allocation2 + $0x3a0] sm:$0xff] -inf
        %424 = vst [vmem:[#allocation2 + $0x3a8] sm:$0xff] -inf
        %425 = vst [vmem:[#allocation2 + $0x3b0] sm:$0xff] -inf
        %426 = vst [vmem:[#allocation2 + $0x3b8] sm:$0xff] -inf
        %427 = vst [vmem:[#allocation2 + $0x3c0] sm:$0xff] -inf
        %428 = vst [vmem:[#allocation2 + $0x3c8] sm:$0xff] -inf
        %429 = vst [vmem:[#allocation2 + $0x3d0] sm:$0xff] -inf
        %430 = vst [vmem:[#allocation2 + $0x3d8] sm:$0xff] -inf
        %431 = vst [vmem:[#allocation2 + $0x3e0] sm:$0xff] -inf
        %432 = vst [vmem:[#allocation2 + $0x3e8] sm:$0xff] -inf
        %433 = vst [vmem:[#allocation2 + $0x3f0] sm:$0xff] -inf
        %434 = vst [vmem:[#allocation2 + $0x3f8] sm:$0xff] -inf
      $region52: #{tpu_custom_call.1} parent=47 // pred_fallthru
        _
      %v435 = vld [vmem:[%s296] sm:$0xff]
      %v436 = vld [vmem:[%s296 + $0x8] sm:$0xff]
      %v437 = vld [vmem:[%s296 + $0x10] sm:$0xff]
      %v438 = vld [vmem:[%s296 + $0x18] sm:$0xff]
      %v439 = vld [vmem:[%s296 + $0x20] sm:$0xff]
      %v440 = vld [vmem:[%s296 + $0x28] sm:$0xff]
      %v441 = vld [vmem:[%s296 + $0x30] sm:$0xff]
      %v442 = vld [vmem:[%s296 + $0x38] sm:$0xff]
      %v443 = vpack.c.bf16 %v436, %v435
      %v444 = vpack.c.bf16 %v438, %v437
      %v445 = vpack.c.bf16 %v440, %v439
      %v446 = vpack.c.bf16 %v442, %v441
      %v447 = vld [vmem:[%s1] sm:$0xf]
      %v448 = vld [vmem:[%s1 + $0x4] sm:$0xf]
      %v449 = vld [vmem:[%s1 + $0x8] sm:$0xf]
      %v450 = vld [vmem:[%s1 + $0xc] sm:$0xf]
      %v451 = vld [vmem:[%s1 + $0x10] sm:$0xf]
      %v452 = vld [vmem:[%s1 + $0x14] sm:$0xf]
      %v453 = vld [vmem:[%s1 + $0x18] sm:$0xf]
      %v454 = vld [vmem:[%s1 + $0x1c] sm:$0xf]
      %v455 = vld [vmem:[%s1 + $0x20] sm:$0xf]
      %v456 = vld [vmem:[%s1 + $0x24] sm:$0xf]
      %v457 = vld [vmem:[%s1 + $0x28] sm:$0xf]
      %v458 = vld [vmem:[%s1 + $0x2c] sm:$0xf]
      %v459 = vld [vmem:[%s1 + $0x30] sm:$0xf]
      %v460 = vld [vmem:[%s1 + $0x34] sm:$0xf]
      %v461 = vld [vmem:[%s1 + $0x38] sm:$0xf]
      %v462 = vld [vmem:[%s1 + $0x3c] sm:$0xf]
      %v463 = vld [vmem:[%s2] sm:$0xff]
      %v464 = vld [vmem:[%s2 + $0x8] sm:$0xff]
      %v465 = vld [vmem:[%s2 + $0x10] sm:$0xff]
      %v466 = vld [vmem:[%s2 + $0x18] sm:$0xff]
      %v467 = vld [vmem:[%s2 + $0x20] sm:$0xff]
      %v468 = vld [vmem:[%s2 + $0x28] sm:$0xff]
      %v469 = vld [vmem:[%s2 + $0x30] sm:$0xff]
      %v470 = vld [vmem:[%s2 + $0x38] sm:$0xff]
      %v471 = vld [vmem:[%s2 + $0x40] sm:$0xff]
      %v472 = vld [vmem:[%s2 + $0x48] sm:$0xff]
      %v473 = vld [vmem:[%s2 + $0x50] sm:$0xff]
      %v474 = vld [vmem:[%s2 + $0x58] sm:$0xff]
      %v475 = vld [vmem:[%s2 + $0x60] sm:$0xff]
      %v476 = vld [vmem:[%s2 + $0x68] sm:$0xff]
      %v477 = vld [vmem:[%s2 + $0x70] sm:$0xff]
      %v478 = vld [vmem:[%s2 + $0x78] sm:$0xff]
      %480 = vset.pattern.permute.xlu0 0
      %481 = vperm.xlu0 %480, %v463
      %v482 = vpop.permute.xlu0 %481
      %485 = vset.pattern.permute.xlu0 0
      %486 = vperm.xlu0 %485, %v464
      %v487 = vpop.permute.xlu0 %486
      %490 = vset.pattern.permute.xlu0 0
      %491 = vperm.xlu0 %490, %v465
      %v492 = vpop.permute.xlu0 %491
      %495 = vset.pattern.permute.xlu0 0
      %496 = vperm.xlu0 %495, %v466
      %v497 = vpop.permute.xlu0 %496
      %500 = vset.pattern.permute.xlu0 0
      %501 = vperm.xlu0 %500, %v467
      %v502 = vpop.permute.xlu0 %501
      %505 = vset.pattern.permute.xlu0 0
      %506 = vperm.xlu0 %505, %v468
      %v507 = vpop.permute.xlu0 %506
      %510 = vset.pattern.permute.xlu0 0
      %511 = vperm.xlu0 %510, %v469
      %v512 = vpop.permute.xlu0 %511
      %515 = vset.pattern.permute.xlu0 0
      %516 = vperm.xlu0 %515, %v470
      %v517 = vpop.permute.xlu0 %516
      %520 = vset.pattern.permute.xlu0 0
      %521 = vperm.xlu0 %520, %v471
      %v522 = vpop.permute.xlu0 %521
      %525 = vset.pattern.permute.xlu0 0
      %526 = vperm.xlu0 %525, %v472
      %v527 = vpop.permute.xlu0 %526
      %530 = vset.pattern.permute.xlu0 0
      %531 = vperm.xlu0 %530, %v473
      %v532 = vpop.permute.xlu0 %531
      %535 = vset.pattern.permute.xlu0 0
      %536 = vperm.xlu0 %535, %v474
      %v537 = vpop.permute.xlu0 %536
      %540 = vset.pattern.permute.xlu0 0
      %541 = vperm.xlu0 %540, %v475
      %v542 = vpop.permute.xlu0 %541
      %545 = vset.pattern.permute.xlu0 0
      %546 = vperm.xlu0 %545, %v476
      %v547 = vpop.permute.xlu0 %546
      %550 = vset.pattern.permute.xlu0 0
      %551 = vperm.xlu0 %550, %v477
      %v552 = vpop.permute.xlu0 %551
      %555 = vset.pattern.permute.xlu0 0
      %556 = vperm.xlu0 %555, %v478
      %v557 = vpop.permute.xlu0 %556
      %v575 = vunpack.c.l.b16 %v447
      %v576 = vunpack.c.l.b16 %v448
      %v577 = vunpack.c.l.b16 %v449
      %v578 = vunpack.c.l.b16 %v450
      %v579 = vunpack.c.l.b16 %v451
      %v580 = vunpack.c.l.b16 %v452
      %v581 = vunpack.c.l.b16 %v453
      %v582 = vunpack.c.l.b16 %v454
      %v583 = vunpack.c.l.b16 %v455
      %v584 = vunpack.c.l.b16 %v456
      %v585 = vunpack.c.l.b16 %v457
      %v586 = vunpack.c.l.b16 %v458
      %v587 = vunpack.c.l.b16 %v459
      %v588 = vunpack.c.l.b16 %v460
      %v589 = vunpack.c.l.b16 %v461
      %v590 = vunpack.c.l.b16 %v462
      %v591 = vpack.c.b16 %v576, %v575
      %v592 = vpack.c.b16 %v578, %v577
      %v593 = vpack.c.b16 %v580, %v579
      %v594 = vpack.c.b16 %v582, %v581
      %v595 = vpack.c.b16 %v584, %v583
      %v596 = vpack.c.b16 %v586, %v585
      %v597 = vpack.c.b16 %v588, %v587
      %v598 = vpack.c.b16 %v590, %v589
      %vm599 = vcmask 523264
      %v601 = vsel %vm599, %v591, 0
      %v604 = vsel %vm599, %v592, 0
      %v607 = vsel %vm599, %v593, 0
      %v610 = vsel %vm599, %v594, 0
      %v613 = vsel %vm599, %v595, 0
      %v616 = vsel %vm599, %v596, 0
      %v619 = vsel %vm599, %v597, 0
      %v622 = vsel %vm599, %v598, 0
      %624 = vmatprep.subr.bf16.mxu0 0
      %625 = vmatpush1.bf16.msra.mxu0 %v443
      %626 = vmatprep.subr.bf16.mxu0 0
      %627 = vmatpush1.bf16.msra.mxu0 %v444
      %628 = vmatprep.subr.bf16.mxu0 0
      %629 = vmatpush1.bf16.msra.mxu0 %v445
      %630 = vmatprep.subr.bf16.mxu0 0
      %631 = vmatpush1.bf16.msra.mxu0 %v446
      %632 = vmatprep.subr.bf16.mxu0 0
      %633 = vmatpush1.bf16.msra.mxu0 0
      %634 = vmatprep.subr.bf16.mxu0 0
      %635 = vmatpush1.bf16.msra.mxu0 0
      %636 = vmatprep.subr.bf16.mxu0 0
      %637 = vmatpush1.bf16.msra.mxu0 0
      %638 = vmatprep.subr.bf16.mxu0 0
      %639 = vmatpush1.bf16.msra.mxu0 0
      %640 = vmatprep.subr.bf16.mxu0 0
      %641 = vmatpush1.bf16.msra.mxu0 0
      %642 = vmatprep.subr.bf16.mxu0 0
      %643 = vmatpush1.bf16.msra.mxu0 0
      %644 = vmatprep.subr.bf16.mxu0 0
      %645 = vmatpush1.bf16.msra.mxu0 0
      %646 = vmatprep.subr.bf16.mxu0 0
      %647 = vmatpush1.bf16.msra.mxu0 0
      %648 = vmatprep.subr.bf16.mxu0 0
      %649 = vmatpush1.bf16.msra.mxu0 0
      %650 = vmatprep.subr.bf16.mxu0 0
      %651 = vmatpush1.bf16.msra.mxu0 0
      %652 = vmatprep.subr.bf16.mxu0 0
      %653 = vmatpush1.bf16.msra.mxu0 0
      %654 = vmatprep.subr.bf16.mxu0 0
      %655 = vmatpush1.bf16.msra.mxu0 0
      %656 = vmatprep.mubr.bf16.mxu0 0
      %657 = vmatmul.mubr.bf16.gmra.mrb[0].mxu0 %v601
      %v658 = vpop.f32.mrb[0].mxu0
      %v659 = vadd.f32 %v482, %v658
      %v660 = vpop.f32.mrb[0].mxu0
      %v661 = vpop.f32.mrb[0].mxu0
      %v662 = vadd.f32 %v487, %v661
      %v663 = vpop.f32.mrb[0].mxu0
      %664 = vmatprep.mubr.bf16.mxu0 0
      %665 = vmatmul.mubr.bf16.gmra.mrb[0].mxu0 %v604
      %v666 = vpop.f32.mrb[0].mxu0
      %v667 = vadd.f32 %v492, %v666
      %v668 = vpop.f32.mrb[0].mxu0
      %v669 = vpop.f32.mrb[0].mxu0
      %v670 = vadd.f32 %v497, %v669
      %v671 = vpop.f32.mrb[0].mxu0
      %672 = vmatprep.mubr.bf16.mxu0 0
      %673 = vmatmul.mubr.bf16.gmra.mrb[0].mxu0 %v607
      %v674 = vpop.f32.mrb[0].mxu0
      %v675 = vadd.f32 %v502, %v674
      %v676 = vpop.f32.mrb[0].mxu0
      %v677 = vpop.f32.mrb[0].mxu0
      %v678 = vadd.f32 %v507, %v677
      %v679 = vpop.f32.mrb[0].mxu0
      %680 = vmatprep.mubr.bf16.mxu0 0
      %681 = vmatmul.mubr.bf16.gmra.mrb[0].mxu0 %v610
      %v682 = vpop.f32.mrb[0].mxu0
      %v683 = vadd.f32 %v512, %v682
      %v684 = vpop.f32.mrb[0].mxu0
      %v685 = vpop.f32.mrb[0].mxu0
      %v686 = vadd.f32 %v517, %v685
      %v687 = vpop.f32.mrb[0].mxu0
      %688 = vmatprep.mubr.bf16.mxu0 0
      %689 = vmatmul.mubr.bf16.gmra.mrb[0].mxu0 %v613
      %v690 = vpop.f32.mrb[0].mxu0
      %v691 = vadd.f32 %v522, %v690
      %v692 = vpop.f32.mrb[0].mxu0
      %v693 = vpop.f32.mrb[0].mxu0
      %v694 = vadd.f32 %v527, %v693
      %v695 = vpop.f32.mrb[0].mxu0
      %696 = vmatprep.mubr.bf16.mxu0 0
      %697 = vmatmul.mubr.bf16.gmra.mrb[0].mxu0 %v616
      %v698 = vpop.f32.mrb[0].mxu0
      %v699 = vadd.f32 %v532, %v698
      %v700 = vpop.f32.mrb[0].mxu0
      %v701 = vpop.f32.mrb[0].mxu0
      %v702 = vadd.f32 %v537, %v701
      %v703 = vpop.f32.mrb[0].mxu0
      %704 = vmatprep.mubr.bf16.mxu0 0
      %705 = vmatmul.mubr.bf16.gmra.mrb[0].mxu0 %v619
      %v706 = vpop.f32.mrb[0].mxu0
      %v707 = vadd.f32 %v542, %v706
      %v708 = vpop.f32.mrb[0].mxu0
      %v709 = vpop.f32.mrb[0].mxu0
      %v710 = vadd.f32 %v547, %v709
      %v711 = vpop.f32.mrb[0].mxu0
      %712 = vmatprep.mubr.bf16.mxu0 0
      %713 = vmatmul.mubr.bf16.gmra.mrb[0].mxu0 %v622
      %v714 = vpop.f32.mrb[0].mxu0
      %v715 = vadd.f32 %v552, %v714
      %v716 = vpop.f32.mrb[0].mxu0
      %v717 = vpop.f32.mrb[0].mxu0
      %v718 = vadd.f32 %v557, %v717
      %v719 = vpop.f32.mrb[0].mxu0
      %720 = vdwg.mxu0
      %v721 = vmax.f32 %v659, 0.0
      %v722 = vmax.f32 %v662, 0.0
      %v723 = vmax.f32 %v667, 0.0
      %v724 = vmax.f32 %v670, 0.0
      %v725 = vmax.f32 %v675, 0.0
      %v726 = vmax.f32 %v678, 0.0
      %v727 = vmax.f32 %v683, 0.0
      %v728 = vmax.f32 %v686, 0.0
      %v729 = vmax.f32 %v691, 0.0
      %v730 = vmax.f32 %v694, 0.0
      %v731 = vmax.f32 %v699, 0.0
      %v732 = vmax.f32 %v702, 0.0
      %v733 = vmax.f32 %v707, 0.0
      %v734 = vmax.f32 %v710, 0.0
      %v735 = vmax.f32 %v715, 0.0
      %v736 = vmax.f32 %v718, 0.0
      %v737 = vpack.c.bf16 %v722, %v721
      %v738 = vpack.c.bf16 %v724, %v723
      %v739 = vpack.c.bf16 %v726, %v725
      %v740 = vpack.c.bf16 %v728, %v727
      %v741 = vpack.c.bf16 %v730, %v729
      %v742 = vpack.c.bf16 %v732, %v731
      %v743 = vpack.c.bf16 %v734, %v733
      %v744 = vpack.c.bf16 %v736, %v735
      %v745 = vld [vmem:[%s3] sm:$0xf]
      %v746 = vld [vmem:[%s3 + $0x4] sm:$0xf]
      %v747 = vld [vmem:[%s3 + $0x8] sm:$0xf]
      %v748 = vld [vmem:[%s3 + $0xc] sm:$0xf]
      %v749 = vld [vmem:[%s3 + $0x10] sm:$0xf]
      %v750 = vld [vmem:[%s3 + $0x14] sm:$0xf]
      %v751 = vld [vmem:[%s3 + $0x18] sm:$0xf]
      %v752 = vld [vmem:[%s3 + $0x1c] sm:$0xf]
      %v753 = vld [vmem:[%s3 + $0x20] sm:$0xf]
      %v754 = vld [vmem:[%s3 + $0x24] sm:$0xf]
      %v755 = vld [vmem:[%s3 + $0x28] sm:$0xf]
      %v756 = vld [vmem:[%s3 + $0x2c] sm:$0xf]
      %v757 = vld [vmem:[%s3 + $0x30] sm:$0xf]
      %v758 = vld [vmem:[%s3 + $0x34] sm:$0xf]
      %v759 = vld [vmem:[%s3 + $0x38] sm:$0xf]
      %v760 = vld [vmem:[%s3 + $0x3c] sm:$0xf]
      %v761 = vld [vmem:[%s3 + $0x40] sm:$0xf]
      %v762 = vld [vmem:[%s3 + $0x44] sm:$0xf]
      %v763 = vld [vmem:[%s3 + $0x48] sm:$0xf]
      %v764 = vld [vmem:[%s3 + $0x4c] sm:$0xf]
      %v765 = vld [vmem:[%s3 + $0x50] sm:$0xf]
      %v766 = vld [vmem:[%s3 + $0x54] sm:$0xf]
      %v767 = vld [vmem:[%s3 + $0x58] sm:$0xf]
      %v768 = vld [vmem:[%s3 + $0x5c] sm:$0xf]
      %v769 = vld [vmem:[%s3 + $0x60] sm:$0xf]
      %v770 = vld [vmem:[%s3 + $0x64] sm:$0xf]
      %v771 = vld [vmem:[%s3 + $0x68] sm:$0xf]
      %v772 = vld [vmem:[%s3 + $0x6c] sm:$0xf]
      %v773 = vld [vmem:[%s3 + $0x70] sm:$0xf]
      %v774 = vld [vmem:[%s3 + $0x74] sm:$0xf]
      %v775 = vld [vmem:[%s3 + $0x78] sm:$0xf]
      %v776 = vld [vmem:[%s3 + $0x7c] sm:$0xf]
      %v777 = vld [vmem:[%s4] sm:$0xff]
      %v778 = vld [vmem:[%s4 + $0x8] sm:$0xff]
      %v779 = vld [vmem:[%s4 + $0x10] sm:$0xff]
      %v780 = vld [vmem:[%s4 + $0x18] sm:$0xff]
      %v781 = vld [vmem:[%s4 + $0x20] sm:$0xff]
      %v782 = vld [vmem:[%s4 + $0x28] sm:$0xff]
      %v783 = vld [vmem:[%s4 + $0x30] sm:$0xff]
      %v784 = vld [vmem:[%s4 + $0x38] sm:$0xff]
      %v785 = vld [vmem:[%s4 + $0x40] sm:$0xff]
      %v786 = vld [vmem:[%s4 + $0x48] sm:$0xff]
      %v787 = vld [vmem:[%s4 + $0x50] sm:$0xff]
      %v788 = vld [vmem:[%s4 + $0x58] sm:$0xff]
      %v789 = vld [vmem:[%s4 + $0x60] sm:$0xff]
      %v790 = vld [vmem:[%s4 + $0x68] sm:$0xff]
      %v791 = vld [vmem:[%s4 + $0x70] sm:$0xff]
      %v792 = vld [vmem:[%s4 + $0x78] sm:$0xff]
      %v793 = vld [vmem:[%s4 + $0x80] sm:$0xff]
      %v794 = vld [vmem:[%s4 + $0x88] sm:$0xff]
      %v795 = vld [vmem:[%s4 + $0x90] sm:$0xff]
      %v796 = vld [vmem:[%s4 + $0x98] sm:$0xff]
      %v797 = vld [vmem:[%s4 + $0xa0] sm:$0xff]
      %v798 = vld [vmem:[%s4 + $0xa8] sm:$0xff]
      %v799 = vld [vmem:[%s4 + $0xb0] sm:$0xff]
      %v800 = vld [vmem:[%s4 + $0xb8] sm:$0xff]
      %v801 = vld [vmem:[%s4 + $0xc0] sm:$0xff]
      %v802 = vld [vmem:[%s4 + $0xc8] sm:$0xff]
      %v803 = vld [vmem:[%s4 + $0xd0] sm:$0xff]
      %v804 = vld [vmem:[%s4 + $0xd8] sm:$0xff]
      %v805 = vld [vmem:[%s4 + $0xe0] sm:$0xff]
      %v806 = vld [vmem:[%s4 + $0xe8] sm:$0xff]
      %v807 = vld [vmem:[%s4 + $0xf0] sm:$0xff]
      %v808 = vld [vmem:[%s4 + $0xf8] sm:$0xff]
      %810 = vset.pattern.permute.xlu0 0
      %811 = vperm.xlu0 %810, %v777
      %v812 = vpop.permute.xlu0 %811
      %815 = vset.pattern.permute.xlu0 0
      %816 = vperm.xlu0 %815, %v778
      %v817 = vpop.permute.xlu0 %816
      %820 = vset.pattern.permute.xlu0 0
      %821 = vperm.xlu0 %820, %v779
      %v822 = vpop.permute.xlu0 %821
      %825 = vset.pattern.permute.xlu0 0
      %826 = vperm.xlu0 %825, %v780
      %v827 = vpop.permute.xlu0 %826
      %830 = vset.pattern.permute.xlu0 0
      %831 = vperm.xlu0 %830, %v781
      %v832 = vpop.permute.xlu0 %831
      %835 = vset.pattern.permute.xlu0 0
      %836 = vperm.xlu0 %835, %v782
      %v837 = vpop.permute.xlu0 %836
      %840 = vset.pattern.permute.xlu0 0
      %841 = vperm.xlu0 %840, %v783
      %v842 = vpop.permute.xlu0 %841
      %845 = vset.pattern.permute.xlu0 0
      %846 = vperm.xlu0 %845, %v784
      %v847 = vpop.permute.xlu0 %846
      %850 = vset.pattern.permute.xlu0 0
      %851 = vperm.xlu0 %850, %v785
      %v852 = vpop.permute.xlu0 %851
      %855 = vset.pattern.permute.xlu0 0
      %856 = vperm.xlu0 %855, %v786
      %v857 = vpop.permute.xlu0 %856
      %860 = vset.pattern.permute.xlu0 0
      %861 = vperm.xlu0 %860, %v787
      %v862 = vpop.permute.xlu0 %861
      %865 = vset.pattern.permute.xlu0 0
      %866 = vperm.xlu0 %865, %v788
      %v867 = vpop.permute.xlu0 %866
      %870 = vset.pattern.permute.xlu0 0
      %871 = vperm.xlu0 %870, %v789
      %v872 = vpop.permute.xlu0 %871
      %875 = vset.pattern.permute.xlu0 0
      %876 = vperm.xlu0 %875, %v790
      %v877 = vpop.permute.xlu0 %876
      %880 = vset.pattern.permute.xlu0 0
      %881 = vperm.xlu0 %880, %v791
      %v882 = vpop.permute.xlu0 %881
      %885 = vset.pattern.permute.xlu0 0
      %886 = vperm.xlu0 %885, %v792
      %v887 = vpop.permute.xlu0 %886
      %890 = vset.pattern.permute.xlu0 0
      %891 = vperm.xlu0 %890, %v793
      %v892 = vpop.permute.xlu0 %891
      %895 = vset.pattern.permute.xlu0 0
      %896 = vperm.xlu0 %895, %v794
      %v897 = vpop.permute.xlu0 %896
      %900 = vset.pattern.permute.xlu0 0
      %901 = vperm.xlu0 %900, %v795
      %v902 = vpop.permute.xlu0 %901
      %905 = vset.pattern.permute.xlu0 0
      %906 = vperm.xlu0 %905, %v796
      %v907 = vpop.permute.xlu0 %906
      %910 = vset.pattern.permute.xlu0 0
      %911 = vperm.xlu0 %910, %v797
      %v912 = vpop.permute.xlu0 %911
      %915 = vset.pattern.permute.xlu0 0
      %916 = vperm.xlu0 %915, %v798
      %v917 = vpop.permute.xlu0 %916
      %920 = vset.pattern.permute.xlu0 0
      %921 = vperm.xlu0 %920, %v799
      %v922 = vpop.permute.xlu0 %921
      %925 = vset.pattern.permute.xlu0 0
      %926 = vperm.xlu0 %925, %v800
      %v927 = vpop.permute.xlu0 %926
      %930 = vset.pattern.permute.xlu0 0
      %931 = vperm.xlu0 %930, %v801
      %v932 = vpop.permute.xlu0 %931
      %935 = vset.pattern.permute.xlu0 0
      %936 = vperm.xlu0 %935, %v802
      %v937 = vpop.permute.xlu0 %936
      %940 = vset.pattern.permute.xlu0 0
      %941 = vperm.xlu0 %940, %v803
      %v942 = vpop.permute.xlu0 %941
      %945 = vset.pattern.permute.xlu0 0
      %946 = vperm.xlu0 %945, %v804
      %v947 = vpop.permute.xlu0 %946
      %950 = vset.pattern.permute.xlu0 0
      %951 = vperm.xlu0 %950, %v805
      %v952 = vpop.permute.xlu0 %951
      %955 = vset.pattern.permute.xlu0 0
      %956 = vperm.xlu0 %955, %v806
      %v957 = vpop.permute.xlu0 %956
      %960 = vset.pattern.permute.xlu0 0
      %961 = vperm.xlu0 %960, %v807
      %v962 = vpop.permute.xlu0 %961
      %965 = vset.pattern.permute.xlu0 0
      %966 = vperm.xlu0 %965, %v808
      %v967 = vpop.permute.xlu0 %966
      %v1001 = vunpack.c.l.b16 %v745
      %v1002 = vunpack.c.l.b16 %v746
      %v1003 = vunpack.c.l.b16 %v747
      %v1004 = vunpack.c.l.b16 %v748
      %v1005 = vunpack.c.l.b16 %v749
      %v1006 = vunpack.c.l.b16 %v750
      %v1007 = vunpack.c.l.b16 %v751
      %v1008 = vunpack.c.l.b16 %v752
      %v1009 = vunpack.c.l.b16 %v753
      %v1010 = vunpack.c.l.b16 %v754
      %v1011 = vunpack.c.l.b16 %v755
      %v1012 = vunpack.c.l.b16 %v756
      %v1013 = vunpack.c.l.b16 %v757
      %v1014 = vunpack.c.l.b16 %v758
      %v1015 = vunpack.c.l.b16 %v759
      %v1016 = vunpack.c.l.b16 %v760
      %v1017 = vunpack.c.l.b16 %v761
      %v1018 = vunpack.c.l.b16 %v762
      %v1019 = vunpack.c.l.b16 %v763
      %v1020 = vunpack.c.l.b16 %v764
      %v1021 = vunpack.c.l.b16 %v765
      %v1022 = vunpack.c.l.b16 %v766
      %v1023 = vunpack.c.l.b16 %v767
      %v1024 = vunpack.c.l.b16 %v768
      %v1025 = vunpack.c.l.b16 %v769
      %v1026 = vunpack.c.l.b16 %v770
      %v1027 = vunpack.c.l.b16 %v771
      %v1028 = vunpack.c.l.b16 %v772
      %v1029 = vunpack.c.l.b16 %v773
      %v1030 = vunpack.c.l.b16 %v774
      %v1031 = vunpack.c.l.b16 %v775
      %v1032 = vunpack.c.l.b16 %v776
      %v1033 = vpack.c.b16 %v1002, %v1001
      %v1034 = vpack.c.b16 %v1004, %v1003
      %v1035 = vpack.c.b16 %v1006, %v1005
      %v1036 = vpack.c.b16 %v1008, %v1007
      %v1037 = vpack.c.b16 %v1010, %v1009
      %v1038 = vpack.c.b16 %v1012, %v1011
      %v1039 = vpack.c.b16 %v1014, %v1013
      %v1040 = vpack.c.b16 %v1016, %v1015
      %v1041 = vpack.c.b16 %v1018, %v1017
      %v1042 = vpack.c.b16 %v1020, %v1019
      %v1043 = vpack.c.b16 %v1022, %v1021
      %v1044 = vpack.c.b16 %v1024, %v1023
      %v1045 = vpack.c.b16 %v1026, %v1025
      %v1046 = vpack.c.b16 %v1028, %v1027
      %v1047 = vpack.c.b16 %v1030, %v1029
      %v1048 = vpack.c.b16 %v1032, %v1031
      %1065 = vmatprep.subr.bf16.mxu0 0
      %1066 = vmatpush1.bf16.msra.mxu0 %v737
      %1067 = vmatprep.subr.bf16.mxu0 0
      %1068 = vmatpush1.bf16.msra.mxu0 %v738
      %1069 = vmatprep.subr.bf16.mxu0 0
      %1070 = vmatpush1.bf16.msra.mxu0 %v739
      %1071 = vmatprep.subr.bf16.mxu0 0
      %1072 = vmatpush1.bf16.msra.mxu0 %v740
      %1073 = vmatprep.subr.bf16.mxu0 0
      %1074 = vmatpush1.bf16.msra.mxu0 %v741
      %1075 = vmatprep.subr.bf16.mxu0 0
      %1076 = vmatpush1.bf16.msra.mxu0 %v742
      %1077 = vmatprep.subr.bf16.mxu0 0
      %1078 = vmatpush1.bf16.msra.mxu0 %v743
      %1079 = vmatprep.subr.bf16.mxu0 0
      %1080 = vmatpush1.bf16.msra.mxu0 %v744
      %1081 = vmatprep.subr.bf16.mxu0 0
      %1082 = vmatpush1.bf16.msra.mxu0 0
      %1083 = vmatprep.subr.bf16.mxu0 0
      %1084 = vmatpush1.bf16.msra.mxu0 0
      %1085 = vmatprep.subr.bf16.mxu0 0
      %1086 = vmatpush1.bf16.msra.mxu0 0
      %1087 = vmatprep.subr.bf16.mxu0 0
      %1088 = vmatpush1.bf16.msra.mxu0 0
      %1089 = vmatprep.subr.bf16.mxu0 0
      %1090 = vmatpush1.bf16.msra.mxu0 0
      %1091 = vmatprep.subr.bf16.mxu0 0
      %1092 = vmatpush1.bf16.msra.mxu0 0
      %1093 = vmatprep.subr.bf16.mxu0 0
      %1094 = vmatpush1.bf16.msra.mxu0 0
      %1095 = vmatprep.subr.bf16.mxu0 0
      %1096 = vmatpush1.bf16.msra.mxu0 0
      %1097 = vmatprep.mubr.bf16.mxu0 0
      %1098 = vmatmul.mubr.bf16.gmra.mrb[0].mxu0 %v1033
      %v1099 = vpop.f32.mrb[0].mxu0
      %v1100 = vadd.f32 %v812, %v1099
      %v1101 = vpop.f32.mrb[0].mxu0
      %v1102 = vpop.f32.mrb[0].mxu0
      %v1103 = vadd.f32 %v817, %v1102
      %v1104 = vpop.f32.mrb[0].mxu0
      %1105 = vmatprep.mubr.bf16.mxu0 0
      %1106 = vmatmul.mubr.bf16.gmra.mrb[0].mxu0 %v1034
      %v1107 = vpop.f32.mrb[0].mxu0
      %v1108 = vadd.f32 %v822, %v1107
      %v1109 = vpop.f32.mrb[0].mxu0
      %v1110 = vpop.f32.mrb[0].mxu0
      %v1111 = vadd.f32 %v827, %v1110
      %v1112 = vpop.f32.mrb[0].mxu0
      %1113 = vmatprep.mubr.bf16.mxu0 0
      %1114 = vmatmul.mubr.bf16.gmra.mrb[0].mxu0 %v1035
      %v1115 = vpop.f32.mrb[0].mxu0
      %v1116 = vadd.f32 %v832, %v1115
      %v1117 = vpop.f32.mrb[0].mxu0
      %v1118 = vpop.f32.mrb[0].mxu0
      %v1119 = vadd.f32 %v837, %v1118
      %v1120 = vpop.f32.mrb[0].mxu0
      %1121 = vmatprep.mubr.bf16.mxu0 0
      %1122 = vmatmul.mubr.bf16.gmra.mrb[0].mxu0 %v1036
      %v1123 = vpop.f32.mrb[0].mxu0
      %v1124 = vadd.f32 %v842, %v1123
      %v1125 = vpop.f32.mrb[0].mxu0
      %v1126 = vpop.f32.mrb[0].mxu0
      %v1127 = vadd.f32 %v847, %v1126
      %v1128 = vpop.f32.mrb[0].mxu0
      %1129 = vmatprep.mubr.bf16.mxu0 0
      %1130 = vmatmul.mubr.bf16.gmra.mrb[0].mxu0 %v1037
      %v1131 = vpop.f32.mrb[0].mxu0
      %v1132 = vadd.f32 %v852, %v1131
      %v1133 = vpop.f32.mrb[0].mxu0
      %v1134 = vpop.f32.mrb[0].mxu0
      %v1135 = vadd.f32 %v857, %v1134
      %v1136 = vpop.f32.mrb[0].mxu0
      %1137 = vmatprep.mubr.bf16.mxu0 0
      %1138 = vmatmul.mubr.bf16.gmra.mrb[0].mxu0 %v1038
      %v1139 = vpop.f32.mrb[0].mxu0
      %v1140 = vadd.f32 %v862, %v1139
      %v1141 = vpop.f32.mrb[0].mxu0
      %v1142 = vpop.f32.mrb[0].mxu0
      %v1143 = vadd.f32 %v867, %v1142
      %v1144 = vpop.f32.mrb[0].mxu0
      %1145 = vmatprep.mubr.bf16.mxu0 0
      %1146 = vmatmul.mubr.bf16.gmra.mrb[0].mxu0 %v1039
      %v1147 = vpop.f32.mrb[0].mxu0
      %v1148 = vadd.f32 %v872, %v1147
      %v1149 = vpop.f32.mrb[0].mxu0
      %v1150 = vpop.f32.mrb[0].mxu0
      %v1151 = vadd.f32 %v877, %v1150
      %v1152 = vpop.f32.mrb[0].mxu0
      %1153 = vmatprep.mubr.bf16.mxu0 0
      %1154 = vmatmul.mubr.bf16.gmra.mrb[0].mxu0 %v1040
      %v1155 = vpop.f32.mrb[0].mxu0
      %v1156 = vadd.f32 %v882, %v1155
      %v1157 = vpop.f32.mrb[0].mxu0
      %v1158 = vpop.f32.mrb[0].mxu0
      %v1159 = vadd.f32 %v887, %v1158
      %v1160 = vpop.f32.mrb[0].mxu0
      %1161 = vmatprep.mubr.bf16.mxu0 0
      %1162 = vmatmul.mubr.bf16.gmra.mrb[0].mxu0 %v1041
      %v1163 = vpop.f32.mrb[0].mxu0
      %v1164 = vadd.f32 %v892, %v1163
      %v1165 = vpop.f32.mrb[0].mxu0
      %v1166 = vpop.f32.mrb[0].mxu0
      %v1167 = vadd.f32 %v897, %v1166
      %v1168 = vpop.f32.mrb[0].mxu0
      %1169 = vmatprep.mubr.bf16.mxu0 0
      %1170 = vmatmul.mubr.bf16.gmra.mrb[0].mxu0 %v1042
      %v1171 = vpop.f32.mrb[0].mxu0
      %v1172 = vadd.f32 %v902, %v1171
      %v1173 = vpop.f32.mrb[0].mxu0
      %v1174 = vpop.f32.mrb[0].mxu0
      %v1175 = vadd.f32 %v907, %v1174
      %v1176 = vpop.f32.mrb[0].mxu0
      %1177 = vmatprep.mubr.bf16.mxu0 0
      %1178 = vmatmul.mubr.bf16.gmra.mrb[0].mxu0 %v1043
      %v1179 = vpop.f32.mrb[0].mxu0
      %v1180 = vadd.f32 %v912, %v1179
      %v1181 = vpop.f32.mrb[0].mxu0
      %v1182 = vpop.f32.mrb[0].mxu0
      %v1183 = vadd.f32 %v917, %v1182
      %v1184 = vpop.f32.mrb[0].mxu0
      %1185 = vmatprep.mubr.bf16.mxu0 0
      %1186 = vmatmul.mubr.bf16.gmra.mrb[0].mxu0 %v1044
      %v1187 = vpop.f32.mrb[0].mxu0
      %v1188 = vadd.f32 %v922, %v1187
      %v1189 = vpop.f32.mrb[0].mxu0
      %v1190 = vpop.f32.mrb[0].mxu0
      %v1191 = vadd.f32 %v927, %v1190
      %v1192 = vpop.f32.mrb[0].mxu0
      %1193 = vmatprep.mubr.bf16.mxu0 0
      %1194 = vmatmul.mubr.bf16.gmra.mrb[0].mxu0 %v1045
      %v1195 = vpop.f32.mrb[0].mxu0
      %v1196 = vadd.f32 %v932, %v1195
      %v1197 = vpop.f32.mrb[0].mxu0
      %v1198 = vpop.f32.mrb[0].mxu0
      %v1199 = vadd.f32 %v937, %v1198
      %v1200 = vpop.f32.mrb[0].mxu0
      %1201 = vmatprep.mubr.bf16.mxu0 0
      %1202 = vmatmul.mubr.bf16.gmra.mrb[0].mxu0 %v1046
      %v1203 = vpop.f32.mrb[0].mxu0
      %v1204 = vadd.f32 %v942, %v1203
      %v1205 = vpop.f32.mrb[0].mxu0
      %v1206 = vpop.f32.mrb[0].mxu0
      %v1207 = vadd.f32 %v947, %v1206
      %v1208 = vpop.f32.mrb[0].mxu0
      %1209 = vmatprep.mubr.bf16.mxu0 0
      %1210 = vmatmul.mubr.bf16.gmra.mrb[0].mxu0 %v1047
      %v1211 = vpop.f32.mrb[0].mxu0
      %v1212 = vadd.f32 %v952, %v1211
      %v1213 = vpop.f32.mrb[0].mxu0
      %v1214 = vpop.f32.mrb[0].mxu0
      %v1215 = vadd.f32 %v957, %v1214
      %v1216 = vpop.f32.mrb[0].mxu0
      %1217 = vmatprep.mubr.bf16.mxu0 0
      %1218 = vmatmul.mubr.bf16.gmra.mrb[0].mxu0 %v1048
      %v1219 = vpop.f32.mrb[0].mxu0
      %v1220 = vadd.f32 %v962, %v1219
      %v1221 = vpop.f32.mrb[0].mxu0
      %v1222 = vpop.f32.mrb[0].mxu0
      %v1223 = vadd.f32 %v967, %v1222
      %v1224 = vpop.f32.mrb[0].mxu0
      %1225 = vdwg.mxu0
      %v1226 = vmax.f32 %v1100, 0.0
      %v1227 = vmax.f32 %v1103, 0.0
      %v1228 = vmax.f32 %v1108, 0.0
      %v1229 = vmax.f32 %v1111, 0.0
      %v1230 = vmax.f32 %v1116, 0.0
      %v1231 = vmax.f32 %v1119, 0.0
      %v1232 = vmax.f32 %v1124, 0.0
      %v1233 = vmax.f32 %v1127, 0.0
      %v1234 = vmax.f32 %v1132, 0.0
      %v1235 = vmax.f32 %v1135, 0.0
      %v1236 = vmax.f32 %v1140, 0.0
      %v1237 = vmax.f32 %v1143, 0.0
      %v1238 = vmax.f32 %v1148, 0.0
      %v1239 = vmax.f32 %v1151, 0.0
      %v1240 = vmax.f32 %v1156, 0.0
      %v1241 = vmax.f32 %v1159, 0.0
      %v1242 = vmax.f32 %v1164, 0.0
      %v1243 = vmax.f32 %v1167, 0.0
      %v1244 = vmax.f32 %v1172, 0.0
      %v1245 = vmax.f32 %v1175, 0.0
      %v1246 = vmax.f32 %v1180, 0.0
      %v1247 = vmax.f32 %v1183, 0.0
      %v1248 = vmax.f32 %v1188, 0.0
      %v1249 = vmax.f32 %v1191, 0.0
      %v1250 = vmax.f32 %v1196, 0.0
      %v1251 = vmax.f32 %v1199, 0.0
      %v1252 = vmax.f32 %v1204, 0.0
      %v1253 = vmax.f32 %v1207, 0.0
      %v1254 = vmax.f32 %v1212, 0.0
      %v1255 = vmax.f32 %v1215, 0.0
      %v1256 = vmax.f32 %v1220, 0.0
      %v1257 = vmax.f32 %v1223, 0.0
      %v1258 = vpack.c.bf16 %v1227, %v1226
      %v1259 = vpack.c.bf16 %v1229, %v1228
      %v1260 = vpack.c.bf16 %v1231, %v1230
      %v1261 = vpack.c.bf16 %v1233, %v1232
      %v1262 = vpack.c.bf16 %v1235, %v1234
      %v1263 = vpack.c.bf16 %v1237, %v1236
      %v1264 = vpack.c.bf16 %v1239, %v1238
      %v1265 = vpack.c.bf16 %v1241, %v1240
      %v1266 = vpack.c.bf16 %v1243, %v1242
      %v1267 = vpack.c.bf16 %v1245, %v1244
      %v1268 = vpack.c.bf16 %v1247, %v1246
      %v1269 = vpack.c.bf16 %v1249, %v1248
      %v1270 = vpack.c.bf16 %v1251, %v1250
      %v1271 = vpack.c.bf16 %v1253, %v1252
      %v1272 = vpack.c.bf16 %v1255, %v1254
      %v1273 = vpack.c.bf16 %v1257, %v1256
      %v1274 = vld [vmem:[%s5] sm:$0xff]
      %v1275 = vld [vmem:[%s5 + $0x8] sm:$0xff]
      %v1276 = vld [vmem:[%s5 + $0x10] sm:$0xff]
      %v1277 = vld [vmem:[%s5 + $0x18] sm:$0xff]
      %v1278 = vld [vmem:[%s5 + $0x20] sm:$0xff]
      %v1279 = vld [vmem:[%s5 + $0x28] sm:$0xff]
      %v1280 = vld [vmem:[%s5 + $0x30] sm:$0xff]
      %v1281 = vld [vmem:[%s5 + $0x38] sm:$0xff]
      %v1282 = vld [vmem:[%s5 + $0x40] sm:$0xff]
      %v1283 = vld [vmem:[%s5 + $0x48] sm:$0xff]
      %v1284 = vld [vmem:[%s5 + $0x50] sm:$0xff]
      %v1285 = vld [vmem:[%s5 + $0x58] sm:$0xff]
      %v1286 = vld [vmem:[%s5 + $0x60] sm:$0xff]
      %v1287 = vld [vmem:[%s5 + $0x68] sm:$0xff]
      %v1288 = vld [vmem:[%s5 + $0x70] sm:$0xff]
      %v1289 = vld [vmem:[%s5 + $0x78] sm:$0xff]
      %v1290 = vld [vmem:[%s5 + $0x80] sm:$0xff]
      %v1291 = vld [vmem:[%s5 + $0x88] sm:$0xff]
      %v1292 = vld [vmem:[%s5 + $0x90] sm:$0xff]
      %v1293 = vld [vmem:[%s5 + $0x98] sm:$0xff]
      %v1294 = vld [vmem:[%s5 + $0xa0] sm:$0xff]
      %v1295 = vld [vmem:[%s5 + $0xa8] sm:$0xff]
      %v1296 = vld [vmem:[%s5 + $0xb0] sm:$0xff]
      %v1297 = vld [vmem:[%s5 + $0xb8] sm:$0xff]
      %v1298 = vld [vmem:[%s5 + $0xc0] sm:$0xff]
      %v1299 = vld [vmem:[%s5 + $0xc8] sm:$0xff]
      %v1300 = vld [vmem:[%s5 + $0xd0] sm:$0xff]
      %v1301 = vld [vmem:[%s5 + $0xd8] sm:$0xff]
      %v1302 = vld [vmem:[%s5 + $0xe0] sm:$0xff]
      %v1303 = vld [vmem:[%s5 + $0xe8] sm:$0xff]
      %v1304 = vld [vmem:[%s5 + $0xf0] sm:$0xff]
      %v1305 = vld [vmem:[%s5 + $0xf8] sm:$0xff]
      %v1306 = vld [vmem:[%s5 + $0x100] sm:$0xff]
      %v1307 = vld [vmem:[%s5 + $0x108] sm:$0xff]
      %v1308 = vld [vmem:[%s5 + $0x110] sm:$0xff]
      %v1309 = vld [vmem:[%s5 + $0x118] sm:$0xff]
      %v1310 = vld [vmem:[%s5 + $0x120] sm:$0xff]
      %v1311 = vld [vmem:[%s5 + $0x128] sm:$0xff]
      %v1312 = vld [vmem:[%s5 + $0x130] sm:$0xff]
      %v1313 = vld [vmem:[%s5 + $0x138] sm:$0xff]
      %v1314 = vld [vmem:[%s5 + $0x140] sm:$0xff]
      %v1315 = vld [vmem:[%s5 + $0x148] sm:$0xff]
      %v1316 = vld [vmem:[%s5 + $0x150] sm:$0xff]
      %v1317 = vld [vmem:[%s5 + $0x158] sm:$0xff]
      %v1318 = vld [vmem:[%s5 + $0x160] sm:$0xff]
      %v1319 = vld [vmem:[%s5 + $0x168] sm:$0xff]
      %v1320 = vld [vmem:[%s5 + $0x170] sm:$0xff]
      %v1321 = vld [vmem:[%s5 + $0x178] sm:$0xff]
      %v1322 = vld [vmem:[%s5 + $0x180] sm:$0xff]
      %v1323 = vld [vmem:[%s5 + $0x188] sm:$0xff]
      %v1324 = vld [vmem:[%s5 + $0x190] sm:$0xff]
      %v1325 = vld [vmem:[%s5 + $0x198] sm:$0xff]
      %v1326 = vld [vmem:[%s5 + $0x1a0] sm:$0xff]
      %v1327 = vld [vmem:[%s5 + $0x1a8] sm:$0xff]
      %v1328 = vld [vmem:[%s5 + $0x1b0] sm:$0xff]
      %v1329 = vld [vmem:[%s5 + $0x1b8] sm:$0xff]
      %v1330 = vld [vmem:[%s5 + $0x1c0] sm:$0xff]
      %v1331 = vld [vmem:[%s5 + $0x1c8] sm:$0xff]
      %v1332 = vld [vmem:[%s5 + $0x1d0] sm:$0xff]
      %v1333 = vld [vmem:[%s5 + $0x1d8] sm:$0xff]
      %v1334 = vld [vmem:[%s5 + $0x1e0] sm:$0xff]
      %v1335 = vld [vmem:[%s5 + $0x1e8] sm:$0xff]
      %v1336 = vld [vmem:[%s5 + $0x1f0] sm:$0xff]
      %v1337 = vld [vmem:[%s5 + $0x1f8] sm:$0xff]
      %v1338 = vld [vmem:[%s5 + $0x200] sm:$0xff]
      %v1339 = vld [vmem:[%s5 + $0x208] sm:$0xff]
      %v1340 = vld [vmem:[%s5 + $0x210] sm:$0xff]
      %v1341 = vld [vmem:[%s5 + $0x218] sm:$0xff]
      %v1342 = vld [vmem:[%s5 + $0x220] sm:$0xff]
      %v1343 = vld [vmem:[%s5 + $0x228] sm:$0xff]
      %v1344 = vld [vmem:[%s5 + $0x230] sm:$0xff]
      %v1345 = vld [vmem:[%s5 + $0x238] sm:$0xff]
      %v1346 = vld [vmem:[%s5 + $0x240] sm:$0xff]
      %v1347 = vld [vmem:[%s5 + $0x248] sm:$0xff]
      %v1348 = vld [vmem:[%s5 + $0x250] sm:$0xff]
      %v1349 = vld [vmem:[%s5 + $0x258] sm:$0xff]
      %v1350 = vld [vmem:[%s5 + $0x260] sm:$0xff]
      %v1351 = vld [vmem:[%s5 + $0x268] sm:$0xff]
      %v1352 = vld [vmem:[%s5 + $0x270] sm:$0xff]
      %v1353 = vld [vmem:[%s5 + $0x278] sm:$0xff]
      %v1354 = vld [vmem:[%s5 + $0x280] sm:$0xff]
      %v1355 = vld [vmem:[%s5 + $0x288] sm:$0xff]
      %v1356 = vld [vmem:[%s5 + $0x290] sm:$0xff]
      %v1357 = vld [vmem:[%s5 + $0x298] sm:$0xff]
      %v1358 = vld [vmem:[%s5 + $0x2a0] sm:$0xff]
      %v1359 = vld [vmem:[%s5 + $0x2a8] sm:$0xff]
      %v1360 = vld [vmem:[%s5 + $0x2b0] sm:$0xff]
      %v1361 = vld [vmem:[%s5 + $0x2b8] sm:$0xff]
      %v1362 = vld [vmem:[%s5 + $0x2c0] sm:$0xff]
      %v1363 = vld [vmem:[%s5 + $0x2c8] sm:$0xff]
      %v1364 = vld [vmem:[%s5 + $0x2d0] sm:$0xff]
      %v1365 = vld [vmem:[%s5 + $0x2d8] sm:$0xff]
      %v1366 = vld [vmem:[%s5 + $0x2e0] sm:$0xff]
      %v1367 = vld [vmem:[%s5 + $0x2e8] sm:$0xff]
      %v1368 = vld [vmem:[%s5 + $0x2f0] sm:$0xff]
      %v1369 = vld [vmem:[%s5 + $0x2f8] sm:$0xff]
      %v1370 = vld [vmem:[%s5 + $0x300] sm:$0xff]
      %v1371 = vld [vmem:[%s5 + $0x308] sm:$0xff]
      %v1372 = vld [vmem:[%s5 + $0x310] sm:$0xff]
      %v1373 = vld [vmem:[%s5 + $0x318] sm:$0xff]
      %v1374 = vld [vmem:[%s5 + $0x320] sm:$0xff]
      %v1375 = vld [vmem:[%s5 + $0x328] sm:$0xff]
      %v1376 = vld [vmem:[%s5 + $0x330] sm:$0xff]
      %v1377 = vld [vmem:[%s5 + $0x338] sm:$0xff]
      %v1378 = vld [vmem:[%s5 + $0x340] sm:$0xff]
      %v1379 = vld [vmem:[%s5 + $0x348] sm:$0xff]
      %v1380 = vld [vmem:[%s5 + $0x350] sm:$0xff]
      %v1381 = vld [vmem:[%s5 + $0x358] sm:$0xff]
      %v1382 = vld [vmem:[%s5 + $0x360] sm:$0xff]
      %v1383 = vld [vmem:[%s5 + $0x368] sm:$0xff]
      %v1384 = vld [vmem:[%s5 + $0x370] sm:$0xff]
      %v1385 = vld [vmem:[%s5 + $0x378] sm:$0xff]
      %v1386 = vld [vmem:[%s5 + $0x380] sm:$0xff]
      %v1387 = vld [vmem:[%s5 + $0x388] sm:$0xff]
      %v1388 = vld [vmem:[%s5 + $0x390] sm:$0xff]
      %v1389 = vld [vmem:[%s5 + $0x398] sm:$0xff]
      %v1390 = vld [vmem:[%s5 + $0x3a0] sm:$0xff]
      %v1391 = vld [vmem:[%s5 + $0x3a8] sm:$0xff]
      %v1392 = vld [vmem:[%s5 + $0x3b0] sm:$0xff]
      %v1393 = vld [vmem:[%s5 + $0x3b8] sm:$0xff]
      %v1394 = vld [vmem:[%s5 + $0x3c0] sm:$0xff]
      %v1395 = vld [vmem:[%s5 + $0x3c8] sm:$0xff]
      %v1396 = vld [vmem:[%s5 + $0x3d0] sm:$0xff]
      %v1397 = vld [vmem:[%s5 + $0x3d8] sm:$0xff]
      %v1398 = vld [vmem:[%s5 + $0x3e0] sm:$0xff]
      %v1399 = vld [vmem:[%s5 + $0x3e8] sm:$0xff]
      %v1400 = vld [vmem:[%s5 + $0x3f0] sm:$0xff]
      %v1401 = vld [vmem:[%s5 + $0x3f8] sm:$0xff]
      %v1402 = vld [vmem:[%s6] sm:$0xff]
      %v1403 = vld [vmem:[%s6 + $0x8] sm:$0xff]
      %v1404 = vld [vmem:[%s6 + $0x10] sm:$0xff]
      %v1405 = vld [vmem:[%s6 + $0x18] sm:$0xff]
      %v1406 = vld [vmem:[%s6 + $0x20] sm:$0xff]
      %v1407 = vld [vmem:[%s6 + $0x28] sm:$0xff]
      %v1408 = vld [vmem:[%s6 + $0x30] sm:$0xff]
      %v1409 = vld [vmem:[%s6 + $0x38] sm:$0xff]
      %v1410 = vld [vmem:[%s6 + $0x40] sm:$0xff]
      %v1411 = vld [vmem:[%s6 + $0x48] sm:$0xff]
      %v1412 = vld [vmem:[%s6 + $0x50] sm:$0xff]
      %v1413 = vld [vmem:[%s6 + $0x58] sm:$0xff]
      %v1414 = vld [vmem:[%s6 + $0x60] sm:$0xff]
      %v1415 = vld [vmem:[%s6 + $0x68] sm:$0xff]
      %v1416 = vld [vmem:[%s6 + $0x70] sm:$0xff]
      %v1417 = vld [vmem:[%s6 + $0x78] sm:$0xff]
      %v1418 = vld [vmem:[%s6 + $0x80] sm:$0xff]
      %v1419 = vld [vmem:[%s6 + $0x88] sm:$0xff]
      %v1420 = vld [vmem:[%s6 + $0x90] sm:$0xff]
      %v1421 = vld [vmem:[%s6 + $0x98] sm:$0xff]
      %v1422 = vld [vmem:[%s6 + $0xa0] sm:$0xff]
      %v1423 = vld [vmem:[%s6 + $0xa8] sm:$0xff]
      %v1424 = vld [vmem:[%s6 + $0xb0] sm:$0xff]
      %v1425 = vld [vmem:[%s6 + $0xb8] sm:$0xff]
      %v1426 = vld [vmem:[%s6 + $0xc0] sm:$0xff]
      %v1427 = vld [vmem:[%s6 + $0xc8] sm:$0xff]
      %v1428 = vld [vmem:[%s6 + $0xd0] sm:$0xff]
      %v1429 = vld [vmem:[%s6 + $0xd8] sm:$0xff]
      %v1430 = vld [vmem:[%s6 + $0xe0] sm:$0xff]
      %v1431 = vld [vmem:[%s6 + $0xe8] sm:$0xff]
      %v1432 = vld [vmem:[%s6 + $0xf0] sm:$0xff]
      %v1433 = vld [vmem:[%s6 + $0xf8] sm:$0xff]
      %v1434 = vld [vmem:[%s6 + $0x100] sm:$0xff]
      %v1435 = vld [vmem:[%s6 + $0x108] sm:$0xff]
      %v1436 = vld [vmem:[%s6 + $0x110] sm:$0xff]
      %v1437 = vld [vmem:[%s6 + $0x118] sm:$0xff]
      %v1438 = vld [vmem:[%s6 + $0x120] sm:$0xff]
      %v1439 = vld [vmem:[%s6 + $0x128] sm:$0xff]
      %v1440 = vld [vmem:[%s6 + $0x130] sm:$0xff]
      %v1441 = vld [vmem:[%s6 + $0x138] sm:$0xff]
      %v1442 = vld [vmem:[%s6 + $0x140] sm:$0xff]
      %v1443 = vld [vmem:[%s6 + $0x148] sm:$0xff]
      %v1444 = vld [vmem:[%s6 + $0x150] sm:$0xff]
      %v1445 = vld [vmem:[%s6 + $0x158] sm:$0xff]
      %v1446 = vld [vmem:[%s6 + $0x160] sm:$0xff]
      %v1447 = vld [vmem:[%s6 + $0x168] sm:$0xff]
      %v1448 = vld [vmem:[%s6 + $0x170] sm:$0xff]
      %v1449 = vld [vmem:[%s6 + $0x178] sm:$0xff]
      %v1450 = vld [vmem:[%s6 + $0x180] sm:$0xff]
      %v1451 = vld [vmem:[%s6 + $0x188] sm:$0xff]
      %v1452 = vld [vmem:[%s6 + $0x190] sm:$0xff]
      %v1453 = vld [vmem:[%s6 + $0x198] sm:$0xff]
      %v1454 = vld [vmem:[%s6 + $0x1a0] sm:$0xff]
      %v1455 = vld [vmem:[%s6 + $0x1a8] sm:$0xff]
      %v1456 = vld [vmem:[%s6 + $0x1b0] sm:$0xff]
      %v1457 = vld [vmem:[%s6 + $0x1b8] sm:$0xff]
      %v1458 = vld [vmem:[%s6 + $0x1c0] sm:$0xff]
      %v1459 = vld [vmem:[%s6 + $0x1c8] sm:$0xff]
      %v1460 = vld [vmem:[%s6 + $0x1d0] sm:$0xff]
      %v1461 = vld [vmem:[%s6 + $0x1d8] sm:$0xff]
      %v1462 = vld [vmem:[%s6 + $0x1e0] sm:$0xff]
      %v1463 = vld [vmem:[%s6 + $0x1e8] sm:$0xff]
      %v1464 = vld [vmem:[%s6 + $0x1f0] sm:$0xff]
      %v1465 = vld [vmem:[%s6 + $0x1f8] sm:$0xff]
      %v1466 = vld [vmem:[%s6 + $0x200] sm:$0xff]
      %v1467 = vld [vmem:[%s6 + $0x208] sm:$0xff]
      %v1468 = vld [vmem:[%s6 + $0x210] sm:$0xff]
      %v1469 = vld [vmem:[%s6 + $0x218] sm:$0xff]
      %v1470 = vld [vmem:[%s6 + $0x220] sm:$0xff]
      %v1471 = vld [vmem:[%s6 + $0x228] sm:$0xff]
      %v1472 = vld [vmem:[%s6 + $0x230] sm:$0xff]
      %v1473 = vld [vmem:[%s6 + $0x238] sm:$0xff]
      %v1474 = vld [vmem:[%s6 + $0x240] sm:$0xff]
      %v1475 = vld [vmem:[%s6 + $0x248] sm:$0xff]
      %v1476 = vld [vmem:[%s6 + $0x250] sm:$0xff]
      %v1477 = vld [vmem:[%s6 + $0x258] sm:$0xff]
      %v1478 = vld [vmem:[%s6 + $0x260] sm:$0xff]
      %v1479 = vld [vmem:[%s6 + $0x268] sm:$0xff]
      %v1480 = vld [vmem:[%s6 + $0x270] sm:$0xff]
      %v1481 = vld [vmem:[%s6 + $0x278] sm:$0xff]
      %v1482 = vld [vmem:[%s6 + $0x280] sm:$0xff]
      %v1483 = vld [vmem:[%s6 + $0x288] sm:$0xff]
      %v1484 = vld [vmem:[%s6 + $0x290] sm:$0xff]
      %v1485 = vld [vmem:[%s6 + $0x298] sm:$0xff]
      %v1486 = vld [vmem:[%s6 + $0x2a0] sm:$0xff]
      %v1487 = vld [vmem:[%s6 + $0x2a8] sm:$0xff]
      %v1488 = vld [vmem:[%s6 + $0x2b0] sm:$0xff]
      %v1489 = vld [vmem:[%s6 + $0x2b8] sm:$0xff]
      %v1490 = vld [vmem:[%s6 + $0x2c0] sm:$0xff]
      %v1491 = vld [vmem:[%s6 + $0x2c8] sm:$0xff]
      %v1492 = vld [vmem:[%s6 + $0x2d0] sm:$0xff]
      %v1493 = vld [vmem:[%s6 + $0x2d8] sm:$0xff]
      %v1494 = vld [vmem:[%s6 + $0x2e0] sm:$0xff]
      %v1495 = vld [vmem:[%s6 + $0x2e8] sm:$0xff]
      %v1496 = vld [vmem:[%s6 + $0x2f0] sm:$0xff]
      %v1497 = vld [vmem:[%s6 + $0x2f8] sm:$0xff]
      %v1498 = vld [vmem:[%s6 + $0x300] sm:$0xff]
      %v1499 = vld [vmem:[%s6 + $0x308] sm:$0xff]
      %v1500 = vld [vmem:[%s6 + $0x310] sm:$0xff]
      %v1501 = vld [vmem:[%s6 + $0x318] sm:$0xff]
      %v1502 = vld [vmem:[%s6 + $0x320] sm:$0xff]
      %v1503 = vld [vmem:[%s6 + $0x328] sm:$0xff]
      %v1504 = vld [vmem:[%s6 + $0x330] sm:$0xff]
      %v1505 = vld [vmem:[%s6 + $0x338] sm:$0xff]
      %v1506 = vld [vmem:[%s6 + $0x340] sm:$0xff]
      %v1507 = vld [vmem:[%s6 + $0x348] sm:$0xff]
      %v1508 = vld [vmem:[%s6 + $0x350] sm:$0xff]
      %v1509 = vld [vmem:[%s6 + $0x358] sm:$0xff]
      %v1510 = vld [vmem:[%s6 + $0x360] sm:$0xff]
      %v1511 = vld [vmem:[%s6 + $0x368] sm:$0xff]
      %v1512 = vld [vmem:[%s6 + $0x370] sm:$0xff]
      %v1513 = vld [vmem:[%s6 + $0x378] sm:$0xff]
      %v1514 = vld [vmem:[%s6 + $0x380] sm:$0xff]
      %v1515 = vld [vmem:[%s6 + $0x388] sm:$0xff]
      %v1516 = vld [vmem:[%s6 + $0x390] sm:$0xff]
      %v1517 = vld [vmem:[%s6 + $0x398] sm:$0xff]
      %v1518 = vld [vmem:[%s6 + $0x3a0] sm:$0xff]
      %v1519 = vld [vmem:[%s6 + $0x3a8] sm:$0xff]
      %v1520 = vld [vmem:[%s6 + $0x3b0] sm:$0xff]
      %v1521 = vld [vmem:[%s6 + $0x3b8] sm:$0xff]
      %v1522 = vld [vmem:[%s6 + $0x3c0] sm:$0xff]
      %v1523 = vld [vmem:[%s6 + $0x3c8] sm:$0xff]
      %v1524 = vld [vmem:[%s6 + $0x3d0] sm:$0xff]
      %v1525 = vld [vmem:[%s6 + $0x3d8] sm:$0xff]
      %v1526 = vld [vmem:[%s6 + $0x3e0] sm:$0xff]
      %v1527 = vld [vmem:[%s6 + $0x3e8] sm:$0xff]
      %v1528 = vld [vmem:[%s6 + $0x3f0] sm:$0xff]
      %v1529 = vld [vmem:[%s6 + $0x3f8] sm:$0xff]
      %1531 = vset.pattern.permute.xlu0 0
      %1532 = vperm.xlu0 %1531, %v1402
      %v1533 = vpop.permute.xlu0 %1532
      %1536 = vset.pattern.permute.xlu0 0
      %1537 = vperm.xlu0 %1536, %v1403
      %v1538 = vpop.permute.xlu0 %1537
      %1541 = vset.pattern.permute.xlu0 0
      %1542 = vperm.xlu0 %1541, %v1404
      %v1543 = vpop.permute.xlu0 %1542
      %1546 = vset.pattern.permute.xlu0 0
      %1547 = vperm.xlu0 %1546, %v1405
      %v1548 = vpop.permute.xlu0 %1547
      %1551 = vset.pattern.permute.xlu0 0
      %1552 = vperm.xlu0 %1551, %v1406
      %v1553 = vpop.permute.xlu0 %1552
      %1556 = vset.pattern.permute.xlu0 0
      %1557 = vperm.xlu0 %1556, %v1407
      %v1558 = vpop.permute.xlu0 %1557
      %1561 = vset.pattern.permute.xlu0 0
      %1562 = vperm.xlu0 %1561, %v1408
      %v1563 = vpop.permute.xlu0 %1562
      %1566 = vset.pattern.permute.xlu0 0
      %1567 = vperm.xlu0 %1566, %v1409
      %v1568 = vpop.permute.xlu0 %1567
      %1571 = vset.pattern.permute.xlu0 0
      %1572 = vperm.xlu0 %1571, %v1410
      %v1573 = vpop.permute.xlu0 %1572
      %1576 = vset.pattern.permute.xlu0 0
      %1577 = vperm.xlu0 %1576, %v1411
      %v1578 = vpop.permute.xlu0 %1577
      %1581 = vset.pattern.permute.xlu0 0
      %1582 = vperm.xlu0 %1581, %v1412
      %v1583 = vpop.permute.xlu0 %1582
      %1586 = vset.pattern.permute.xlu0 0
      %1587 = vperm.xlu0 %1586, %v1413
      %v1588 = vpop.permute.xlu0 %1587
      %1591 = vset.pattern.permute.xlu0 0
      %1592 = vperm.xlu0 %1591, %v1414
      %v1593 = vpop.permute.xlu0 %1592
      %1596 = vset.pattern.permute.xlu0 0
      %1597 = vperm.xlu0 %1596, %v1415
      %v1598 = vpop.permute.xlu0 %1597
      %1601 = vset.pattern.permute.xlu0 0
      %1602 = vperm.xlu0 %1601, %v1416
      %v1603 = vpop.permute.xlu0 %1602
      %1606 = vset.pattern.permute.xlu0 0
      %1607 = vperm.xlu0 %1606, %v1417
      %v1608 = vpop.permute.xlu0 %1607
      %1611 = vset.pattern.permute.xlu0 0
      %1612 = vperm.xlu0 %1611, %v1418
      %v1613 = vpop.permute.xlu0 %1612
      %1616 = vset.pattern.permute.xlu0 0
      %1617 = vperm.xlu0 %1616, %v1419
      %v1618 = vpop.permute.xlu0 %1617
      %1621 = vset.pattern.permute.xlu0 0
      %1622 = vperm.xlu0 %1621, %v1420
      %v1623 = vpop.permute.xlu0 %1622
      %1626 = vset.pattern.permute.xlu0 0
      %1627 = vperm.xlu0 %1626, %v1421
      %v1628 = vpop.permute.xlu0 %1627
      %1631 = vset.pattern.permute.xlu0 0
      %1632 = vperm.xlu0 %1631, %v1422
      %v1633 = vpop.permute.xlu0 %1632
      %1636 = vset.pattern.permute.xlu0 0
      %1637 = vperm.xlu0 %1636, %v1423
      %v1638 = vpop.permute.xlu0 %1637
      %1641 = vset.pattern.permute.xlu0 0
      %1642 = vperm.xlu0 %1641, %v1424
      %v1643 = vpop.permute.xlu0 %1642
      %1646 = vset.pattern.permute.xlu0 0
      %1647 = vperm.xlu0 %1646, %v1425
      %v1648 = vpop.permute.xlu0 %1647
      %1651 = vset.pattern.permute.xlu0 0
      %1652 = vperm.xlu0 %1651, %v1426
      %v1653 = vpop.permute.xlu0 %1652
      %1656 = vset.pattern.permute.xlu0 0
      %1657 = vperm.xlu0 %1656, %v1427
      %v1658 = vpop.permute.xlu0 %1657
      %1661 = vset.pattern.permute.xlu0 0
      %1662 = vperm.xlu0 %1661, %v1428
      %v1663 = vpop.permute.xlu0 %1662
      %1666 = vset.pattern.permute.xlu0 0
      %1667 = vperm.xlu0 %1666, %v1429
      %v1668 = vpop.permute.xlu0 %1667
      %1671 = vset.pattern.permute.xlu0 0
      %1672 = vperm.xlu0 %1671, %v1430
      %v1673 = vpop.permute.xlu0 %1672
      %1676 = vset.pattern.permute.xlu0 0
      %1677 = vperm.xlu0 %1676, %v1431
      %v1678 = vpop.permute.xlu0 %1677
      %1681 = vset.pattern.permute.xlu0 0
      %1682 = vperm.xlu0 %1681, %v1432
      %v1683 = vpop.permute.xlu0 %1682
      %1686 = vset.pattern.permute.xlu0 0
      %1687 = vperm.xlu0 %1686, %v1433
      %v1688 = vpop.permute.xlu0 %1687
      %1691 = vset.pattern.permute.xlu0 0
      %1692 = vperm.xlu0 %1691, %v1434
      %v1693 = vpop.permute.xlu0 %1692
      %1696 = vset.pattern.permute.xlu0 0
      %1697 = vperm.xlu0 %1696, %v1435
      %v1698 = vpop.permute.xlu0 %1697
      %1701 = vset.pattern.permute.xlu0 0
      %1702 = vperm.xlu0 %1701, %v1436
      %v1703 = vpop.permute.xlu0 %1702
      %1706 = vset.pattern.permute.xlu0 0
      %1707 = vperm.xlu0 %1706, %v1437
      %v1708 = vpop.permute.xlu0 %1707
      %1711 = vset.pattern.permute.xlu0 0
      %1712 = vperm.xlu0 %1711, %v1438
      %v1713 = vpop.permute.xlu0 %1712
      %1716 = vset.pattern.permute.xlu0 0
      %1717 = vperm.xlu0 %1716, %v1439
      %v1718 = vpop.permute.xlu0 %1717
      %1721 = vset.pattern.permute.xlu0 0
      %1722 = vperm.xlu0 %1721, %v1440
      %v1723 = vpop.permute.xlu0 %1722
      %1726 = vset.pattern.permute.xlu0 0
      %1727 = vperm.xlu0 %1726, %v1441
      %v1728 = vpop.permute.xlu0 %1727
      %1731 = vset.pattern.permute.xlu0 0
      %1732 = vperm.xlu0 %1731, %v1442
      %v1733 = vpop.permute.xlu0 %1732
      %1736 = vset.pattern.permute.xlu0 0
      %1737 = vperm.xlu0 %1736, %v1443
      %v1738 = vpop.permute.xlu0 %1737
      %1741 = vset.pattern.permute.xlu0 0
      %1742 = vperm.xlu0 %1741, %v1444
      %v1743 = vpop.permute.xlu0 %1742
      %1746 = vset.pattern.permute.xlu0 0
      %1747 = vperm.xlu0 %1746, %v1445
      %v1748 = vpop.permute.xlu0 %1747
      %1751 = vset.pattern.permute.xlu0 0
      %1752 = vperm.xlu0 %1751, %v1446
      %v1753 = vpop.permute.xlu0 %1752
      %1756 = vset.pattern.permute.xlu0 0
      %1757 = vperm.xlu0 %1756, %v1447
      %v1758 = vpop.permute.xlu0 %1757
      %1761 = vset.pattern.permute.xlu0 0
      %1762 = vperm.xlu0 %1761, %v1448
      %v1763 = vpop.permute.xlu0 %1762
      %1766 = vset.pattern.permute.xlu0 0
      %1767 = vperm.xlu0 %1766, %v1449
      %v1768 = vpop.permute.xlu0 %1767
      %1771 = vset.pattern.permute.xlu0 0
      %1772 = vperm.xlu0 %1771, %v1450
      %v1773 = vpop.permute.xlu0 %1772
      %1776 = vset.pattern.permute.xlu0 0
      %1777 = vperm.xlu0 %1776, %v1451
      %v1778 = vpop.permute.xlu0 %1777
      %1781 = vset.pattern.permute.xlu0 0
      %1782 = vperm.xlu0 %1781, %v1452
      %v1783 = vpop.permute.xlu0 %1782
      %1786 = vset.pattern.permute.xlu0 0
      %1787 = vperm.xlu0 %1786, %v1453
      %v1788 = vpop.permute.xlu0 %1787
      %1791 = vset.pattern.permute.xlu0 0
      %1792 = vperm.xlu0 %1791, %v1454
      %v1793 = vpop.permute.xlu0 %1792
      %1796 = vset.pattern.permute.xlu0 0
      %1797 = vperm.xlu0 %1796, %v1455
      %v1798 = vpop.permute.xlu0 %1797
      %1801 = vset.pattern.permute.xlu0 0
      %1802 = vperm.xlu0 %1801, %v1456
      %v1803 = vpop.permute.xlu0 %1802
      %1806 = vset.pattern.permute.xlu0 0
      %1807 = vperm.xlu0 %1806, %v1457
      %v1808 = vpop.permute.xlu0 %1807
      %1811 = vset.pattern.permute.xlu0 0
      %1812 = vperm.xlu0 %1811, %v1458
      %v1813 = vpop.permute.xlu0 %1812
      %1816 = vset.pattern.permute.xlu0 0
      %1817 = vperm.xlu0 %1816, %v1459
      %v1818 = vpop.permute.xlu0 %1817
      %1821 = vset.pattern.permute.xlu0 0
      %1822 = vperm.xlu0 %1821, %v1460
      %v1823 = vpop.permute.xlu0 %1822
      %1826 = vset.pattern.permute.xlu0 0
      %1827 = vperm.xlu0 %1826, %v1461
      %v1828 = vpop.permute.xlu0 %1827
      %1831 = vset.pattern.permute.xlu0 0
      %1832 = vperm.xlu0 %1831, %v1462
      %v1833 = vpop.permute.xlu0 %1832
      %1836 = vset.pattern.permute.xlu0 0
      %1837 = vperm.xlu0 %1836, %v1463
      %v1838 = vpop.permute.xlu0 %1837
      %1841 = vset.pattern.permute.xlu0 0
      %1842 = vperm.xlu0 %1841, %v1464
      %v1843 = vpop.permute.xlu0 %1842
      %1846 = vset.pattern.permute.xlu0 0
      %1847 = vperm.xlu0 %1846, %v1465
      %v1848 = vpop.permute.xlu0 %1847
      %1851 = vset.pattern.permute.xlu0 0
      %1852 = vperm.xlu0 %1851, %v1466
      %v1853 = vpop.permute.xlu0 %1852
      %1856 = vset.pattern.permute.xlu0 0
      %1857 = vperm.xlu0 %1856, %v1467
      %v1858 = vpop.permute.xlu0 %1857
      %1861 = vset.pattern.permute.xlu0 0
      %1862 = vperm.xlu0 %1861, %v1468
      %v1863 = vpop.permute.xlu0 %1862
      %1866 = vset.pattern.permute.xlu0 0
      %1867 = vperm.xlu0 %1866, %v1469
      %v1868 = vpop.permute.xlu0 %1867
      %1871 = vset.pattern.permute.xlu0 0
      %1872 = vperm.xlu0 %1871, %v1470
      %v1873 = vpop.permute.xlu0 %1872
      %1876 = vset.pattern.permute.xlu0 0
      %1877 = vperm.xlu0 %1876, %v1471
      %v1878 = vpop.permute.xlu0 %1877
      %1881 = vset.pattern.permute.xlu0 0
      %1882 = vperm.xlu0 %1881, %v1472
      %v1883 = vpop.permute.xlu0 %1882
      %1886 = vset.pattern.permute.xlu0 0
      %1887 = vperm.xlu0 %1886, %v1473
      %v1888 = vpop.permute.xlu0 %1887
      %1891 = vset.pattern.permute.xlu0 0
      %1892 = vperm.xlu0 %1891, %v1474
      %v1893 = vpop.permute.xlu0 %1892
      %1896 = vset.pattern.permute.xlu0 0
      %1897 = vperm.xlu0 %1896, %v1475
      %v1898 = vpop.permute.xlu0 %1897
      %1901 = vset.pattern.permute.xlu0 0
      %1902 = vperm.xlu0 %1901, %v1476
      %v1903 = vpop.permute.xlu0 %1902
      %1906 = vset.pattern.permute.xlu0 0
      %1907 = vperm.xlu0 %1906, %v1477
      %v1908 = vpop.permute.xlu0 %1907
      %1911 = vset.pattern.permute.xlu0 0
      %1912 = vperm.xlu0 %1911, %v1478
      %v1913 = vpop.permute.xlu0 %1912
      %1916 = vset.pattern.permute.xlu0 0
      %1917 = vperm.xlu0 %1916, %v1479
      %v1918 = vpop.permute.xlu0 %1917
      %1921 = vset.pattern.permute.xlu0 0
      %1922 = vperm.xlu0 %1921, %v1480
      %v1923 = vpop.permute.xlu0 %1922
      %1926 = vset.pattern.permute.xlu0 0
      %1927 = vperm.xlu0 %1926, %v1481
      %v1928 = vpop.permute.xlu0 %1927
      %1931 = vset.pattern.permute.xlu0 0
      %1932 = vperm.xlu0 %1931, %v1482
      %v1933 = vpop.permute.xlu0 %1932
      %1936 = vset.pattern.permute.xlu0 0
      %1937 = vperm.xlu0 %1936, %v1483
      %v1938 = vpop.permute.xlu0 %1937
      %1941 = vset.pattern.permute.xlu0 0
      %1942 = vperm.xlu0 %1941, %v1484
      %v1943 = vpop.permute.xlu0 %1942
      %1946 = vset.pattern.permute.xlu0 0
      %1947 = vperm.xlu0 %1946, %v1485
      %v1948 = vpop.permute.xlu0 %1947
      %1951 = vset.pattern.permute.xlu0 0
      %1952 = vperm.xlu0 %1951, %v1486
      %v1953 = vpop.permute.xlu0 %1952
      %1956 = vset.pattern.permute.xlu0 0
      %1957 = vperm.xlu0 %1956, %v1487
      %v1958 = vpop.permute.xlu0 %1957
      %1961 = vset.pattern.permute.xlu0 0
      %1962 = vperm.xlu0 %1961, %v1488
      %v1963 = vpop.permute.xlu0 %1962
      %1966 = vset.pattern.permute.xlu0 0
      %1967 = vperm.xlu0 %1966, %v1489
      %v1968 = vpop.permute.xlu0 %1967
      %1971 = vset.pattern.permute.xlu0 0
      %1972 = vperm.xlu0 %1971, %v1490
      %v1973 = vpop.permute.xlu0 %1972
      %1976 = vset.pattern.permute.xlu0 0
      %1977 = vperm.xlu0 %1976, %v1491
      %v1978 = vpop.permute.xlu0 %1977
      %1981 = vset.pattern.permute.xlu0 0
      %1982 = vperm.xlu0 %1981, %v1492
      %v1983 = vpop.permute.xlu0 %1982
      %1986 = vset.pattern.permute.xlu0 0
      %1987 = vperm.xlu0 %1986, %v1493
      %v1988 = vpop.permute.xlu0 %1987
      %1991 = vset.pattern.permute.xlu0 0
      %1992 = vperm.xlu0 %1991, %v1494
      %v1993 = vpop.permute.xlu0 %1992
      %1996 = vset.pattern.permute.xlu0 0
      %1997 = vperm.xlu0 %1996, %v1495
      %v1998 = vpop.permute.xlu0 %1997
      %2001 = vset.pattern.permute.xlu0 0
      %2002 = vperm.xlu0 %2001, %v1496
      %v2003 = vpop.permute.xlu0 %2002
      %2006 = vset.pattern.permute.xlu0 0
      %2007 = vperm.xlu0 %2006, %v1497
      %v2008 = vpop.permute.xlu0 %2007
      %2011 = vset.pattern.permute.xlu0 0
      %2012 = vperm.xlu0 %2011, %v1498
      %v2013 = vpop.permute.xlu0 %2012
      %2016 = vset.pattern.permute.xlu0 0
      %2017 = vperm.xlu0 %2016, %v1499
      %v2018 = vpop.permute.xlu0 %2017
      %2021 = vset.pattern.permute.xlu0 0
      %2022 = vperm.xlu0 %2021, %v1500
      %v2023 = vpop.permute.xlu0 %2022
      %2026 = vset.pattern.permute.xlu0 0
      %2027 = vperm.xlu0 %2026, %v1501
      %v2028 = vpop.permute.xlu0 %2027
      %2031 = vset.pattern.permute.xlu0 0
      %2032 = vperm.xlu0 %2031, %v1502
      %v2033 = vpop.permute.xlu0 %2032
      %2036 = vset.pattern.permute.xlu0 0
      %2037 = vperm.xlu0 %2036, %v1503
      %v2038 = vpop.permute.xlu0 %2037
      %2041 = vset.pattern.permute.xlu0 0
      %2042 = vperm.xlu0 %2041, %v1504
      %v2043 = vpop.permute.xlu0 %2042
      %2046 = vset.pattern.permute.xlu0 0
      %2047 = vperm.xlu0 %2046, %v1505
      %v2048 = vpop.permute.xlu0 %2047
      %2051 = vset.pattern.permute.xlu0 0
      %2052 = vperm.xlu0 %2051, %v1506
      %v2053 = vpop.permute.xlu0 %2052
      %2056 = vset.pattern.permute.xlu0 0
      %2057 = vperm.xlu0 %2056, %v1507
      %v2058 = vpop.permute.xlu0 %2057
      %2061 = vset.pattern.permute.xlu0 0
      %2062 = vperm.xlu0 %2061, %v1508
      %v2063 = vpop.permute.xlu0 %2062
      %2066 = vset.pattern.permute.xlu0 0
      %2067 = vperm.xlu0 %2066, %v1509
      %v2068 = vpop.permute.xlu0 %2067
      %2071 = vset.pattern.permute.xlu0 0
      %2072 = vperm.xlu0 %2071, %v1510
      %v2073 = vpop.permute.xlu0 %2072
      %2076 = vset.pattern.permute.xlu0 0
      %2077 = vperm.xlu0 %2076, %v1511
      %v2078 = vpop.permute.xlu0 %2077
      %2081 = vset.pattern.permute.xlu0 0
      %2082 = vperm.xlu0 %2081, %v1512
      %v2083 = vpop.permute.xlu0 %2082
      %2086 = vset.pattern.permute.xlu0 0
      %2087 = vperm.xlu0 %2086, %v1513
      %v2088 = vpop.permute.xlu0 %2087
      %2091 = vset.pattern.permute.xlu0 0
      %2092 = vperm.xlu0 %2091, %v1514
      %v2093 = vpop.permute.xlu0 %2092
      %2096 = vset.pattern.permute.xlu0 0
      %2097 = vperm.xlu0 %2096, %v1515
      %v2098 = vpop.permute.xlu0 %2097
      %2101 = vset.pattern.permute.xlu0 0
      %2102 = vperm.xlu0 %2101, %v1516
      %v2103 = vpop.permute.xlu0 %2102
      %2106 = vset.pattern.permute.xlu0 0
      %2107 = vperm.xlu0 %2106, %v1517
      %v2108 = vpop.permute.xlu0 %2107
      %2111 = vset.pattern.permute.xlu0 0
      %2112 = vperm.xlu0 %2111, %v1518
      %v2113 = vpop.permute.xlu0 %2112
      %2116 = vset.pattern.permute.xlu0 0
      %2117 = vperm.xlu0 %2116, %v1519
      %v2118 = vpop.permute.xlu0 %2117
      %2121 = vset.pattern.permute.xlu0 0
      %2122 = vperm.xlu0 %2121, %v1520
      %v2123 = vpop.permute.xlu0 %2122
      %2126 = vset.pattern.permute.xlu0 0
      %2127 = vperm.xlu0 %2126, %v1521
      %v2128 = vpop.permute.xlu0 %2127
      %2131 = vset.pattern.permute.xlu0 0
      %2132 = vperm.xlu0 %2131, %v1522
      %v2133 = vpop.permute.xlu0 %2132
      %2136 = vset.pattern.permute.xlu0 0
      %2137 = vperm.xlu0 %2136, %v1523
      %v2138 = vpop.permute.xlu0 %2137
      %2141 = vset.pattern.permute.xlu0 0
      %2142 = vperm.xlu0 %2141, %v1524
      %v2143 = vpop.permute.xlu0 %2142
      %2146 = vset.pattern.permute.xlu0 0
      %2147 = vperm.xlu0 %2146, %v1525
      %v2148 = vpop.permute.xlu0 %2147
      %2151 = vset.pattern.permute.xlu0 0
      %2152 = vperm.xlu0 %2151, %v1526
      %v2153 = vpop.permute.xlu0 %2152
      %2156 = vset.pattern.permute.xlu0 0
      %2157 = vperm.xlu0 %2156, %v1527
      %v2158 = vpop.permute.xlu0 %2157
      %2161 = vset.pattern.permute.xlu0 0
      %2162 = vperm.xlu0 %2161, %v1528
      %v2163 = vpop.permute.xlu0 %2162
      %2166 = vset.pattern.permute.xlu0 0
      %2167 = vperm.xlu0 %2166, %v1529
      %v2168 = vpop.permute.xlu0 %2167
      %v2298 = vunpack.c.l.b16 %v1274
      %v2299 = vunpack.c.h.b16 %v1274
      %v2300 = vunpack.c.l.b16 %v1275
      %v2301 = vunpack.c.h.b16 %v1275
      %v2302 = vunpack.c.l.b16 %v1276
      %v2303 = vunpack.c.h.b16 %v1276
      %v2304 = vunpack.c.l.b16 %v1277
      %v2305 = vunpack.c.h.b16 %v1277
      %v2306 = vunpack.c.l.b16 %v1278
      %v2307 = vunpack.c.h.b16 %v1278
      %v2308 = vunpack.c.l.b16 %v1279
      %v2309 = vunpack.c.h.b16 %v1279
      %v2310 = vunpack.c.l.b16 %v1280
      %v2311 = vunpack.c.h.b16 %v1280
      %v2312 = vunpack.c.l.b16 %v1281
      %v2313 = vunpack.c.h.b16 %v1281
      %v2314 = vunpack.c.l.b16 %v1282
      %v2315 = vunpack.c.h.b16 %v1282
      %v2316 = vunpack.c.l.b16 %v1283
      %v2317 = vunpack.c.h.b16 %v1283
      %v2318 = vunpack.c.l.b16 %v1284
      %v2319 = vunpack.c.h.b16 %v1284
      %v2320 = vunpack.c.l.b16 %v1285
      %v2321 = vunpack.c.h.b16 %v1285
      %v2322 = vunpack.c.l.b16 %v1286
      %v2323 = vunpack.c.h.b16 %v1286
      %v2324 = vunpack.c.l.b16 %v1287
      %v2325 = vunpack.c.h.b16 %v1287
      %v2326 = vunpack.c.l.b16 %v1288
      %v2327 = vunpack.c.h.b16 %v1288
      %v2328 = vunpack.c.l.b16 %v1289
      %v2329 = vunpack.c.h.b16 %v1289
      %v2330 = vunpack.c.l.b16 %v1290
      %v2331 = vunpack.c.h.b16 %v1290
      %v2332 = vunpack.c.l.b16 %v1291
      %v2333 = vunpack.c.h.b16 %v1291
      %v2334 = vunpack.c.l.b16 %v1292
      %v2335 = vunpack.c.h.b16 %v1292
      %v2336 = vunpack.c.l.b16 %v1293
      %v2337 = vunpack.c.h.b16 %v1293
      %v2338 = vunpack.c.l.b16 %v1294
      %v2339 = vunpack.c.h.b16 %v1294
      %v2340 = vunpack.c.l.b16 %v1295
      %v2341 = vunpack.c.h.b16 %v1295
      %v2342 = vunpack.c.l.b16 %v1296
      %v2343 = vunpack.c.h.b16 %v1296
      %v2344 = vunpack.c.l.b16 %v1297
      %v2345 = vunpack.c.h.b16 %v1297
      %v2346 = vunpack.c.l.b16 %v1298
      %v2347 = vunpack.c.h.b16 %v1298
      %v2348 = vunpack.c.l.b16 %v1299
      %v2349 = vunpack.c.h.b16 %v1299
      %v2350 = vunpack.c.l.b16 %v1300
      %v2351 = vunpack.c.h.b16 %v1300
      %v2352 = vunpack.c.l.b16 %v1301
      %v2353 = vunpack.c.h.b16 %v1301
      %v2354 = vunpack.c.l.b16 %v1302
      %v2355 = vunpack.c.h.b16 %v1302
      %v2356 = vunpack.c.l.b16 %v1303
      %v2357 = vunpack.c.h.b16 %v1303
      %v2358 = vunpack.c.l.b16 %v1304
      %v2359 = vunpack.c.h.b16 %v1304
      %v2360 = vunpack.c.l.b16 %v1305
      %v2361 = vunpack.c.h.b16 %v1305
      %v2362 = vunpack.c.l.b16 %v1306
      %v2363 = vunpack.c.h.b16 %v1306
      %v2364 = vunpack.c.l.b16 %v1307
      %v2365 = vunpack.c.h.b16 %v1307
      %v2366 = vunpack.c.l.b16 %v1308
      %v2367 = vunpack.c.h.b16 %v1308
      %v2368 = vunpack.c.l.b16 %v1309
      %v2369 = vunpack.c.h.b16 %v1309
      %v2370 = vunpack.c.l.b16 %v1310
      %v2371 = vunpack.c.h.b16 %v1310
      %v2372 = vunpack.c.l.b16 %v1311
      %v2373 = vunpack.c.h.b16 %v1311
      %v2374 = vunpack.c.l.b16 %v1312
      %v2375 = vunpack.c.h.b16 %v1312
      %v2376 = vunpack.c.l.b16 %v1313
      %v2377 = vunpack.c.h.b16 %v1313
      %v2378 = vunpack.c.l.b16 %v1314
      %v2379 = vunpack.c.h.b16 %v1314
      %v2380 = vunpack.c.l.b16 %v1315
      %v2381 = vunpack.c.h.b16 %v1315
      %v2382 = vunpack.c.l.b16 %v1316
      %v2383 = vunpack.c.h.b16 %v1316
      %v2384 = vunpack.c.l.b16 %v1317
      %v2385 = vunpack.c.h.b16 %v1317
      %v2386 = vunpack.c.l.b16 %v1318
      %v2387 = vunpack.c.h.b16 %v1318
      %v2388 = vunpack.c.l.b16 %v1319
      %v2389 = vunpack.c.h.b16 %v1319
      %v2390 = vunpack.c.l.b16 %v1320
      %v2391 = vunpack.c.h.b16 %v1320
      %v2392 = vunpack.c.l.b16 %v1321
      %v2393 = vunpack.c.h.b16 %v1321
      %v2394 = vunpack.c.l.b16 %v1322
      %v2395 = vunpack.c.h.b16 %v1322
      %v2396 = vunpack.c.l.b16 %v1323
      %v2397 = vunpack.c.h.b16 %v1323
      %v2398 = vunpack.c.l.b16 %v1324
      %v2399 = vunpack.c.h.b16 %v1324
      %v2400 = vunpack.c.l.b16 %v1325
      %v2401 = vunpack.c.h.b16 %v1325
      %v2402 = vunpack.c.l.b16 %v1326
      %v2403 = vunpack.c.h.b16 %v1326
      %v2404 = vunpack.c.l.b16 %v1327
      %v2405 = vunpack.c.h.b16 %v1327
      %v2406 = vunpack.c.l.b16 %v1328
      %v2407 = vunpack.c.h.b16 %v1328
      %v2408 = vunpack.c.l.b16 %v1329
      %v2409 = vunpack.c.h.b16 %v1329
      %v2410 = vunpack.c.l.b16 %v1330
      %v2411 = vunpack.c.h.b16 %v1330
      %v2412 = vunpack.c.l.b16 %v1331
      %v2413 = vunpack.c.h.b16 %v1331
      %v2414 = vunpack.c.l.b16 %v1332
      %v2415 = vunpack.c.h.b16 %v1332
      %v2416 = vunpack.c.l.b16 %v1333
      %v2417 = vunpack.c.h.b16 %v1333
      %v2418 = vunpack.c.l.b16 %v1334
      %v2419 = vunpack.c.h.b16 %v1334
      %v2420 = vunpack.c.l.b16 %v1335
      %v2421 = vunpack.c.h.b16 %v1335
      %v2422 = vunpack.c.l.b16 %v1336
      %v2423 = vunpack.c.h.b16 %v1336
      %v2424 = vunpack.c.l.b16 %v1337
      %v2425 = vunpack.c.h.b16 %v1337
      %v2426 = vunpack.c.l.b16 %v1338
      %v2427 = vunpack.c.h.b16 %v1338
      %v2428 = vunpack.c.l.b16 %v1339
      %v2429 = vunpack.c.h.b16 %v1339
      %v2430 = vunpack.c.l.b16 %v1340
      %v2431 = vunpack.c.h.b16 %v1340
      %v2432 = vunpack.c.l.b16 %v1341
      %v2433 = vunpack.c.h.b16 %v1341
      %v2434 = vunpack.c.l.b16 %v1342
      %v2435 = vunpack.c.h.b16 %v1342
      %v2436 = vunpack.c.l.b16 %v1343
      %v2437 = vunpack.c.h.b16 %v1343
      %v2438 = vunpack.c.l.b16 %v1344
      %v2439 = vunpack.c.h.b16 %v1344
      %v2440 = vunpack.c.l.b16 %v1345
      %v2441 = vunpack.c.h.b16 %v1345
      %v2442 = vunpack.c.l.b16 %v1346
      %v2443 = vunpack.c.h.b16 %v1346
      %v2444 = vunpack.c.l.b16 %v1347
      %v2445 = vunpack.c.h.b16 %v1347
      %v2446 = vunpack.c.l.b16 %v1348
      %v2447 = vunpack.c.h.b16 %v1348
      %v2448 = vunpack.c.l.b16 %v1349
      %v2449 = vunpack.c.h.b16 %v1349
      %v2450 = vunpack.c.l.b16 %v1350
      %v2451 = vunpack.c.h.b16 %v1350
      %v2452 = vunpack.c.l.b16 %v1351
      %v2453 = vunpack.c.h.b16 %v1351
      %v2454 = vunpack.c.l.b16 %v1352
      %v2455 = vunpack.c.h.b16 %v1352
      %v2456 = vunpack.c.l.b16 %v1353
      %v2457 = vunpack.c.h.b16 %v1353
      %v2458 = vunpack.c.l.b16 %v1354
      %v2459 = vunpack.c.h.b16 %v1354
      %v2460 = vunpack.c.l.b16 %v1355
      %v2461 = vunpack.c.h.b16 %v1355
      %v2462 = vunpack.c.l.b16 %v1356
      %v2463 = vunpack.c.h.b16 %v1356
      %v2464 = vunpack.c.l.b16 %v1357
      %v2465 = vunpack.c.h.b16 %v1357
      %v2466 = vunpack.c.l.b16 %v1358
      %v2467 = vunpack.c.h.b16 %v1358
      %v2468 = vunpack.c.l.b16 %v1359
      %v2469 = vunpack.c.h.b16 %v1359
      %v2470 = vunpack.c.l.b16 %v1360
      %v2471 = vunpack.c.h.b16 %v1360
      %v2472 = vunpack.c.l.b16 %v1361
      %v2473 = vunpack.c.h.b16 %v1361
      %v2474 = vunpack.c.l.b16 %v1362
      %v2475 = vunpack.c.h.b16 %v1362
      %v2476 = vunpack.c.l.b16 %v1363
      %v2477 = vunpack.c.h.b16 %v1363
      %v2478 = vunpack.c.l.b16 %v1364
      %v2479 = vunpack.c.h.b16 %v1364
      %v2480 = vunpack.c.l.b16 %v1365
      %v2481 = vunpack.c.h.b16 %v1365
      %v2482 = vunpack.c.l.b16 %v1366
      %v2483 = vunpack.c.h.b16 %v1366
      %v2484 = vunpack.c.l.b16 %v1367
      %v2485 = vunpack.c.h.b16 %v1367
      %v2486 = vunpack.c.l.b16 %v1368
      %v2487 = vunpack.c.h.b16 %v1368
      %v2488 = vunpack.c.l.b16 %v1369
      %v2489 = vunpack.c.h.b16 %v1369
      %v2490 = vunpack.c.l.b16 %v1370
      %v2491 = vunpack.c.h.b16 %v1370
      %v2492 = vunpack.c.l.b16 %v1371
      %v2493 = vunpack.c.h.b16 %v1371
      %v2494 = vunpack.c.l.b16 %v1372
      %v2495 = vunpack.c.h.b16 %v1372
      %v2496 = vunpack.c.l.b16 %v1373
      %v2497 = vunpack.c.h.b16 %v1373
      %v2498 = vunpack.c.l.b16 %v1374
      %v2499 = vunpack.c.h.b16 %v1374
      %v2500 = vunpack.c.l.b16 %v1375
      %v2501 = vunpack.c.h.b16 %v1375
      %v2502 = vunpack.c.l.b16 %v1376
      %v2503 = vunpack.c.h.b16 %v1376
      %v2504 = vunpack.c.l.b16 %v1377
      %v2505 = vunpack.c.h.b16 %v1377
      %v2506 = vunpack.c.l.b16 %v1378
      %v2507 = vunpack.c.h.b16 %v1378
      %v2508 = vunpack.c.l.b16 %v1379
      %v2509 = vunpack.c.h.b16 %v1379
      %v2510 = vunpack.c.l.b16 %v1380
      %v2511 = vunpack.c.h.b16 %v1380
      %v2512 = vunpack.c.l.b16 %v1381
      %v2513 = vunpack.c.h.b16 %v1381
      %v2514 = vunpack.c.l.b16 %v1382
      %v2515 = vunpack.c.h.b16 %v1382
      %v2516 = vunpack.c.l.b16 %v1383
      %v2517 = vunpack.c.h.b16 %v1383
      %v2518 = vunpack.c.l.b16 %v1384
      %v2519 = vunpack.c.h.b16 %v1384
      %v2520 = vunpack.c.l.b16 %v1385
      %v2521 = vunpack.c.h.b16 %v1385
      %v2522 = vunpack.c.l.b16 %v1386
      %v2523 = vunpack.c.h.b16 %v1386
      %v2524 = vunpack.c.l.b16 %v1387
      %v2525 = vunpack.c.h.b16 %v1387
      %v2526 = vunpack.c.l.b16 %v1388
      %v2527 = vunpack.c.h.b16 %v1388
      %v2528 = vunpack.c.l.b16 %v1389
      %v2529 = vunpack.c.h.b16 %v1389
      %v2530 = vunpack.c.l.b16 %v1390
      %v2531 = vunpack.c.h.b16 %v1390
      %v2532 = vunpack.c.l.b16 %v1391
      %v2533 = vunpack.c.h.b16 %v1391
      %v2534 = vunpack.c.l.b16 %v1392
      %v2535 = vunpack.c.h.b16 %v1392
      %v2536 = vunpack.c.l.b16 %v1393
      %v2537 = vunpack.c.h.b16 %v1393
      %v2538 = vunpack.c.l.b16 %v1394
      %v2539 = vunpack.c.h.b16 %v1394
      %v2540 = vunpack.c.l.b16 %v1395
      %v2541 = vunpack.c.h.b16 %v1395
      %v2542 = vunpack.c.l.b16 %v1396
      %v2543 = vunpack.c.h.b16 %v1396
      %v2544 = vunpack.c.l.b16 %v1397
      %v2545 = vunpack.c.h.b16 %v1397
      %v2546 = vunpack.c.l.b16 %v1398
      %v2547 = vunpack.c.h.b16 %v1398
      %v2548 = vunpack.c.l.b16 %v1399
      %v2549 = vunpack.c.h.b16 %v1399
      %v2550 = vunpack.c.l.b16 %v1400
      %v2551 = vunpack.c.h.b16 %v1400
      %v2552 = vunpack.c.l.b16 %v1401
      %v2553 = vunpack.c.h.b16 %v1401
      %v2554 = vpack.c.b16 %v2300, %v2298
      %v2555 = vpack.c.b16 %v2301, %v2299
      %v2556 = vpack.c.b16 %v2304, %v2302
      %v2557 = vpack.c.b16 %v2305, %v2303
      %v2558 = vpack.c.b16 %v2308, %v2306
      %v2559 = vpack.c.b16 %v2309, %v2307
      %v2560 = vpack.c.b16 %v2312, %v2310
      %v2561 = vpack.c.b16 %v2313, %v2311
      %v2562 = vpack.c.b16 %v2316, %v2314
      %v2563 = vpack.c.b16 %v2317, %v2315
      %v2564 = vpack.c.b16 %v2320, %v2318
      %v2565 = vpack.c.b16 %v2321, %v2319
      %v2566 = vpack.c.b16 %v2324, %v2322
      %v2567 = vpack.c.b16 %v2325, %v2323
      %v2568 = vpack.c.b16 %v2328, %v2326
      %v2569 = vpack.c.b16 %v2329, %v2327
      %v2570 = vpack.c.b16 %v2332, %v2330
      %v2571 = vpack.c.b16 %v2333, %v2331
      %v2572 = vpack.c.b16 %v2336, %v2334
      %v2573 = vpack.c.b16 %v2337, %v2335
      %v2574 = vpack.c.b16 %v2340, %v2338
      %v2575 = vpack.c.b16 %v2341, %v2339
      %v2576 = vpack.c.b16 %v2344, %v2342
      %v2577 = vpack.c.b16 %v2345, %v2343
      %v2578 = vpack.c.b16 %v2348, %v2346
      %v2579 = vpack.c.b16 %v2349, %v2347
      %v2580 = vpack.c.b16 %v2352, %v2350
      %v2581 = vpack.c.b16 %v2353, %v2351
      %v2582 = vpack.c.b16 %v2356, %v2354
      %v2583 = vpack.c.b16 %v2357, %v2355
      %v2584 = vpack.c.b16 %v2360, %v2358
      %v2585 = vpack.c.b16 %v2361, %v2359
      %v2586 = vpack.c.b16 %v2364, %v2362
      %v2587 = vpack.c.b16 %v2365, %v2363
      %v2588 = vpack.c.b16 %v2368, %v2366
      %v2589 = vpack.c.b16 %v2369, %v2367
      %v2590 = vpack.c.b16 %v2372, %v2370
      %v2591 = vpack.c.b16 %v2373, %v2371
      %v2592 = vpack.c.b16 %v2376, %v2374
      %v2593 = vpack.c.b16 %v2377, %v2375
      %v2594 = vpack.c.b16 %v2380, %v2378
      %v2595 = vpack.c.b16 %v2381, %v2379
      %v2596 = vpack.c.b16 %v2384, %v2382
      %v2597 = vpack.c.b16 %v2385, %v2383
      %v2598 = vpack.c.b16 %v2388, %v2386
      %v2599 = vpack.c.b16 %v2389, %v2387
      %v2600 = vpack.c.b16 %v2392, %v2390
      %v2601 = vpack.c.b16 %v2393, %v2391
      %v2602 = vpack.c.b16 %v2396, %v2394
      %v2603 = vpack.c.b16 %v2397, %v2395
      %v2604 = vpack.c.b16 %v2400, %v2398
      %v2605 = vpack.c.b16 %v2401, %v2399
      %v2606 = vpack.c.b16 %v2404, %v2402
      %v2607 = vpack.c.b16 %v2405, %v2403
      %v2608 = vpack.c.b16 %v2408, %v2406
      %v2609 = vpack.c.b16 %v2409, %v2407
      %v2610 = vpack.c.b16 %v2412, %v2410
      %v2611 = vpack.c.b16 %v2413, %v2411
      %v2612 = vpack.c.b16 %v2416, %v2414
      %v2613 = vpack.c.b16 %v2417, %v2415
      %v2614 = vpack.c.b16 %v2420, %v2418
      %v2615 = vpack.c.b16 %v2421, %v2419
      %v2616 = vpack.c.b16 %v2424, %v2422
      %v2617 = vpack.c.b16 %v2425, %v2423
      %v2618 = vpack.c.b16 %v2428, %v2426
      %v2619 = vpack.c.b16 %v2429, %v2427
      %v2620 = vpack.c.b16 %v2432, %v2430
      %v2621 = vpack.c.b16 %v2433, %v2431
      %v2622 = vpack.c.b16 %v2436, %v2434
      %v2623 = vpack.c.b16 %v2437, %v2435
      %v2624 = vpack.c.b16 %v2440, %v2438
      %v2625 = vpack.c.b16 %v2441, %v2439
      %v2626 = vpack.c.b16 %v2444, %v2442
      %v2627 = vpack.c.b16 %v2445, %v2443
      %v2628 = vpack.c.b16 %v2448, %v2446
      %v2629 = vpack.c.b16 %v2449, %v2447
      %v2630 = vpack.c.b16 %v2452, %v2450
      %v2631 = vpack.c.b16 %v2453, %v2451
      %v2632 = vpack.c.b16 %v2456, %v2454
      %v2633 = vpack.c.b16 %v2457, %v2455
      %v2634 = vpack.c.b16 %v2460, %v2458
      %v2635 = vpack.c.b16 %v2461, %v2459
      %v2636 = vpack.c.b16 %v2464, %v2462
      %v2637 = vpack.c.b16 %v2465, %v2463
      %v2638 = vpack.c.b16 %v2468, %v2466
      %v2639 = vpack.c.b16 %v2469, %v2467
      %v2640 = vpack.c.b16 %v2472, %v2470
      %v2641 = vpack.c.b16 %v2473, %v2471
      %v2642 = vpack.c.b16 %v2476, %v2474
      %v2643 = vpack.c.b16 %v2477, %v2475
      %v2644 = vpack.c.b16 %v2480, %v2478
      %v2645 = vpack.c.b16 %v2481, %v2479
      %v2646 = vpack.c.b16 %v2484, %v2482
      %v2647 = vpack.c.b16 %v2485, %v2483
      %v2648 = vpack.c.b16 %v2488, %v2486
      %v2649 = vpack.c.b16 %v2489, %v2487
      %v2650 = vpack.c.b16 %v2492, %v2490
      %v2651 = vpack.c.b16 %v2493, %v2491
      %v2652 = vpack.c.b16 %v2496, %v2494
      %v2653 = vpack.c.b16 %v2497, %v2495
      %v2654 = vpack.c.b16 %v2500, %v2498
      %v2655 = vpack.c.b16 %v2501, %v2499
      %v2656 = vpack.c.b16 %v2504, %v2502
      %v2657 = vpack.c.b16 %v2505, %v2503
      %v2658 = vpack.c.b16 %v2508, %v2506
      %v2659 = vpack.c.b16 %v2509, %v2507
      %v2660 = vpack.c.b16 %v2512, %v2510
      %v2661 = vpack.c.b16 %v2513, %v2511
      %v2662 = vpack.c.b16 %v2516, %v2514
      %v2663 = vpack.c.b16 %v2517, %v2515
      %v2664 = vpack.c.b16 %v2520, %v2518
      %v2665 = vpack.c.b16 %v2521, %v2519
      %v2666 = vpack.c.b16 %v2524, %v2522
      %v2667 = vpack.c.b16 %v2525, %v2523
      %v2668 = vpack.c.b16 %v2528, %v2526
      %v2669 = vpack.c.b16 %v2529, %v2527
      %v2670 = vpack.c.b16 %v2532, %v2530
      %v2671 = vpack.c.b16 %v2533, %v2531
      %v2672 = vpack.c.b16 %v2536, %v2534
      %v2673 = vpack.c.b16 %v2537, %v2535
      %v2674 = vpack.c.b16 %v2540, %v2538
      %v2675 = vpack.c.b16 %v2541, %v2539
      %v2676 = vpack.c.b16 %v2544, %v2542
      %v2677 = vpack.c.b16 %v2545, %v2543
      %v2678 = vpack.c.b16 %v2548, %v2546
      %v2679 = vpack.c.b16 %v2549, %v2547
      %v2680 = vpack.c.b16 %v2552, %v2550
      %v2681 = vpack.c.b16 %v2553, %v2551
      %2810 = vmatprep.subr.bf16.mxu0 0
      %2811 = vmatpush1.bf16.msra.mxu0 %v1258
      %2812 = vmatprep.subr.bf16.mxu0 0
      %2813 = vmatpush1.bf16.msra.mxu0 %v1259
      %2814 = vmatprep.subr.bf16.mxu0 0
      %2815 = vmatpush1.bf16.msra.mxu0 %v1260
      %2816 = vmatprep.subr.bf16.mxu0 0
      %2817 = vmatpush1.bf16.msra.mxu0 %v1261
      %2818 = vmatprep.subr.bf16.mxu0 0
      %2819 = vmatpush1.bf16.msra.mxu0 %v1262
      %2820 = vmatprep.subr.bf16.mxu0 0
      %2821 = vmatpush1.bf16.msra.mxu0 %v1263
      %2822 = vmatprep.subr.bf16.mxu0 0
      %2823 = vmatpush1.bf16.msra.mxu0 %v1264
      %2824 = vmatprep.subr.bf16.mxu0 0
      %2825 = vmatpush1.bf16.msra.mxu0 %v1265
      %2826 = vmatprep.subr.bf16.mxu0 0
      %2827 = vmatpush1.bf16.msra.mxu0 %v1266
      %2828 = vmatprep.subr.bf16.mxu0 0
      %2829 = vmatpush1.bf16.msra.mxu0 %v1267
      %2830 = vmatprep.subr.bf16.mxu0 0
      %2831 = vmatpush1.bf16.msra.mxu0 %v1268
      %2832 = vmatprep.subr.bf16.mxu0 0
      %2833 = vmatpush1.bf16.msra.mxu0 %v1269
      %2834 = vmatprep.subr.bf16.mxu0 0
      %2835 = vmatpush1.bf16.msra.mxu0 %v1270
      %2836 = vmatprep.subr.bf16.mxu0 0
      %2837 = vmatpush1.bf16.msra.mxu0 %v1271
      %2838 = vmatprep.subr.bf16.mxu0 0
      %2839 = vmatpush1.bf16.msra.mxu0 %v1272
      %2840 = vmatprep.subr.bf16.mxu0 0
      %2841 = vmatpush1.bf16.msra.mxu0 %v1273
      %2842 = vmatprep.mubr.bf16.mxu0 %v2555
      %2843 = vmatmul.mubr.bf16.gmra.mrb[0].mxu0 %v2554
      %v2844 = vpop.f32.mrb[0].mxu0
      %v2845 = vadd.f32 %v1533, %v2844
      %v2846 = vpop.f32.mrb[0].mxu0
      %v2847 = vpop.f32.mrb[0].mxu0
      %v2848 = vadd.f32 %v1538, %v2847
      %v2849 = vpop.f32.mrb[0].mxu0
      %2850 = vmatprep.mubr.bf16.mxu0 %v2557
      %2851 = vmatmul.mubr.bf16.gmra.mrb[0].mxu0 %v2556
      %v2852 = vpop.f32.mrb[0].mxu0
      %v2853 = vadd.f32 %v1543, %v2852
      %v2854 = vpop.f32.mrb[0].mxu0
      %v2855 = vpop.f32.mrb[0].mxu0
      %v2856 = vadd.f32 %v1548, %v2855
      %v2857 = vpop.f32.mrb[0].mxu0
      %2858 = vmatprep.mubr.bf16.mxu0 %v2559
      %2859 = vmatmul.mubr.bf16.gmra.mrb[0].mxu0 %v2558
      %v2860 = vpop.f32.mrb[0].mxu0
      %v2861 = vadd.f32 %v1553, %v2860
      %v2862 = vpop.f32.mrb[0].mxu0
      %v2863 = vpop.f32.mrb[0].mxu0
      %v2864 = vadd.f32 %v1558, %v2863
      %v2865 = vpop.f32.mrb[0].mxu0
      %2866 = vmatprep.mubr.bf16.mxu0 %v2561
      %2867 = vmatmul.mubr.bf16.gmra.mrb[0].mxu0 %v2560
      %v2868 = vpop.f32.mrb[0].mxu0
      %v2869 = vadd.f32 %v1563, %v2868
      %v2870 = vpop.f32.mrb[0].mxu0
      %v2871 = vpop.f32.mrb[0].mxu0
      %v2872 = vadd.f32 %v1568, %v2871
      %v2873 = vpop.f32.mrb[0].mxu0
      %2874 = vmatprep.mubr.bf16.mxu0 %v2563
      %2875 = vmatmul.mubr.bf16.gmra.mrb[0].mxu0 %v2562
      %v2876 = vpop.f32.mrb[0].mxu0
      %v2877 = vadd.f32 %v1573, %v2876
      %v2878 = vpop.f32.mrb[0].mxu0
      %v2879 = vpop.f32.mrb[0].mxu0
      %v2880 = vadd.f32 %v1578, %v2879
      %v2881 = vpop.f32.mrb[0].mxu0
      %2882 = vmatprep.mubr.bf16.mxu0 %v2565
      %2883 = vmatmul.mubr.bf16.gmra.mrb[0].mxu0 %v2564
      %v2884 = vpop.f32.mrb[0].mxu0
      %v2885 = vadd.f32 %v1583, %v2884
      %v2886 = vpop.f32.mrb[0].mxu0
      %v2887 = vpop.f32.mrb[0].mxu0
      %v2888 = vadd.f32 %v1588, %v2887
      %v2889 = vpop.f32.mrb[0].mxu0
      %2890 = vmatprep.mubr.bf16.mxu0 %v2567
      %2891 = vmatmul.mubr.bf16.gmra.mrb[0].mxu0 %v2566
      %v2892 = vpop.f32.mrb[0].mxu0
      %v2893 = vadd.f32 %v1593, %v2892
      %v2894 = vpop.f32.mrb[0].mxu0
      %v2895 = vpop.f32.mrb[0].mxu0
      %v2896 = vadd.f32 %v1598, %v2895
      %v2897 = vpop.f32.mrb[0].mxu0
      %2898 = vmatprep.mubr.bf16.mxu0 %v2569
      %2899 = vmatmul.mubr.bf16.gmra.mrb[0].mxu0 %v2568
      %v2900 = vpop.f32.mrb[0].mxu0
      %v2901 = vadd.f32 %v1603, %v2900
      %v2902 = vpop.f32.mrb[0].mxu0
      %v2903 = vpop.f32.mrb[0].mxu0
      %v2904 = vadd.f32 %v1608, %v2903
      %v2905 = vpop.f32.mrb[0].mxu0
      %2906 = vmatprep.mubr.bf16.mxu0 %v2571
      %2907 = vmatmul.mubr.bf16.gmra.mrb[0].mxu0 %v2570
      %v2908 = vpop.f32.mrb[0].mxu0
      %v2909 = vadd.f32 %v1613, %v2908
      %v2910 = vpop.f32.mrb[0].mxu0
      %v2911 = vpop.f32.mrb[0].mxu0
      %v2912 = vadd.f32 %v1618, %v2911
      %v2913 = vpop.f32.mrb[0].mxu0
      %2914 = vmatprep.mubr.bf16.mxu0 %v2573
      %2915 = vmatmul.mubr.bf16.gmra.mrb[0].mxu0 %v2572
      %v2916 = vpop.f32.mrb[0].mxu0
      %v2917 = vadd.f32 %v1623, %v2916
      %v2918 = vpop.f32.mrb[0].mxu0
      %v2919 = vpop.f32.mrb[0].mxu0
      %v2920 = vadd.f32 %v1628, %v2919
      %v2921 = vpop.f32.mrb[0].mxu0
      %2922 = vmatprep.mubr.bf16.mxu0 %v2575
      %2923 = vmatmul.mubr.bf16.gmra.mrb[0].mxu0 %v2574
      %v2924 = vpop.f32.mrb[0].mxu0
      %v2925 = vadd.f32 %v1633, %v2924
      %v2926 = vpop.f32.mrb[0].mxu0
      %v2927 = vpop.f32.mrb[0].mxu0
      %v2928 = vadd.f32 %v1638, %v2927
      %v2929 = vpop.f32.mrb[0].mxu0
      %2930 = vmatprep.mubr.bf16.mxu0 %v2577
      %2931 = vmatmul.mubr.bf16.gmra.mrb[0].mxu0 %v2576
      %v2932 = vpop.f32.mrb[0].mxu0
      %v2933 = vadd.f32 %v1643, %v2932
      %v2934 = vpop.f32.mrb[0].mxu0
      %v2935 = vpop.f32.mrb[0].mxu0
      %v2936 = vadd.f32 %v1648, %v2935
      %v2937 = vpop.f32.mrb[0].mxu0
      %2938 = vmatprep.mubr.bf16.mxu0 %v2579
      %2939 = vmatmul.mubr.bf16.gmra.mrb[0].mxu0 %v2578
      %v2940 = vpop.f32.mrb[0].mxu0
      %v2941 = vadd.f32 %v1653, %v2940
      %v2942 = vpop.f32.mrb[0].mxu0
      %v2943 = vpop.f32.mrb[0].mxu0
      %v2944 = vadd.f32 %v1658, %v2943
      %v2945 = vpop.f32.mrb[0].mxu0
      %2946 = vmatprep.mubr.bf16.mxu0 %v2581
      %2947 = vmatmul.mubr.bf16.gmra.mrb[0].mxu0 %v2580
      %v2948 = vpop.f32.mrb[0].mxu0
      %v2949 = vadd.f32 %v1663, %v2948
      %v2950 = vpop.f32.mrb[0].mxu0
      %v2951 = vpop.f32.mrb[0].mxu0
      %v2952 = vadd.f32 %v1668, %v2951
      %v2953 = vpop.f32.mrb[0].mxu0
      %2954 = vmatprep.mubr.bf16.mxu0 %v2583
      %2955 = vmatmul.mubr.bf16.gmra.mrb[0].mxu0 %v2582
      %v2956 = vpop.f32.mrb[0].mxu0
      %v2957 = vadd.f32 %v1673, %v2956
      %v2958 = vpop.f32.mrb[0].mxu0
      %v2959 = vpop.f32.mrb[0].mxu0
      %v2960 = vadd.f32 %v1678, %v2959
      %v2961 = vpop.f32.mrb[0].mxu0
      %2962 = vmatprep.mubr.bf16.mxu0 %v2585
      %2963 = vmatmul.mubr.bf16.gmra.mrb[0].mxu0 %v2584
      %v2964 = vpop.f32.mrb[0].mxu0
      %v2965 = vadd.f32 %v1683, %v2964
      %v2966 = vpop.f32.mrb[0].mxu0
      %v2967 = vpop.f32.mrb[0].mxu0
      %v2968 = vadd.f32 %v1688, %v2967
      %v2969 = vpop.f32.mrb[0].mxu0
      %2970 = vmatprep.mubr.bf16.mxu0 %v2587
      %2971 = vmatmul.mubr.bf16.gmra.mrb[0].mxu0 %v2586
      %v2972 = vpop.f32.mrb[0].mxu0
      %v2973 = vadd.f32 %v1693, %v2972
      %v2974 = vpop.f32.mrb[0].mxu0
      %v2975 = vpop.f32.mrb[0].mxu0
      %v2976 = vadd.f32 %v1698, %v2975
      %v2977 = vpop.f32.mrb[0].mxu0
      %2978 = vmatprep.mubr.bf16.mxu0 %v2589
      %2979 = vmatmul.mubr.bf16.gmra.mrb[0].mxu0 %v2588
      %v2980 = vpop.f32.mrb[0].mxu0
      %v2981 = vadd.f32 %v1703, %v2980
      %v2982 = vpop.f32.mrb[0].mxu0
      %v2983 = vpop.f32.mrb[0].mxu0
      %v2984 = vadd.f32 %v1708, %v2983
      %v2985 = vpop.f32.mrb[0].mxu0
      %2986 = vmatprep.mubr.bf16.mxu0 %v2591
      %2987 = vmatmul.mubr.bf16.gmra.mrb[0].mxu0 %v2590
      %v2988 = vpop.f32.mrb[0].mxu0
      %v2989 = vadd.f32 %v1713, %v2988
      %v2990 = vpop.f32.mrb[0].mxu0
      %v2991 = vpop.f32.mrb[0].mxu0
      %v2992 = vadd.f32 %v1718, %v2991
      %v2993 = vpop.f32.mrb[0].mxu0
      %2994 = vmatprep.mubr.bf16.mxu0 %v2593
      %2995 = vmatmul.mubr.bf16.gmra.mrb[0].mxu0 %v2592
      %v2996 = vpop.f32.mrb[0].mxu0
      %v2997 = vadd.f32 %v1723, %v2996
      %v2998 = vpop.f32.mrb[0].mxu0
      %v2999 = vpop.f32.mrb[0].mxu0
      %v3000 = vadd.f32 %v1728, %v2999
      %v3001 = vpop.f32.mrb[0].mxu0
      %3002 = vmatprep.mubr.bf16.mxu0 %v2595
      %3003 = vmatmul.mubr.bf16.gmra.mrb[0].mxu0 %v2594
      %v3004 = vpop.f32.mrb[0].mxu0
      %v3005 = vadd.f32 %v1733, %v3004
      %v3006 = vpop.f32.mrb[0].mxu0
      %v3007 = vpop.f32.mrb[0].mxu0
      %v3008 = vadd.f32 %v1738, %v3007
      %v3009 = vpop.f32.mrb[0].mxu0
      %3010 = vmatprep.mubr.bf16.mxu0 %v2597
      %3011 = vmatmul.mubr.bf16.gmra.mrb[0].mxu0 %v2596
      %v3012 = vpop.f32.mrb[0].mxu0
      %v3013 = vadd.f32 %v1743, %v3012
      %v3014 = vpop.f32.mrb[0].mxu0
      %v3015 = vpop.f32.mrb[0].mxu0
      %v3016 = vadd.f32 %v1748, %v3015
      %v3017 = vpop.f32.mrb[0].mxu0
      %3018 = vmatprep.mubr.bf16.mxu0 %v2599
      %3019 = vmatmul.mubr.bf16.gmra.mrb[0].mxu0 %v2598
      %v3020 = vpop.f32.mrb[0].mxu0
      %v3021 = vadd.f32 %v1753, %v3020
      %v3022 = vpop.f32.mrb[0].mxu0
      %v3023 = vpop.f32.mrb[0].mxu0
      %v3024 = vadd.f32 %v1758, %v3023
      %v3025 = vpop.f32.mrb[0].mxu0
      %3026 = vmatprep.mubr.bf16.mxu0 %v2601
      %3027 = vmatmul.mubr.bf16.gmra.mrb[0].mxu0 %v2600
      %v3028 = vpop.f32.mrb[0].mxu0
      %v3029 = vadd.f32 %v1763, %v3028
      %v3030 = vpop.f32.mrb[0].mxu0
      %v3031 = vpop.f32.mrb[0].mxu0
      %v3032 = vadd.f32 %v1768, %v3031
      %v3033 = vpop.f32.mrb[0].mxu0
      %3034 = vmatprep.mubr.bf16.mxu0 %v2603
      %3035 = vmatmul.mubr.bf16.gmra.mrb[0].mxu0 %v2602
      %v3036 = vpop.f32.mrb[0].mxu0
      %v3037 = vadd.f32 %v1773, %v3036
      %v3038 = vpop.f32.mrb[0].mxu0
      %v3039 = vpop.f32.mrb[0].mxu0
      %v3040 = vadd.f32 %v1778, %v3039
      %v3041 = vpop.f32.mrb[0].mxu0
      %3042 = vmatprep.mubr.bf16.mxu0 %v2605
      %3043 = vmatmul.mubr.bf16.gmra.mrb[0].mxu0 %v2604
      %v3044 = vpop.f32.mrb[0].mxu0
      %v3045 = vadd.f32 %v1783, %v3044
      %v3046 = vpop.f32.mrb[0].mxu0
      %v3047 = vpop.f32.mrb[0].mxu0
      %v3048 = vadd.f32 %v1788, %v3047
      %v3049 = vpop.f32.mrb[0].mxu0
      %3050 = vmatprep.mubr.bf16.mxu0 %v2607
      %3051 = vmatmul.mubr.bf16.gmra.mrb[0].mxu0 %v2606
      %v3052 = vpop.f32.mrb[0].mxu0
      %v3053 = vadd.f32 %v1793, %v3052
      %v3054 = vpop.f32.mrb[0].mxu0
      %v3055 = vpop.f32.mrb[0].mxu0
      %v3056 = vadd.f32 %v1798, %v3055
      %v3057 = vpop.f32.mrb[0].mxu0
      %3058 = vmatprep.mubr.bf16.mxu0 %v2609
      %3059 = vmatmul.mubr.bf16.gmra.mrb[0].mxu0 %v2608
      %v3060 = vpop.f32.mrb[0].mxu0
      %v3061 = vadd.f32 %v1803, %v3060
      %v3062 = vpop.f32.mrb[0].mxu0
      %v3063 = vpop.f32.mrb[0].mxu0
      %v3064 = vadd.f32 %v1808, %v3063
      %v3065 = vpop.f32.mrb[0].mxu0
      %3066 = vmatprep.mubr.bf16.mxu0 %v2611
      %3067 = vmatmul.mubr.bf16.gmra.mrb[0].mxu0 %v2610
      %v3068 = vpop.f32.mrb[0].mxu0
      %v3069 = vadd.f32 %v1813, %v3068
      %v3070 = vpop.f32.mrb[0].mxu0
      %v3071 = vpop.f32.mrb[0].mxu0
      %v3072 = vadd.f32 %v1818, %v3071
      %v3073 = vpop.f32.mrb[0].mxu0
      %3074 = vmatprep.mubr.bf16.mxu0 %v2613
      %3075 = vmatmul.mubr.bf16.gmra.mrb[0].mxu0 %v2612
      %v3076 = vpop.f32.mrb[0].mxu0
      %v3077 = vadd.f32 %v1823, %v3076
      %v3078 = vpop.f32.mrb[0].mxu0
      %v3079 = vpop.f32.mrb[0].mxu0
      %v3080 = vadd.f32 %v1828, %v3079
      %v3081 = vpop.f32.mrb[0].mxu0
      %3082 = vmatprep.mubr.bf16.mxu0 %v2615
      %3083 = vmatmul.mubr.bf16.gmra.mrb[0].mxu0 %v2614
      %v3084 = vpop.f32.mrb[0].mxu0
      %v3085 = vadd.f32 %v1833, %v3084
      %v3086 = vpop.f32.mrb[0].mxu0
      %v3087 = vpop.f32.mrb[0].mxu0
      %v3088 = vadd.f32 %v1838, %v3087
      %v3089 = vpop.f32.mrb[0].mxu0
      %3090 = vmatprep.mubr.bf16.mxu0 %v2617
      %3091 = vmatmul.mubr.bf16.gmra.mrb[0].mxu0 %v2616
      %v3092 = vpop.f32.mrb[0].mxu0
      %v3093 = vadd.f32 %v1843, %v3092
      %v3094 = vpop.f32.mrb[0].mxu0
      %v3095 = vpop.f32.mrb[0].mxu0
      %v3096 = vadd.f32 %v1848, %v3095
      %v3097 = vpop.f32.mrb[0].mxu0
      %3098 = vmatprep.mubr.bf16.mxu0 %v2619
      %3099 = vmatmul.mubr.bf16.gmra.mrb[0].mxu0 %v2618
      %v3100 = vpop.f32.mrb[0].mxu0
      %v3101 = vadd.f32 %v1853, %v3100
      %v3102 = vpop.f32.mrb[0].mxu0
      %v3103 = vpop.f32.mrb[0].mxu0
      %v3104 = vadd.f32 %v1858, %v3103
      %v3105 = vpop.f32.mrb[0].mxu0
      %3106 = vmatprep.mubr.bf16.mxu0 %v2621
      %3107 = vmatmul.mubr.bf16.gmra.mrb[0].mxu0 %v2620
      %v3108 = vpop.f32.mrb[0].mxu0
      %v3109 = vadd.f32 %v1863, %v3108
      %v3110 = vpop.f32.mrb[0].mxu0
      %v3111 = vpop.f32.mrb[0].mxu0
      %v3112 = vadd.f32 %v1868, %v3111
      %v3113 = vpop.f32.mrb[0].mxu0
      %3114 = vmatprep.mubr.bf16.mxu0 %v2623
      %3115 = vmatmul.mubr.bf16.gmra.mrb[0].mxu0 %v2622
      %v3116 = vpop.f32.mrb[0].mxu0
      %v3117 = vadd.f32 %v1873, %v3116
      %v3118 = vpop.f32.mrb[0].mxu0
      %v3119 = vpop.f32.mrb[0].mxu0
      %v3120 = vadd.f32 %v1878, %v3119
      %v3121 = vpop.f32.mrb[0].mxu0
      %3122 = vmatprep.mubr.bf16.mxu0 %v2625
      %3123 = vmatmul.mubr.bf16.gmra.mrb[0].mxu0 %v2624
      %v3124 = vpop.f32.mrb[0].mxu0
      %v3125 = vadd.f32 %v1883, %v3124
      %v3126 = vpop.f32.mrb[0].mxu0
      %v3127 = vpop.f32.mrb[0].mxu0
      %v3128 = vadd.f32 %v1888, %v3127
      %v3129 = vpop.f32.mrb[0].mxu0
      %3130 = vmatprep.mubr.bf16.mxu0 %v2627
      %3131 = vmatmul.mubr.bf16.gmra.mrb[0].mxu0 %v2626
      %v3132 = vpop.f32.mrb[0].mxu0
      %v3133 = vadd.f32 %v1893, %v3132
      %v3134 = vpop.f32.mrb[0].mxu0
      %v3135 = vpop.f32.mrb[0].mxu0
      %v3136 = vadd.f32 %v1898, %v3135
      %v3137 = vpop.f32.mrb[0].mxu0
      %3138 = vmatprep.mubr.bf16.mxu0 %v2629
      %3139 = vmatmul.mubr.bf16.gmra.mrb[0].mxu0 %v2628
      %v3140 = vpop.f32.mrb[0].mxu0
      %v3141 = vadd.f32 %v1903, %v3140
      %v3142 = vpop.f32.mrb[0].mxu0
      %v3143 = vpop.f32.mrb[0].mxu0
      %v3144 = vadd.f32 %v1908, %v3143
      %v3145 = vpop.f32.mrb[0].mxu0
      %3146 = vmatprep.mubr.bf16.mxu0 %v2631
      %3147 = vmatmul.mubr.bf16.gmra.mrb[0].mxu0 %v2630
      %v3148 = vpop.f32.mrb[0].mxu0
      %v3149 = vadd.f32 %v1913, %v3148
      %v3150 = vpop.f32.mrb[0].mxu0
      %v3151 = vpop.f32.mrb[0].mxu0
      %v3152 = vadd.f32 %v1918, %v3151
      %v3153 = vpop.f32.mrb[0].mxu0
      %3154 = vmatprep.mubr.bf16.mxu0 %v2633
      %3155 = vmatmul.mubr.bf16.gmra.mrb[0].mxu0 %v2632
      %v3156 = vpop.f32.mrb[0].mxu0
      %v3157 = vadd.f32 %v1923, %v3156
      %v3158 = vpop.f32.mrb[0].mxu0
      %v3159 = vpop.f32.mrb[0].mxu0
      %v3160 = vadd.f32 %v1928, %v3159
      %v3161 = vpop.f32.mrb[0].mxu0
      %3162 = vmatprep.mubr.bf16.mxu0 %v2635
      %3163 = vmatmul.mubr.bf16.gmra.mrb[0].mxu0 %v2634
      %v3164 = vpop.f32.mrb[0].mxu0
      %v3165 = vadd.f32 %v1933, %v3164
      %v3166 = vpop.f32.mrb[0].mxu0
      %v3167 = vpop.f32.mrb[0].mxu0
      %v3168 = vadd.f32 %v1938, %v3167
      %v3169 = vpop.f32.mrb[0].mxu0
      %3170 = vmatprep.mubr.bf16.mxu0 %v2637
      %3171 = vmatmul.mubr.bf16.gmra.mrb[0].mxu0 %v2636
      %v3172 = vpop.f32.mrb[0].mxu0
      %v3173 = vadd.f32 %v1943, %v3172
      %v3174 = vpop.f32.mrb[0].mxu0
      %v3175 = vpop.f32.mrb[0].mxu0
      %v3176 = vadd.f32 %v1948, %v3175
      %v3177 = vpop.f32.mrb[0].mxu0
      %3178 = vmatprep.mubr.bf16.mxu0 %v2639
      %3179 = vmatmul.mubr.bf16.gmra.mrb[0].mxu0 %v2638
      %v3180 = vpop.f32.mrb[0].mxu0
      %v3181 = vadd.f32 %v1953, %v3180
      %v3182 = vpop.f32.mrb[0].mxu0
      %v3183 = vpop.f32.mrb[0].mxu0
      %v3184 = vadd.f32 %v1958, %v3183
      %v3185 = vpop.f32.mrb[0].mxu0
      %3186 = vmatprep.mubr.bf16.mxu0 %v2641
      %3187 = vmatmul.mubr.bf16.gmra.mrb[0].mxu0 %v2640
      %v3188 = vpop.f32.mrb[0].mxu0
      %v3189 = vadd.f32 %v1963, %v3188
      %v3190 = vpop.f32.mrb[0].mxu0
      %v3191 = vpop.f32.mrb[0].mxu0
      %v3192 = vadd.f32 %v1968, %v3191
      %v3193 = vpop.f32.mrb[0].mxu0
      %3194 = vmatprep.mubr.bf16.mxu0 %v2643
      %3195 = vmatmul.mubr.bf16.gmra.mrb[0].mxu0 %v2642
      %v3196 = vpop.f32.mrb[0].mxu0
      %v3197 = vadd.f32 %v1973, %v3196
      %v3198 = vpop.f32.mrb[0].mxu0
      %v3199 = vpop.f32.mrb[0].mxu0
      %v3200 = vadd.f32 %v1978, %v3199
      %v3201 = vpop.f32.mrb[0].mxu0
      %3202 = vmatprep.mubr.bf16.mxu0 %v2645
      %3203 = vmatmul.mubr.bf16.gmra.mrb[0].mxu0 %v2644
      %v3204 = vpop.f32.mrb[0].mxu0
      %v3205 = vadd.f32 %v1983, %v3204
      %v3206 = vpop.f32.mrb[0].mxu0
      %v3207 = vpop.f32.mrb[0].mxu0
      %v3208 = vadd.f32 %v1988, %v3207
      %v3209 = vpop.f32.mrb[0].mxu0
      %3210 = vmatprep.mubr.bf16.mxu0 %v2647
      %3211 = vmatmul.mubr.bf16.gmra.mrb[0].mxu0 %v2646
      %v3212 = vpop.f32.mrb[0].mxu0
      %v3213 = vadd.f32 %v1993, %v3212
      %v3214 = vpop.f32.mrb[0].mxu0
      %v3215 = vpop.f32.mrb[0].mxu0
      %v3216 = vadd.f32 %v1998, %v3215
      %v3217 = vpop.f32.mrb[0].mxu0
      %3218 = vmatprep.mubr.bf16.mxu0 %v2649
      %3219 = vmatmul.mubr.bf16.gmra.mrb[0].mxu0 %v2648
      %v3220 = vpop.f32.mrb[0].mxu0
      %v3221 = vadd.f32 %v2003, %v3220
      %v3222 = vpop.f32.mrb[0].mxu0
      %v3223 = vpop.f32.mrb[0].mxu0
      %v3224 = vadd.f32 %v2008, %v3223
      %v3225 = vpop.f32.mrb[0].mxu0
      %3226 = vmatprep.mubr.bf16.mxu0 %v2651
      %3227 = vmatmul.mubr.bf16.gmra.mrb[0].mxu0 %v2650
      %v3228 = vpop.f32.mrb[0].mxu0
      %v3229 = vadd.f32 %v2013, %v3228
      %v3230 = vpop.f32.mrb[0].mxu0
      %v3231 = vpop.f32.mrb[0].mxu0
      %v3232 = vadd.f32 %v2018, %v3231
      %v3233 = vpop.f32.mrb[0].mxu0
      %3234 = vmatprep.mubr.bf16.mxu0 %v2653
      %3235 = vmatmul.mubr.bf16.gmra.mrb[0].mxu0 %v2652
      %v3236 = vpop.f32.mrb[0].mxu0
      %v3237 = vadd.f32 %v2023, %v3236
      %v3238 = vpop.f32.mrb[0].mxu0
      %v3239 = vpop.f32.mrb[0].mxu0
      %v3240 = vadd.f32 %v2028, %v3239
      %v3241 = vpop.f32.mrb[0].mxu0
      %3242 = vmatprep.mubr.bf16.mxu0 %v2655
      %3243 = vmatmul.mubr.bf16.gmra.mrb[0].mxu0 %v2654
      %v3244 = vpop.f32.mrb[0].mxu0
      %v3245 = vadd.f32 %v2033, %v3244
      %v3246 = vpop.f32.mrb[0].mxu0
      %v3247 = vpop.f32.mrb[0].mxu0
      %v3248 = vadd.f32 %v2038, %v3247
      %v3249 = vpop.f32.mrb[0].mxu0
      %3250 = vmatprep.mubr.bf16.mxu0 %v2657
      %3251 = vmatmul.mubr.bf16.gmra.mrb[0].mxu0 %v2656
      %v3252 = vpop.f32.mrb[0].mxu0
      %v3253 = vadd.f32 %v2043, %v3252
      %v3254 = vpop.f32.mrb[0].mxu0
      %v3255 = vpop.f32.mrb[0].mxu0
      %v3256 = vadd.f32 %v2048, %v3255
      %v3257 = vpop.f32.mrb[0].mxu0
      %3258 = vmatprep.mubr.bf16.mxu0 %v2659
      %3259 = vmatmul.mubr.bf16.gmra.mrb[0].mxu0 %v2658
      %v3260 = vpop.f32.mrb[0].mxu0
      %v3261 = vadd.f32 %v2053, %v3260
      %v3262 = vpop.f32.mrb[0].mxu0
      %v3263 = vpop.f32.mrb[0].mxu0
      %v3264 = vadd.f32 %v2058, %v3263
      %v3265 = vpop.f32.mrb[0].mxu0
      %3266 = vmatprep.mubr.bf16.mxu0 %v2661
      %3267 = vmatmul.mubr.bf16.gmra.mrb[0].mxu0 %v2660
      %v3268 = vpop.f32.mrb[0].mxu0
      %v3269 = vadd.f32 %v2063, %v3268
      %v3270 = vpop.f32.mrb[0].mxu0
      %v3271 = vpop.f32.mrb[0].mxu0
      %v3272 = vadd.f32 %v2068, %v3271
      %v3273 = vpop.f32.mrb[0].mxu0
      %3274 = vmatprep.mubr.bf16.mxu0 %v2663
      %3275 = vmatmul.mubr.bf16.gmra.mrb[0].mxu0 %v2662
      %v3276 = vpop.f32.mrb[0].mxu0
      %v3277 = vadd.f32 %v2073, %v3276
      %v3278 = vpop.f32.mrb[0].mxu0
      %v3279 = vpop.f32.mrb[0].mxu0
      %v3280 = vadd.f32 %v2078, %v3279
      %v3281 = vpop.f32.mrb[0].mxu0
      %3282 = vmatprep.mubr.bf16.mxu0 %v2665
      %3283 = vmatmul.mubr.bf16.gmra.mrb[0].mxu0 %v2664
      %v3284 = vpop.f32.mrb[0].mxu0
      %v3285 = vadd.f32 %v2083, %v3284
      %v3286 = vpop.f32.mrb[0].mxu0
      %v3287 = vpop.f32.mrb[0].mxu0
      %v3288 = vadd.f32 %v2088, %v3287
      %v3289 = vpop.f32.mrb[0].mxu0
      %3290 = vmatprep.mubr.bf16.mxu0 %v2667
      %3291 = vmatmul.mubr.bf16.gmra.mrb[0].mxu0 %v2666
      %v3292 = vpop.f32.mrb[0].mxu0
      %v3293 = vadd.f32 %v2093, %v3292
      %v3294 = vpop.f32.mrb[0].mxu0
      %v3295 = vpop.f32.mrb[0].mxu0
      %v3296 = vadd.f32 %v2098, %v3295
      %v3297 = vpop.f32.mrb[0].mxu0
      %3298 = vmatprep.mubr.bf16.mxu0 %v2669
      %3299 = vmatmul.mubr.bf16.gmra.mrb[0].mxu0 %v2668
      %v3300 = vpop.f32.mrb[0].mxu0
      %v3301 = vadd.f32 %v2103, %v3300
      %v3302 = vpop.f32.mrb[0].mxu0
      %v3303 = vpop.f32.mrb[0].mxu0
      %v3304 = vadd.f32 %v2108, %v3303
      %v3305 = vpop.f32.mrb[0].mxu0
      %3306 = vmatprep.mubr.bf16.mxu0 %v2671
      %3307 = vmatmul.mubr.bf16.gmra.mrb[0].mxu0 %v2670
      %v3308 = vpop.f32.mrb[0].mxu0
      %v3309 = vadd.f32 %v2113, %v3308
      %v3310 = vpop.f32.mrb[0].mxu0
      %v3311 = vpop.f32.mrb[0].mxu0
      %v3312 = vadd.f32 %v2118, %v3311
      %v3313 = vpop.f32.mrb[0].mxu0
      %3314 = vmatprep.mubr.bf16.mxu0 %v2673
      %3315 = vmatmul.mubr.bf16.gmra.mrb[0].mxu0 %v2672
      %v3316 = vpop.f32.mrb[0].mxu0
      %v3317 = vadd.f32 %v2123, %v3316
      %v3318 = vpop.f32.mrb[0].mxu0
      %v3319 = vpop.f32.mrb[0].mxu0
      %v3320 = vadd.f32 %v2128, %v3319
      %v3321 = vpop.f32.mrb[0].mxu0
      %3322 = vmatprep.mubr.bf16.mxu0 %v2675
      %3323 = vmatmul.mubr.bf16.gmra.mrb[0].mxu0 %v2674
      %v3324 = vpop.f32.mrb[0].mxu0
      %v3325 = vadd.f32 %v2133, %v3324
      %v3326 = vpop.f32.mrb[0].mxu0
      %v3327 = vpop.f32.mrb[0].mxu0
      %v3328 = vadd.f32 %v2138, %v3327
      %v3329 = vpop.f32.mrb[0].mxu0
      %3330 = vmatprep.mubr.bf16.mxu0 %v2677
      %3331 = vmatmul.mubr.bf16.gmra.mrb[0].mxu0 %v2676
      %v3332 = vpop.f32.mrb[0].mxu0
      %v3333 = vadd.f32 %v2143, %v3332
      %v3334 = vpop.f32.mrb[0].mxu0
      %v3335 = vpop.f32.mrb[0].mxu0
      %v3336 = vadd.f32 %v2148, %v3335
      %v3337 = vpop.f32.mrb[0].mxu0
      %3338 = vmatprep.mubr.bf16.mxu0 %v2679
      %3339 = vmatmul.mubr.bf16.gmra.mrb[0].mxu0 %v2678
      %v3340 = vpop.f32.mrb[0].mxu0
      %v3341 = vadd.f32 %v2153, %v3340
      %v3342 = vpop.f32.mrb[0].mxu0
      %v3343 = vpop.f32.mrb[0].mxu0
      %v3344 = vadd.f32 %v2158, %v3343
      %v3345 = vpop.f32.mrb[0].mxu0
      %3346 = vmatprep.mubr.bf16.mxu0 %v2681
      %3347 = vmatmul.mubr.bf16.gmra.mrb[0].mxu0 %v2680
      %v3348 = vpop.f32.mrb[0].mxu0
      %v3349 = vadd.f32 %v2163, %v3348
      %v3350 = vpop.f32.mrb[0].mxu0
      %v3351 = vpop.f32.mrb[0].mxu0
      %v3352 = vadd.f32 %v2168, %v3351
      %v3353 = vpop.f32.mrb[0].mxu0
      %3354 = vdwg.mxu0
      %v3355 = vmax.f32 %v2845, 0.0
      %v3356 = vmax.f32 %v2848, 0.0
      %v3357 = vmax.f32 %v2853, 0.0
      %v3358 = vmax.f32 %v2856, 0.0
      %v3359 = vmax.f32 %v2861, 0.0
      %v3360 = vmax.f32 %v2864, 0.0
      %v3361 = vmax.f32 %v2869, 0.0
      %v3362 = vmax.f32 %v2872, 0.0
      %v3363 = vmax.f32 %v2877, 0.0
      %v3364 = vmax.f32 %v2880, 0.0
      %v3365 = vmax.f32 %v2885, 0.0
      %v3366 = vmax.f32 %v2888, 0.0
      %v3367 = vmax.f32 %v2893, 0.0
      %v3368 = vmax.f32 %v2896, 0.0
      %v3369 = vmax.f32 %v2901, 0.0
      %v3370 = vmax.f32 %v2904, 0.0
      %v3371 = vmax.f32 %v2909, 0.0
      %v3372 = vmax.f32 %v2912, 0.0
      %v3373 = vmax.f32 %v2917, 0.0
      %v3374 = vmax.f32 %v2920, 0.0
      %v3375 = vmax.f32 %v2925, 0.0
      %v3376 = vmax.f32 %v2928, 0.0
      %v3377 = vmax.f32 %v2933, 0.0
      %v3378 = vmax.f32 %v2936, 0.0
      %v3379 = vmax.f32 %v2941, 0.0
      %v3380 = vmax.f32 %v2944, 0.0
      %v3381 = vmax.f32 %v2949, 0.0
      %v3382 = vmax.f32 %v2952, 0.0
      %v3383 = vmax.f32 %v2957, 0.0
      %v3384 = vmax.f32 %v2960, 0.0
      %v3385 = vmax.f32 %v2965, 0.0
      %v3386 = vmax.f32 %v2968, 0.0
      %v3387 = vmax.f32 %v2973, 0.0
      %v3388 = vmax.f32 %v2976, 0.0
      %v3389 = vmax.f32 %v2981, 0.0
      %v3390 = vmax.f32 %v2984, 0.0
      %v3391 = vmax.f32 %v2989, 0.0
      %v3392 = vmax.f32 %v2992, 0.0
      %v3393 = vmax.f32 %v2997, 0.0
      %v3394 = vmax.f32 %v3000, 0.0
      %v3395 = vmax.f32 %v3005, 0.0
      %v3396 = vmax.f32 %v3008, 0.0
      %v3397 = vmax.f32 %v3013, 0.0
      %v3398 = vmax.f32 %v3016, 0.0
      %v3399 = vmax.f32 %v3021, 0.0
      %v3400 = vmax.f32 %v3024, 0.0
      %v3401 = vmax.f32 %v3029, 0.0
      %v3402 = vmax.f32 %v3032, 0.0
      %v3403 = vmax.f32 %v3037, 0.0
      %v3404 = vmax.f32 %v3040, 0.0
      %v3405 = vmax.f32 %v3045, 0.0
      %v3406 = vmax.f32 %v3048, 0.0
      %v3407 = vmax.f32 %v3053, 0.0
      %v3408 = vmax.f32 %v3056, 0.0
      %v3409 = vmax.f32 %v3061, 0.0
      %v3410 = vmax.f32 %v3064, 0.0
      %v3411 = vmax.f32 %v3069, 0.0
      %v3412 = vmax.f32 %v3072, 0.0
      %v3413 = vmax.f32 %v3077, 0.0
      %v3414 = vmax.f32 %v3080, 0.0
      %v3415 = vmax.f32 %v3085, 0.0
      %v3416 = vmax.f32 %v3088, 0.0
      %v3417 = vmax.f32 %v3093, 0.0
      %v3418 = vmax.f32 %v3096, 0.0
      %v3419 = vmax.f32 %v3101, 0.0
      %v3420 = vmax.f32 %v3104, 0.0
      %v3421 = vmax.f32 %v3109, 0.0
      %v3422 = vmax.f32 %v3112, 0.0
      %v3423 = vmax.f32 %v3117, 0.0
      %v3424 = vmax.f32 %v3120, 0.0
      %v3425 = vmax.f32 %v3125, 0.0
      %v3426 = vmax.f32 %v3128, 0.0
      %v3427 = vmax.f32 %v3133, 0.0
      %v3428 = vmax.f32 %v3136, 0.0
      %v3429 = vmax.f32 %v3141, 0.0
      %v3430 = vmax.f32 %v3144, 0.0
      %v3431 = vmax.f32 %v3149, 0.0
      %v3432 = vmax.f32 %v3152, 0.0
      %v3433 = vmax.f32 %v3157, 0.0
      %v3434 = vmax.f32 %v3160, 0.0
      %v3435 = vmax.f32 %v3165, 0.0
      %v3436 = vmax.f32 %v3168, 0.0
      %v3437 = vmax.f32 %v3173, 0.0
      %v3438 = vmax.f32 %v3176, 0.0
      %v3439 = vmax.f32 %v3181, 0.0
      %v3440 = vmax.f32 %v3184, 0.0
      %v3441 = vmax.f32 %v3189, 0.0
      %v3442 = vmax.f32 %v3192, 0.0
      %v3443 = vmax.f32 %v3197, 0.0
      %v3444 = vmax.f32 %v3200, 0.0
      %v3445 = vmax.f32 %v3205, 0.0
      %v3446 = vmax.f32 %v3208, 0.0
      %v3447 = vmax.f32 %v3213, 0.0
      %v3448 = vmax.f32 %v3216, 0.0
      %v3449 = vmax.f32 %v3221, 0.0
      %v3450 = vmax.f32 %v3224, 0.0
      %v3451 = vmax.f32 %v3229, 0.0
      %v3452 = vmax.f32 %v3232, 0.0
      %v3453 = vmax.f32 %v3237, 0.0
      %v3454 = vmax.f32 %v3240, 0.0
      %v3455 = vmax.f32 %v3245, 0.0
      %v3456 = vmax.f32 %v3248, 0.0
      %v3457 = vmax.f32 %v3253, 0.0
      %v3458 = vmax.f32 %v3256, 0.0
      %v3459 = vmax.f32 %v3261, 0.0
      %v3460 = vmax.f32 %v3264, 0.0
      %v3461 = vmax.f32 %v3269, 0.0
      %v3462 = vmax.f32 %v3272, 0.0
      %v3463 = vmax.f32 %v3277, 0.0
      %v3464 = vmax.f32 %v3280, 0.0
      %v3465 = vmax.f32 %v3285, 0.0
      %v3466 = vmax.f32 %v3288, 0.0
      %v3467 = vmax.f32 %v3293, 0.0
      %v3468 = vmax.f32 %v3296, 0.0
      %v3469 = vmax.f32 %v3301, 0.0
      %v3470 = vmax.f32 %v3304, 0.0
      %v3471 = vmax.f32 %v3309, 0.0
      %v3472 = vmax.f32 %v3312, 0.0
      %v3473 = vmax.f32 %v3317, 0.0
      %v3474 = vmax.f32 %v3320, 0.0
      %v3475 = vmax.f32 %v3325, 0.0
      %v3476 = vmax.f32 %v3328, 0.0
      %v3477 = vmax.f32 %v3333, 0.0
      %v3478 = vmax.f32 %v3336, 0.0
      %v3479 = vmax.f32 %v3341, 0.0
      %v3480 = vmax.f32 %v3344, 0.0
      %v3481 = vmax.f32 %v3349, 0.0
      %v3482 = vmax.f32 %v3352, 0.0
      %v3483 = vld [vmem:[#allocation2] sm:$0xff]
      %v3484 = vld [vmem:[#allocation2 + $0x8] sm:$0xff]
      %v3485 = vld [vmem:[#allocation2 + $0x10] sm:$0xff]
      %v3486 = vld [vmem:[#allocation2 + $0x18] sm:$0xff]
      %v3487 = vld [vmem:[#allocation2 + $0x20] sm:$0xff]
      %v3488 = vld [vmem:[#allocation2 + $0x28] sm:$0xff]
      %v3489 = vld [vmem:[#allocation2 + $0x30] sm:$0xff]
      %v3490 = vld [vmem:[#allocation2 + $0x38] sm:$0xff]
      %v3491 = vld [vmem:[#allocation2 + $0x40] sm:$0xff]
      %v3492 = vld [vmem:[#allocation2 + $0x48] sm:$0xff]
      %v3493 = vld [vmem:[#allocation2 + $0x50] sm:$0xff]
      %v3494 = vld [vmem:[#allocation2 + $0x58] sm:$0xff]
      %v3495 = vld [vmem:[#allocation2 + $0x60] sm:$0xff]
      %v3496 = vld [vmem:[#allocation2 + $0x68] sm:$0xff]
      %v3497 = vld [vmem:[#allocation2 + $0x70] sm:$0xff]
      %v3498 = vld [vmem:[#allocation2 + $0x78] sm:$0xff]
      %v3499 = vld [vmem:[#allocation2 + $0x80] sm:$0xff]
      %v3500 = vld [vmem:[#allocation2 + $0x88] sm:$0xff]
      %v3501 = vld [vmem:[#allocation2 + $0x90] sm:$0xff]
      %v3502 = vld [vmem:[#allocation2 + $0x98] sm:$0xff]
      %v3503 = vld [vmem:[#allocation2 + $0xa0] sm:$0xff]
      %v3504 = vld [vmem:[#allocation2 + $0xa8] sm:$0xff]
      %v3505 = vld [vmem:[#allocation2 + $0xb0] sm:$0xff]
      %v3506 = vld [vmem:[#allocation2 + $0xb8] sm:$0xff]
      %v3507 = vld [vmem:[#allocation2 + $0xc0] sm:$0xff]
      %v3508 = vld [vmem:[#allocation2 + $0xc8] sm:$0xff]
      %v3509 = vld [vmem:[#allocation2 + $0xd0] sm:$0xff]
      %v3510 = vld [vmem:[#allocation2 + $0xd8] sm:$0xff]
      %v3511 = vld [vmem:[#allocation2 + $0xe0] sm:$0xff]
      %v3512 = vld [vmem:[#allocation2 + $0xe8] sm:$0xff]
      %v3513 = vld [vmem:[#allocation2 + $0xf0] sm:$0xff]
      %v3514 = vld [vmem:[#allocation2 + $0xf8] sm:$0xff]
      %v3515 = vld [vmem:[#allocation2 + $0x100] sm:$0xff]
      %v3516 = vld [vmem:[#allocation2 + $0x108] sm:$0xff]
      %v3517 = vld [vmem:[#allocation2 + $0x110] sm:$0xff]
      %v3518 = vld [vmem:[#allocation2 + $0x118] sm:$0xff]
      %v3519 = vld [vmem:[#allocation2 + $0x120] sm:$0xff]
      %v3520 = vld [vmem:[#allocation2 + $0x128] sm:$0xff]
      %v3521 = vld [vmem:[#allocation2 + $0x130] sm:$0xff]
      %v3522 = vld [vmem:[#allocation2 + $0x138] sm:$0xff]
      %v3523 = vld [vmem:[#allocation2 + $0x140] sm:$0xff]
      %v3524 = vld [vmem:[#allocation2 + $0x148] sm:$0xff]
      %v3525 = vld [vmem:[#allocation2 + $0x150] sm:$0xff]
      %v3526 = vld [vmem:[#allocation2 + $0x158] sm:$0xff]
      %v3527 = vld [vmem:[#allocation2 + $0x160] sm:$0xff]
      %v3528 = vld [vmem:[#allocation2 + $0x168] sm:$0xff]
      %v3529 = vld [vmem:[#allocation2 + $0x170] sm:$0xff]
      %v3530 = vld [vmem:[#allocation2 + $0x178] sm:$0xff]
      %v3531 = vld [vmem:[#allocation2 + $0x180] sm:$0xff]
      %v3532 = vld [vmem:[#allocation2 + $0x188] sm:$0xff]
      %v3533 = vld [vmem:[#allocation2 + $0x190] sm:$0xff]
      %v3534 = vld [vmem:[#allocation2 + $0x198] sm:$0xff]
      %v3535 = vld [vmem:[#allocation2 + $0x1a0] sm:$0xff]
      %v3536 = vld [vmem:[#allocation2 + $0x1a8] sm:$0xff]
      %v3537 = vld [vmem:[#allocation2 + $0x1b0] sm:$0xff]
      %v3538 = vld [vmem:[#allocation2 + $0x1b8] sm:$0xff]
      %v3539 = vld [vmem:[#allocation2 + $0x1c0] sm:$0xff]
      %v3540 = vld [vmem:[#allocation2 + $0x1c8] sm:$0xff]
      %v3541 = vld [vmem:[#allocation2 + $0x1d0] sm:$0xff]
      %v3542 = vld [vmem:[#allocation2 + $0x1d8] sm:$0xff]
      %v3543 = vld [vmem:[#allocation2 + $0x1e0] sm:$0xff]
      %v3544 = vld [vmem:[#allocation2 + $0x1e8] sm:$0xff]
      %v3545 = vld [vmem:[#allocation2 + $0x1f0] sm:$0xff]
      %v3546 = vld [vmem:[#allocation2 + $0x1f8] sm:$0xff]
      %v3547 = vld [vmem:[#allocation2 + $0x200] sm:$0xff]
      %v3548 = vld [vmem:[#allocation2 + $0x208] sm:$0xff]
      %v3549 = vld [vmem:[#allocation2 + $0x210] sm:$0xff]
      %v3550 = vld [vmem:[#allocation2 + $0x218] sm:$0xff]
      %v3551 = vld [vmem:[#allocation2 + $0x220] sm:$0xff]
      %v3552 = vld [vmem:[#allocation2 + $0x228] sm:$0xff]
      %v3553 = vld [vmem:[#allocation2 + $0x230] sm:$0xff]
      %v3554 = vld [vmem:[#allocation2 + $0x238] sm:$0xff]
      %v3555 = vld [vmem:[#allocation2 + $0x240] sm:$0xff]
      %v3556 = vld [vmem:[#allocation2 + $0x248] sm:$0xff]
      %v3557 = vld [vmem:[#allocation2 + $0x250] sm:$0xff]
      %v3558 = vld [vmem:[#allocation2 + $0x258] sm:$0xff]
      %v3559 = vld [vmem:[#allocation2 + $0x260] sm:$0xff]
      %v3560 = vld [vmem:[#allocation2 + $0x268] sm:$0xff]
      %v3561 = vld [vmem:[#allocation2 + $0x270] sm:$0xff]
      %v3562 = vld [vmem:[#allocation2 + $0x278] sm:$0xff]
      %v3563 = vld [vmem:[#allocation2 + $0x280] sm:$0xff]
      %v3564 = vld [vmem:[#allocation2 + $0x288] sm:$0xff]
      %v3565 = vld [vmem:[#allocation2 + $0x290] sm:$0xff]
      %v3566 = vld [vmem:[#allocation2 + $0x298] sm:$0xff]
      %v3567 = vld [vmem:[#allocation2 + $0x2a0] sm:$0xff]
      %v3568 = vld [vmem:[#allocation2 + $0x2a8] sm:$0xff]
      %v3569 = vld [vmem:[#allocation2 + $0x2b0] sm:$0xff]
      %v3570 = vld [vmem:[#allocation2 + $0x2b8] sm:$0xff]
      %v3571 = vld [vmem:[#allocation2 + $0x2c0] sm:$0xff]
      %v3572 = vld [vmem:[#allocation2 + $0x2c8] sm:$0xff]
      %v3573 = vld [vmem:[#allocation2 + $0x2d0] sm:$0xff]
      %v3574 = vld [vmem:[#allocation2 + $0x2d8] sm:$0xff]
      %v3575 = vld [vmem:[#allocation2 + $0x2e0] sm:$0xff]
      %v3576 = vld [vmem:[#allocation2 + $0x2e8] sm:$0xff]
      %v3577 = vld [vmem:[#allocation2 + $0x2f0] sm:$0xff]
      %v3578 = vld [vmem:[#allocation2 + $0x2f8] sm:$0xff]
      %v3579 = vld [vmem:[#allocation2 + $0x300] sm:$0xff]
      %v3580 = vld [vmem:[#allocation2 + $0x308] sm:$0xff]
      %v3581 = vld [vmem:[#allocation2 + $0x310] sm:$0xff]
      %v3582 = vld [vmem:[#allocation2 + $0x318] sm:$0xff]
      %v3583 = vld [vmem:[#allocation2 + $0x320] sm:$0xff]
      %v3584 = vld [vmem:[#allocation2 + $0x328] sm:$0xff]
      %v3585 = vld [vmem:[#allocation2 + $0x330] sm:$0xff]
      %v3586 = vld [vmem:[#allocation2 + $0x338] sm:$0xff]
      %v3587 = vld [vmem:[#allocation2 + $0x340] sm:$0xff]
      %v3588 = vld [vmem:[#allocation2 + $0x348] sm:$0xff]
      %v3589 = vld [vmem:[#allocation2 + $0x350] sm:$0xff]
      %v3590 = vld [vmem:[#allocation2 + $0x358] sm:$0xff]
      %v3591 = vld [vmem:[#allocation2 + $0x360] sm:$0xff]
      %v3592 = vld [vmem:[#allocation2 + $0x368] sm:$0xff]
      %v3593 = vld [vmem:[#allocation2 + $0x370] sm:$0xff]
      %v3594 = vld [vmem:[#allocation2 + $0x378] sm:$0xff]
      %v3595 = vld [vmem:[#allocation2 + $0x380] sm:$0xff]
      %v3596 = vld [vmem:[#allocation2 + $0x388] sm:$0xff]
      %v3597 = vld [vmem:[#allocation2 + $0x390] sm:$0xff]
      %v3598 = vld [vmem:[#allocation2 + $0x398] sm:$0xff]
      %v3599 = vld [vmem:[#allocation2 + $0x3a0] sm:$0xff]
      %v3600 = vld [vmem:[#allocation2 + $0x3a8] sm:$0xff]
      %v3601 = vld [vmem:[#allocation2 + $0x3b0] sm:$0xff]
      %v3602 = vld [vmem:[#allocation2 + $0x3b8] sm:$0xff]
      %v3603 = vld [vmem:[#allocation2 + $0x3c0] sm:$0xff]
      %v3604 = vld [vmem:[#allocation2 + $0x3c8] sm:$0xff]
      %v3605 = vld [vmem:[#allocation2 + $0x3d0] sm:$0xff]
      %v3606 = vld [vmem:[#allocation2 + $0x3d8] sm:$0xff]
      %v3607 = vld [vmem:[#allocation2 + $0x3e0] sm:$0xff]
      %v3608 = vld [vmem:[#allocation2 + $0x3e8] sm:$0xff]
      %v3609 = vld [vmem:[#allocation2 + $0x3f0] sm:$0xff]
      %v3610 = vld [vmem:[#allocation2 + $0x3f8] sm:$0xff]
      %v3611 = vmax.f32 %v3483, %v3355
      %v3612 = vmax.f32 %v3484, %v3356
      %v3613 = vmax.f32 %v3485, %v3357
      %v3614 = vmax.f32 %v3486, %v3358
      %v3615 = vmax.f32 %v3487, %v3359
      %v3616 = vmax.f32 %v3488, %v3360
      %v3617 = vmax.f32 %v3489, %v3361
      %v3618 = vmax.f32 %v3490, %v3362
      %v3619 = vmax.f32 %v3491, %v3363
      %v3620 = vmax.f32 %v3492, %v3364
      %v3621 = vmax.f32 %v3493, %v3365
      %v3622 = vmax.f32 %v3494, %v3366
      %v3623 = vmax.f32 %v3495, %v3367
      %v3624 = vmax.f32 %v3496, %v3368
      %v3625 = vmax.f32 %v3497, %v3369
      %v3626 = vmax.f32 %v3498, %v3370
      %v3627 = vmax.f32 %v3499, %v3371
      %v3628 = vmax.f32 %v3500, %v3372
      %v3629 = vmax.f32 %v3501, %v3373
      %v3630 = vmax.f32 %v3502, %v3374
      %v3631 = vmax.f32 %v3503, %v3375
      %v3632 = vmax.f32 %v3504, %v3376
      %v3633 = vmax.f32 %v3505, %v3377
      %v3634 = vmax.f32 %v3506, %v3378
      %v3635 = vmax.f32 %v3507, %v3379
      %v3636 = vmax.f32 %v3508, %v3380
      %v3637 = vmax.f32 %v3509, %v3381
      %v3638 = vmax.f32 %v3510, %v3382
      %v3639 = vmax.f32 %v3511, %v3383
      %v3640 = vmax.f32 %v3512, %v3384
      %v3641 = vmax.f32 %v3513, %v3385
      %v3642 = vmax.f32 %v3514, %v3386
      %v3643 = vmax.f32 %v3515, %v3387
      %v3644 = vmax.f32 %v3516, %v3388
      %v3645 = vmax.f32 %v3517, %v3389
      %v3646 = vmax.f32 %v3518, %v3390
      %v3647 = vmax.f32 %v3519, %v3391
      %v3648 = vmax.f32 %v3520, %v3392
      %v3649 = vmax.f32 %v3521, %v3393
      %v3650 = vmax.f32 %v3522, %v3394
      %v3651 = vmax.f32 %v3523, %v3395
      %v3652 = vmax.f32 %v3524, %v3396
      %v3653 = vmax.f32 %v3525, %v3397
      %v3654 = vmax.f32 %v3526, %v3398
      %v3655 = vmax.f32 %v3527, %v3399
      %v3656 = vmax.f32 %v3528, %v3400
      %v3657 = vmax.f32 %v3529, %v3401
      %v3658 = vmax.f32 %v3530, %v3402
      %v3659 = vmax.f32 %v3531, %v3403
      %v3660 = vmax.f32 %v3532, %v3404
      %v3661 = vmax.f32 %v3533, %v3405
      %v3662 = vmax.f32 %v3534, %v3406
      %v3663 = vmax.f32 %v3535, %v3407
      %v3664 = vmax.f32 %v3536, %v3408
      %v3665 = vmax.f32 %v3537, %v3409
      %v3666 = vmax.f32 %v3538, %v3410
      %v3667 = vmax.f32 %v3539, %v3411
      %v3668 = vmax.f32 %v3540, %v3412
      %v3669 = vmax.f32 %v3541, %v3413
      %v3670 = vmax.f32 %v3542, %v3414
      %v3671 = vmax.f32 %v3543, %v3415
      %v3672 = vmax.f32 %v3544, %v3416
      %v3673 = vmax.f32 %v3545, %v3417
      %v3674 = vmax.f32 %v3546, %v3418
      %v3675 = vmax.f32 %v3547, %v3419
      %v3676 = vmax.f32 %v3548, %v3420
      %v3677 = vmax.f32 %v3549, %v3421
      %v3678 = vmax.f32 %v3550, %v3422
      %v3679 = vmax.f32 %v3551, %v3423
      %v3680 = vmax.f32 %v3552, %v3424
      %v3681 = vmax.f32 %v3553, %v3425
      %v3682 = vmax.f32 %v3554, %v3426
      %v3683 = vmax.f32 %v3555, %v3427
      %v3684 = vmax.f32 %v3556, %v3428
      %v3685 = vmax.f32 %v3557, %v3429
      %v3686 = vmax.f32 %v3558, %v3430
      %v3687 = vmax.f32 %v3559, %v3431
      %v3688 = vmax.f32 %v3560, %v3432
      %v3689 = vmax.f32 %v3561, %v3433
      %v3690 = vmax.f32 %v3562, %v3434
      %v3691 = vmax.f32 %v3563, %v3435
      %v3692 = vmax.f32 %v3564, %v3436
      %v3693 = vmax.f32 %v3565, %v3437
      %v3694 = vmax.f32 %v3566, %v3438
      %v3695 = vmax.f32 %v3567, %v3439
      %v3696 = vmax.f32 %v3568, %v3440
      %v3697 = vmax.f32 %v3569, %v3441
      %v3698 = vmax.f32 %v3570, %v3442
      %v3699 = vmax.f32 %v3571, %v3443
      %v3700 = vmax.f32 %v3572, %v3444
      %v3701 = vmax.f32 %v3573, %v3445
      %v3702 = vmax.f32 %v3574, %v3446
      %v3703 = vmax.f32 %v3575, %v3447
      %v3704 = vmax.f32 %v3576, %v3448
      %v3705 = vmax.f32 %v3577, %v3449
      %v3706 = vmax.f32 %v3578, %v3450
      %v3707 = vmax.f32 %v3579, %v3451
      %v3708 = vmax.f32 %v3580, %v3452
      %v3709 = vmax.f32 %v3581, %v3453
      %v3710 = vmax.f32 %v3582, %v3454
      %v3711 = vmax.f32 %v3583, %v3455
      %v3712 = vmax.f32 %v3584, %v3456
      %v3713 = vmax.f32 %v3585, %v3457
      %v3714 = vmax.f32 %v3586, %v3458
      %v3715 = vmax.f32 %v3587, %v3459
      %v3716 = vmax.f32 %v3588, %v3460
      %v3717 = vmax.f32 %v3589, %v3461
      %v3718 = vmax.f32 %v3590, %v3462
      %v3719 = vmax.f32 %v3591, %v3463
      %v3720 = vmax.f32 %v3592, %v3464
      %v3721 = vmax.f32 %v3593, %v3465
      %v3722 = vmax.f32 %v3594, %v3466
      %v3723 = vmax.f32 %v3595, %v3467
      %v3724 = vmax.f32 %v3596, %v3468
      %v3725 = vmax.f32 %v3597, %v3469
      %v3726 = vmax.f32 %v3598, %v3470
      %v3727 = vmax.f32 %v3599, %v3471
      %v3728 = vmax.f32 %v3600, %v3472
      %v3729 = vmax.f32 %v3601, %v3473
      %v3730 = vmax.f32 %v3602, %v3474
      %v3731 = vmax.f32 %v3603, %v3475
      %v3732 = vmax.f32 %v3604, %v3476
      %v3733 = vmax.f32 %v3605, %v3477
      %v3734 = vmax.f32 %v3606, %v3478
      %v3735 = vmax.f32 %v3607, %v3479
      %v3736 = vmax.f32 %v3608, %v3480
      %v3737 = vmax.f32 %v3609, %v3481
      %v3738 = vmax.f32 %v3610, %v3482
      %3739 = vst [vmem:[#allocation2] sm:$0xff] %v3611
      %3740 = vst [vmem:[#allocation2 + $0x8] sm:$0xff] %v3612
      %3741 = vst [vmem:[#allocation2 + $0x10] sm:$0xff] %v3613
      %3742 = vst [vmem:[#allocation2 + $0x18] sm:$0xff] %v3614
      %3743 = vst [vmem:[#allocation2 + $0x20] sm:$0xff] %v3615
      %3744 = vst [vmem:[#allocation2 + $0x28] sm:$0xff] %v3616
      %3745 = vst [vmem:[#allocation2 + $0x30] sm:$0xff] %v3617
      %3746 = vst [vmem:[#allocation2 + $0x38] sm:$0xff] %v3618
      %3747 = vst [vmem:[#allocation2 + $0x40] sm:$0xff] %v3619
      %3748 = vst [vmem:[#allocation2 + $0x48] sm:$0xff] %v3620
      %3749 = vst [vmem:[#allocation2 + $0x50] sm:$0xff] %v3621
      %3750 = vst [vmem:[#allocation2 + $0x58] sm:$0xff] %v3622
      %3751 = vst [vmem:[#allocation2 + $0x60] sm:$0xff] %v3623
      %3752 = vst [vmem:[#allocation2 + $0x68] sm:$0xff] %v3624
      %3753 = vst [vmem:[#allocation2 + $0x70] sm:$0xff] %v3625
      %3754 = vst [vmem:[#allocation2 + $0x78] sm:$0xff] %v3626
      %3755 = vst [vmem:[#allocation2 + $0x80] sm:$0xff] %v3627
      %3756 = vst [vmem:[#allocation2 + $0x88] sm:$0xff] %v3628
      %3757 = vst [vmem:[#allocation2 + $0x90] sm:$0xff] %v3629
      %3758 = vst [vmem:[#allocation2 + $0x98] sm:$0xff] %v3630
      %3759 = vst [vmem:[#allocation2 + $0xa0] sm:$0xff] %v3631
      %3760 = vst [vmem:[#allocation2 + $0xa8] sm:$0xff] %v3632
      %3761 = vst [vmem:[#allocation2 + $0xb0] sm:$0xff] %v3633
      %3762 = vst [vmem:[#allocation2 + $0xb8] sm:$0xff] %v3634
      %3763 = vst [vmem:[#allocation2 + $0xc0] sm:$0xff] %v3635
      %3764 = vst [vmem:[#allocation2 + $0xc8] sm:$0xff] %v3636
      %3765 = vst [vmem:[#allocation2 + $0xd0] sm:$0xff] %v3637
      %3766 = vst [vmem:[#allocation2 + $0xd8] sm:$0xff] %v3638
      %3767 = vst [vmem:[#allocation2 + $0xe0] sm:$0xff] %v3639
      %3768 = vst [vmem:[#allocation2 + $0xe8] sm:$0xff] %v3640
      %3769 = vst [vmem:[#allocation2 + $0xf0] sm:$0xff] %v3641
      %3770 = vst [vmem:[#allocation2 + $0xf8] sm:$0xff] %v3642
      %3771 = vst [vmem:[#allocation2 + $0x100] sm:$0xff] %v3643
      %3772 = vst [vmem:[#allocation2 + $0x108] sm:$0xff] %v3644
      %3773 = vst [vmem:[#allocation2 + $0x110] sm:$0xff] %v3645
      %3774 = vst [vmem:[#allocation2 + $0x118] sm:$0xff] %v3646
      %3775 = vst [vmem:[#allocation2 + $0x120] sm:$0xff] %v3647
      %3776 = vst [vmem:[#allocation2 + $0x128] sm:$0xff] %v3648
      %3777 = vst [vmem:[#allocation2 + $0x130] sm:$0xff] %v3649
      %3778 = vst [vmem:[#allocation2 + $0x138] sm:$0xff] %v3650
      %3779 = vst [vmem:[#allocation2 + $0x140] sm:$0xff] %v3651
      %3780 = vst [vmem:[#allocation2 + $0x148] sm:$0xff] %v3652
      %3781 = vst [vmem:[#allocation2 + $0x150] sm:$0xff] %v3653
      %3782 = vst [vmem:[#allocation2 + $0x158] sm:$0xff] %v3654
      %3783 = vst [vmem:[#allocation2 + $0x160] sm:$0xff] %v3655
      %3784 = vst [vmem:[#allocation2 + $0x168] sm:$0xff] %v3656
      %3785 = vst [vmem:[#allocation2 + $0x170] sm:$0xff] %v3657
      %3786 = vst [vmem:[#allocation2 + $0x178] sm:$0xff] %v3658
      %3787 = vst [vmem:[#allocation2 + $0x180] sm:$0xff] %v3659
      %3788 = vst [vmem:[#allocation2 + $0x188] sm:$0xff] %v3660
      %3789 = vst [vmem:[#allocation2 + $0x190] sm:$0xff] %v3661
      %3790 = vst [vmem:[#allocation2 + $0x198] sm:$0xff] %v3662
      %3791 = vst [vmem:[#allocation2 + $0x1a0] sm:$0xff] %v3663
      %3792 = vst [vmem:[#allocation2 + $0x1a8] sm:$0xff] %v3664
      %3793 = vst [vmem:[#allocation2 + $0x1b0] sm:$0xff] %v3665
      %3794 = vst [vmem:[#allocation2 + $0x1b8] sm:$0xff] %v3666
      %3795 = vst [vmem:[#allocation2 + $0x1c0] sm:$0xff] %v3667
      %3796 = vst [vmem:[#allocation2 + $0x1c8] sm:$0xff] %v3668
      %3797 = vst [vmem:[#allocation2 + $0x1d0] sm:$0xff] %v3669
      %3798 = vst [vmem:[#allocation2 + $0x1d8] sm:$0xff] %v3670
      %3799 = vst [vmem:[#allocation2 + $0x1e0] sm:$0xff] %v3671
      %3800 = vst [vmem:[#allocation2 + $0x1e8] sm:$0xff] %v3672
      %3801 = vst [vmem:[#allocation2 + $0x1f0] sm:$0xff] %v3673
      %3802 = vst [vmem:[#allocation2 + $0x1f8] sm:$0xff] %v3674
      %3803 = vst [vmem:[#allocation2 + $0x200] sm:$0xff] %v3675
      %3804 = vst [vmem:[#allocation2 + $0x208] sm:$0xff] %v3676
      %3805 = vst [vmem:[#allocation2 + $0x210] sm:$0xff] %v3677
      %3806 = vst [vmem:[#allocation2 + $0x218] sm:$0xff] %v3678
      %3807 = vst [vmem:[#allocation2 + $0x220] sm:$0xff] %v3679
      %3808 = vst [vmem:[#allocation2 + $0x228] sm:$0xff] %v3680
      %3809 = vst [vmem:[#allocation2 + $0x230] sm:$0xff] %v3681
      %3810 = vst [vmem:[#allocation2 + $0x238] sm:$0xff] %v3682
      %3811 = vst [vmem:[#allocation2 + $0x240] sm:$0xff] %v3683
      %3812 = vst [vmem:[#allocation2 + $0x248] sm:$0xff] %v3684
      %3813 = vst [vmem:[#allocation2 + $0x250] sm:$0xff] %v3685
      %3814 = vst [vmem:[#allocation2 + $0x258] sm:$0xff] %v3686
      %3815 = vst [vmem:[#allocation2 + $0x260] sm:$0xff] %v3687
      %3816 = vst [vmem:[#allocation2 + $0x268] sm:$0xff] %v3688
      %3817 = vst [vmem:[#allocation2 + $0x270] sm:$0xff] %v3689
      %3818 = vst [vmem:[#allocation2 + $0x278] sm:$0xff] %v3690
      %3819 = vst [vmem:[#allocation2 + $0x280] sm:$0xff] %v3691
      %3820 = vst [vmem:[#allocation2 + $0x288] sm:$0xff] %v3692
      %3821 = vst [vmem:[#allocation2 + $0x290] sm:$0xff] %v3693
      %3822 = vst [vmem:[#allocation2 + $0x298] sm:$0xff] %v3694
      %3823 = vst [vmem:[#allocation2 + $0x2a0] sm:$0xff] %v3695
      %3824 = vst [vmem:[#allocation2 + $0x2a8] sm:$0xff] %v3696
      %3825 = vst [vmem:[#allocation2 + $0x2b0] sm:$0xff] %v3697
      %3826 = vst [vmem:[#allocation2 + $0x2b8] sm:$0xff] %v3698
      %3827 = vst [vmem:[#allocation2 + $0x2c0] sm:$0xff] %v3699
      %3828 = vst [vmem:[#allocation2 + $0x2c8] sm:$0xff] %v3700
      %3829 = vst [vmem:[#allocation2 + $0x2d0] sm:$0xff] %v3701
      %3830 = vst [vmem:[#allocation2 + $0x2d8] sm:$0xff] %v3702
      %3831 = vst [vmem:[#allocation2 + $0x2e0] sm:$0xff] %v3703
      %3832 = vst [vmem:[#allocation2 + $0x2e8] sm:$0xff] %v3704
      %3833 = vst [vmem:[#allocation2 + $0x2f0] sm:$0xff] %v3705
      %3834 = vst [vmem:[#allocation2 + $0x2f8] sm:$0xff] %v3706
      %3835 = vst [vmem:[#allocation2 + $0x300] sm:$0xff] %v3707
      %3836 = vst [vmem:[#allocation2 + $0x308] sm:$0xff] %v3708
      %3837 = vst [vmem:[#allocation2 + $0x310] sm:$0xff] %v3709
      %3838 = vst [vmem:[#allocation2 + $0x318] sm:$0xff] %v3710
      %3839 = vst [vmem:[#allocation2 + $0x320] sm:$0xff] %v3711
      %3840 = vst [vmem:[#allocation2 + $0x328] sm:$0xff] %v3712
      %3841 = vst [vmem:[#allocation2 + $0x330] sm:$0xff] %v3713
      %3842 = vst [vmem:[#allocation2 + $0x338] sm:$0xff] %v3714
      %3843 = vst [vmem:[#allocation2 + $0x340] sm:$0xff] %v3715
      %3844 = vst [vmem:[#allocation2 + $0x348] sm:$0xff] %v3716
      %3845 = vst [vmem:[#allocation2 + $0x350] sm:$0xff] %v3717
      %3846 = vst [vmem:[#allocation2 + $0x358] sm:$0xff] %v3718
      %3847 = vst [vmem:[#allocation2 + $0x360] sm:$0xff] %v3719
      %3848 = vst [vmem:[#allocation2 + $0x368] sm:$0xff] %v3720
      %3849 = vst [vmem:[#allocation2 + $0x370] sm:$0xff] %v3721
      %3850 = vst [vmem:[#allocation2 + $0x378] sm:$0xff] %v3722
      %3851 = vst [vmem:[#allocation2 + $0x380] sm:$0xff] %v3723
      %3852 = vst [vmem:[#allocation2 + $0x388] sm:$0xff] %v3724
      %3853 = vst [vmem:[#allocation2 + $0x390] sm:$0xff] %v3725
      %3854 = vst [vmem:[#allocation2 + $0x398] sm:$0xff] %v3726
      %3855 = vst [vmem:[#allocation2 + $0x3a0] sm:$0xff] %v3727
      %3856 = vst [vmem:[#allocation2 + $0x3a8] sm:$0xff] %v3728
      %3857 = vst [vmem:[#allocation2 + $0x3b0] sm:$0xff] %v3729
      %3858 = vst [vmem:[#allocation2 + $0x3b8] sm:$0xff] %v3730
      %3859 = vst [vmem:[#allocation2 + $0x3c0] sm:$0xff] %v3731
      %3860 = vst [vmem:[#allocation2 + $0x3c8] sm:$0xff] %v3732
      %3861 = vst [vmem:[#allocation2 + $0x3d0] sm:$0xff] %v3733
      %3862 = vst [vmem:[#allocation2 + $0x3d8] sm:$0xff] %v3734
      %3863 = vst [vmem:[#allocation2 + $0x3e0] sm:$0xff] %v3735
      %3864 = vst [vmem:[#allocation2 + $0x3e8] sm:$0xff] %v3736
      %3865 = vst [vmem:[#allocation2 + $0x3f0] sm:$0xff] %v3737
      %3866 = vst [vmem:[#allocation2 + $0x3f8] sm:$0xff] %v3738
      // Predicated region
      $region53: #{tpu_custom_call.1} parent=47 // pred_check
        %p3867 = pneg %p303
      $region54: #{tpu_custom_call.1} parent=47 // pred_check_branch
        %3869 = sbr.rel (%p3867) target = $region56
      $region55: #{tpu_custom_call.1} parent=47 // pred_region
        %v3870 = vld [vmem:[#allocation2] sm:$0xff]
        %v3871 = vld [vmem:[#allocation2 + $0x8] sm:$0xff]
        %v3872 = vld [vmem:[#allocation2 + $0x10] sm:$0xff]
        %v3873 = vld [vmem:[#allocation2 + $0x18] sm:$0xff]
        %v3874 = vld [vmem:[#allocation2 + $0x20] sm:$0xff]
        %v3875 = vld [vmem:[#allocation2 + $0x28] sm:$0xff]
        %v3876 = vld [vmem:[#allocation2 + $0x30] sm:$0xff]
        %v3877 = vld [vmem:[#allocation2 + $0x38] sm:$0xff]
        %v3878 = vld [vmem:[#allocation2 + $0x40] sm:$0xff]
        %v3879 = vld [vmem:[#allocation2 + $0x48] sm:$0xff]
        %v3880 = vld [vmem:[#allocation2 + $0x50] sm:$0xff]
        %v3881 = vld [vmem:[#allocation2 + $0x58] sm:$0xff]
        %v3882 = vld [vmem:[#allocation2 + $0x60] sm:$0xff]
        %v3883 = vld [vmem:[#allocation2 + $0x68] sm:$0xff]
        %v3884 = vld [vmem:[#allocation2 + $0x70] sm:$0xff]
        %v3885 = vld [vmem:[#allocation2 + $0x78] sm:$0xff]
        %v3886 = vld [vmem:[#allocation2 + $0x80] sm:$0xff]
        %v3887 = vld [vmem:[#allocation2 + $0x88] sm:$0xff]
        %v3888 = vld [vmem:[#allocation2 + $0x90] sm:$0xff]
        %v3889 = vld [vmem:[#allocation2 + $0x98] sm:$0xff]
        %v3890 = vld [vmem:[#allocation2 + $0xa0] sm:$0xff]
        %v3891 = vld [vmem:[#allocation2 + $0xa8] sm:$0xff]
        %v3892 = vld [vmem:[#allocation2 + $0xb0] sm:$0xff]
        %v3893 = vld [vmem:[#allocation2 + $0xb8] sm:$0xff]
        %v3894 = vld [vmem:[#allocation2 + $0xc0] sm:$0xff]
        %v3895 = vld [vmem:[#allocation2 + $0xc8] sm:$0xff]
        %v3896 = vld [vmem:[#allocation2 + $0xd0] sm:$0xff]
        %v3897 = vld [vmem:[#allocation2 + $0xd8] sm:$0xff]
        %v3898 = vld [vmem:[#allocation2 + $0xe0] sm:$0xff]
        %v3899 = vld [vmem:[#allocation2 + $0xe8] sm:$0xff]
        %v3900 = vld [vmem:[#allocation2 + $0xf0] sm:$0xff]
        %v3901 = vld [vmem:[#allocation2 + $0xf8] sm:$0xff]
        %v3902 = vld [vmem:[#allocation2 + $0x100] sm:$0xff]
        %v3903 = vld [vmem:[#allocation2 + $0x108] sm:$0xff]
        %v3904 = vld [vmem:[#allocation2 + $0x110] sm:$0xff]
        %v3905 = vld [vmem:[#allocation2 + $0x118] sm:$0xff]
        %v3906 = vld [vmem:[#allocation2 + $0x120] sm:$0xff]
        %v3907 = vld [vmem:[#allocation2 + $0x128] sm:$0xff]
        %v3908 = vld [vmem:[#allocation2 + $0x130] sm:$0xff]
        %v3909 = vld [vmem:[#allocation2 + $0x138] sm:$0xff]
        %v3910 = vld [vmem:[#allocation2 + $0x140] sm:$0xff]
        %v3911 = vld [vmem:[#allocation2 + $0x148] sm:$0xff]
        %v3912 = vld [vmem:[#allocation2 + $0x150] sm:$0xff]
        %v3913 = vld [vmem:[#allocation2 + $0x158] sm:$0xff]
        %v3914 = vld [vmem:[#allocation2 + $0x160] sm:$0xff]
        %v3915 = vld [vmem:[#allocation2 + $0x168] sm:$0xff]
        %v3916 = vld [vmem:[#allocation2 + $0x170] sm:$0xff]
        %v3917 = vld [vmem:[#allocation2 + $0x178] sm:$0xff]
        %v3918 = vld [vmem:[#allocation2 + $0x180] sm:$0xff]
        %v3919 = vld [vmem:[#allocation2 + $0x188] sm:$0xff]
        %v3920 = vld [vmem:[#allocation2 + $0x190] sm:$0xff]
        %v3921 = vld [vmem:[#allocation2 + $0x198] sm:$0xff]
        %v3922 = vld [vmem:[#allocation2 + $0x1a0] sm:$0xff]
        %v3923 = vld [vmem:[#allocation2 + $0x1a8] sm:$0xff]
        %v3924 = vld [vmem:[#allocation2 + $0x1b0] sm:$0xff]
        %v3925 = vld [vmem:[#allocation2 + $0x1b8] sm:$0xff]
        %v3926 = vld [vmem:[#allocation2 + $0x1c0] sm:$0xff]
        %v3927 = vld [vmem:[#allocation2 + $0x1c8] sm:$0xff]
        %v3928 = vld [vmem:[#allocation2 + $0x1d0] sm:$0xff]
        %v3929 = vld [vmem:[#allocation2 + $0x1d8] sm:$0xff]
        %v3930 = vld [vmem:[#allocation2 + $0x1e0] sm:$0xff]
        %v3931 = vld [vmem:[#allocation2 + $0x1e8] sm:$0xff]
        %v3932 = vld [vmem:[#allocation2 + $0x1f0] sm:$0xff]
        %v3933 = vld [vmem:[#allocation2 + $0x1f8] sm:$0xff]
        %v3934 = vld [vmem:[#allocation2 + $0x200] sm:$0xff]
        %v3935 = vld [vmem:[#allocation2 + $0x208] sm:$0xff]
        %v3936 = vld [vmem:[#allocation2 + $0x210] sm:$0xff]
        %v3937 = vld [vmem:[#allocation2 + $0x218] sm:$0xff]
        %v3938 = vld [vmem:[#allocation2 + $0x220] sm:$0xff]
        %v3939 = vld [vmem:[#allocation2 + $0x228] sm:$0xff]
        %v3940 = vld [vmem:[#allocation2 + $0x230] sm:$0xff]
        %v3941 = vld [vmem:[#allocation2 + $0x238] sm:$0xff]
        %v3942 = vld [vmem:[#allocation2 + $0x240] sm:$0xff]
        %v3943 = vld [vmem:[#allocation2 + $0x248] sm:$0xff]
        %v3944 = vld [vmem:[#allocation2 + $0x250] sm:$0xff]
        %v3945 = vld [vmem:[#allocation2 + $0x258] sm:$0xff]
        %v3946 = vld [vmem:[#allocation2 + $0x260] sm:$0xff]
        %v3947 = vld [vmem:[#allocation2 + $0x268] sm:$0xff]
        %v3948 = vld [vmem:[#allocation2 + $0x270] sm:$0xff]
        %v3949 = vld [vmem:[#allocation2 + $0x278] sm:$0xff]
        %v3950 = vld [vmem:[#allocation2 + $0x280] sm:$0xff]
        %v3951 = vld [vmem:[#allocation2 + $0x288] sm:$0xff]
        %v3952 = vld [vmem:[#allocation2 + $0x290] sm:$0xff]
        %v3953 = vld [vmem:[#allocation2 + $0x298] sm:$0xff]
        %v3954 = vld [vmem:[#allocation2 + $0x2a0] sm:$0xff]
        %v3955 = vld [vmem:[#allocation2 + $0x2a8] sm:$0xff]
        %v3956 = vld [vmem:[#allocation2 + $0x2b0] sm:$0xff]
        %v3957 = vld [vmem:[#allocation2 + $0x2b8] sm:$0xff]
        %v3958 = vld [vmem:[#allocation2 + $0x2c0] sm:$0xff]
        %v3959 = vld [vmem:[#allocation2 + $0x2c8] sm:$0xff]
        %v3960 = vld [vmem:[#allocation2 + $0x2d0] sm:$0xff]
        %v3961 = vld [vmem:[#allocation2 + $0x2d8] sm:$0xff]
        %v3962 = vld [vmem:[#allocation2 + $0x2e0] sm:$0xff]
        %v3963 = vld [vmem:[#allocation2 + $0x2e8] sm:$0xff]
        %v3964 = vld [vmem:[#allocation2 + $0x2f0] sm:$0xff]
        %v3965 = vld [vmem:[#allocation2 + $0x2f8] sm:$0xff]
        %v3966 = vld [vmem:[#allocation2 + $0x300] sm:$0xff]
        %v3967 = vld [vmem:[#allocation2 + $0x308] sm:$0xff]
        %v3968 = vld [vmem:[#allocation2 + $0x310] sm:$0xff]
        %v3969 = vld [vmem:[#allocation2 + $0x318] sm:$0xff]
        %v3970 = vld [vmem:[#allocation2 + $0x320] sm:$0xff]
        %v3971 = vld [vmem:[#allocation2 + $0x328] sm:$0xff]
        %v3972 = vld [vmem:[#allocation2 + $0x330] sm:$0xff]
        %v3973 = vld [vmem:[#allocation2 + $0x338] sm:$0xff]
        %v3974 = vld [vmem:[#allocation2 + $0x340] sm:$0xff]
        %v3975 = vld [vmem:[#allocation2 + $0x348] sm:$0xff]
        %v3976 = vld [vmem:[#allocation2 + $0x350] sm:$0xff]
        %v3977 = vld [vmem:[#allocation2 + $0x358] sm:$0xff]
        %v3978 = vld [vmem:[#allocation2 + $0x360] sm:$0xff]
        %v3979 = vld [vmem:[#allocation2 + $0x368] sm:$0xff]
        %v3980 = vld [vmem:[#allocation2 + $0x370] sm:$0xff]
        %v3981 = vld [vmem:[#allocation2 + $0x378] sm:$0xff]
        %v3982 = vld [vmem:[#allocation2 + $0x380] sm:$0xff]
        %v3983 = vld [vmem:[#allocation2 + $0x388] sm:$0xff]
        %v3984 = vld [vmem:[#allocation2 + $0x390] sm:$0xff]
        %v3985 = vld [vmem:[#allocation2 + $0x398] sm:$0xff]
        %v3986 = vld [vmem:[#allocation2 + $0x3a0] sm:$0xff]
        %v3987 = vld [vmem:[#allocation2 + $0x3a8] sm:$0xff]
        %v3988 = vld [vmem:[#allocation2 + $0x3b0] sm:$0xff]
        %v3989 = vld [vmem:[#allocation2 + $0x3b8] sm:$0xff]
        %v3990 = vld [vmem:[#allocation2 + $0x3c0] sm:$0xff]
        %v3991 = vld [vmem:[#allocation2 + $0x3c8] sm:$0xff]
        %v3992 = vld [vmem:[#allocation2 + $0x3d0] sm:$0xff]
        %v3993 = vld [vmem:[#allocation2 + $0x3d8] sm:$0xff]
        %v3994 = vld [vmem:[#allocation2 + $0x3e0] sm:$0xff]
        %v3995 = vld [vmem:[#allocation2 + $0x3e8] sm:$0xff]
        %v3996 = vld [vmem:[#allocation2 + $0x3f0] sm:$0xff]
        %v3997 = vld [vmem:[#allocation2 + $0x3f8] sm:$0xff]
        %3998 = vmax.xlane.f32.xlu0 %v3870
        %v3999 = vpop.xlane.xlu0 %3998
        %4000 = vmax.xlane.f32.xlu0 %v3871
        %v4001 = vpop.xlane.xlu0 %4000
        %4002 = vmax.xlane.f32.xlu0 %v3872
        %v4003 = vpop.xlane.xlu0 %4002
        %4004 = vmax.xlane.f32.xlu0 %v3873
        %v4005 = vpop.xlane.xlu0 %4004
        %4006 = vmax.xlane.f32.xlu0 %v3874
        %v4007 = vpop.xlane.xlu0 %4006
        %4008 = vmax.xlane.f32.xlu0 %v3875
        %v4009 = vpop.xlane.xlu0 %4008
        %4010 = vmax.xlane.f32.xlu0 %v3876
        %v4011 = vpop.xlane.xlu0 %4010
        %4012 = vmax.xlane.f32.xlu0 %v3877
        %v4013 = vpop.xlane.xlu0 %4012
        %4014 = vmax.xlane.f32.xlu0 %v3878
        %v4015 = vpop.xlane.xlu0 %4014
        %4016 = vmax.xlane.f32.xlu0 %v3879
        %v4017 = vpop.xlane.xlu0 %4016
        %4018 = vmax.xlane.f32.xlu0 %v3880
        %v4019 = vpop.xlane.xlu0 %4018
        %4020 = vmax.xlane.f32.xlu0 %v3881
        %v4021 = vpop.xlane.xlu0 %4020
        %4022 = vmax.xlane.f32.xlu0 %v3882
        %v4023 = vpop.xlane.xlu0 %4022
        %4024 = vmax.xlane.f32.xlu0 %v3883
        %v4025 = vpop.xlane.xlu0 %4024
        %4026 = vmax.xlane.f32.xlu0 %v3884
        %v4027 = vpop.xlane.xlu0 %4026
        %4028 = vmax.xlane.f32.xlu0 %v3885
        %v4029 = vpop.xlane.xlu0 %4028
        %4030 = vmax.xlane.f32.xlu0 %v3886
        %v4031 = vpop.xlane.xlu0 %4030
        %4032 = vmax.xlane.f32.xlu0 %v3887
        %v4033 = vpop.xlane.xlu0 %4032
        %4034 = vmax.xlane.f32.xlu0 %v3888
        %v4035 = vpop.xlane.xlu0 %4034
        %4036 = vmax.xlane.f32.xlu0 %v3889
        %v4037 = vpop.xlane.xlu0 %4036
        %4038 = vmax.xlane.f32.xlu0 %v3890
        %v4039 = vpop.xlane.xlu0 %4038
        %4040 = vmax.xlane.f32.xlu0 %v3891
        %v4041 = vpop.xlane.xlu0 %4040
        %4042 = vmax.xlane.f32.xlu0 %v3892
        %v4043 = vpop.xlane.xlu0 %4042
        %4044 = vmax.xlane.f32.xlu0 %v3893
        %v4045 = vpop.xlane.xlu0 %4044
        %4046 = vmax.xlane.f32.xlu0 %v3894
        %v4047 = vpop.xlane.xlu0 %4046
        %4048 = vmax.xlane.f32.xlu0 %v3895
        %v4049 = vpop.xlane.xlu0 %4048
        %4050 = vmax.xlane.f32.xlu0 %v3896
        %v4051 = vpop.xlane.xlu0 %4050
        %4052 = vmax.xlane.f32.xlu0 %v3897
        %v4053 = vpop.xlane.xlu0 %4052
        %4054 = vmax.xlane.f32.xlu0 %v3898
        %v4055 = vpop.xlane.xlu0 %4054
        %4056 = vmax.xlane.f32.xlu0 %v3899
        %v4057 = vpop.xlane.xlu0 %4056
        %4058 = vmax.xlane.f32.xlu0 %v3900
        %v4059 = vpop.xlane.xlu0 %4058
        %4060 = vmax.xlane.f32.xlu0 %v3901
        %v4061 = vpop.xlane.xlu0 %4060
        %4062 = vmax.xlane.f32.xlu0 %v3902
        %v4063 = vpop.xlane.xlu0 %4062
        %4064 = vmax.xlane.f32.xlu0 %v3903
        %v4065 = vpop.xlane.xlu0 %4064
        %4066 = vmax.xlane.f32.xlu0 %v3904
        %v4067 = vpop.xlane.xlu0 %4066
        %4068 = vmax.xlane.f32.xlu0 %v3905
        %v4069 = vpop.xlane.xlu0 %4068
        %4070 = vmax.xlane.f32.xlu0 %v3906
        %v4071 = vpop.xlane.xlu0 %4070
        %4072 = vmax.xlane.f32.xlu0 %v3907
        %v4073 = vpop.xlane.xlu0 %4072
        %4074 = vmax.xlane.f32.xlu0 %v3908
        %v4075 = vpop.xlane.xlu0 %4074
        %4076 = vmax.xlane.f32.xlu0 %v3909
        %v4077 = vpop.xlane.xlu0 %4076
        %4078 = vmax.xlane.f32.xlu0 %v3910
        %v4079 = vpop.xlane.xlu0 %4078
        %4080 = vmax.xlane.f32.xlu0 %v3911
        %v4081 = vpop.xlane.xlu0 %4080
        %4082 = vmax.xlane.f32.xlu0 %v3912
        %v4083 = vpop.xlane.xlu0 %4082
        %4084 = vmax.xlane.f32.xlu0 %v3913
        %v4085 = vpop.xlane.xlu0 %4084
        %4086 = vmax.xlane.f32.xlu0 %v3914
        %v4087 = vpop.xlane.xlu0 %4086
        %4088 = vmax.xlane.f32.xlu0 %v3915
        %v4089 = vpop.xlane.xlu0 %4088
        %4090 = vmax.xlane.f32.xlu0 %v3916
        %v4091 = vpop.xlane.xlu0 %4090
        %4092 = vmax.xlane.f32.xlu0 %v3917
        %v4093 = vpop.xlane.xlu0 %4092
        %4094 = vmax.xlane.f32.xlu0 %v3918
        %v4095 = vpop.xlane.xlu0 %4094
        %4096 = vmax.xlane.f32.xlu0 %v3919
        %v4097 = vpop.xlane.xlu0 %4096
        %4098 = vmax.xlane.f32.xlu0 %v3920
        %v4099 = vpop.xlane.xlu0 %4098
        %4100 = vmax.xlane.f32.xlu0 %v3921
        %v4101 = vpop.xlane.xlu0 %4100
        %4102 = vmax.xlane.f32.xlu0 %v3922
        %v4103 = vpop.xlane.xlu0 %4102
        %4104 = vmax.xlane.f32.xlu0 %v3923
        %v4105 = vpop.xlane.xlu0 %4104
        %4106 = vmax.xlane.f32.xlu0 %v3924
        %v4107 = vpop.xlane.xlu0 %4106
        %4108 = vmax.xlane.f32.xlu0 %v3925
        %v4109 = vpop.xlane.xlu0 %4108
        %4110 = vmax.xlane.f32.xlu0 %v3926
        %v4111 = vpop.xlane.xlu0 %4110
        %4112 = vmax.xlane.f32.xlu0 %v3927
        %v4113 = vpop.xlane.xlu0 %4112
        %4114 = vmax.xlane.f32.xlu0 %v3928
        %v4115 = vpop.xlane.xlu0 %4114
        %4116 = vmax.xlane.f32.xlu0 %v3929
        %v4117 = vpop.xlane.xlu0 %4116
        %4118 = vmax.xlane.f32.xlu0 %v3930
        %v4119 = vpop.xlane.xlu0 %4118
        %4120 = vmax.xlane.f32.xlu0 %v3931
        %v4121 = vpop.xlane.xlu0 %4120
        %4122 = vmax.xlane.f32.xlu0 %v3932
        %v4123 = vpop.xlane.xlu0 %4122
        %4124 = vmax.xlane.f32.xlu0 %v3933
        %v4125 = vpop.xlane.xlu0 %4124
        %4126 = vmax.xlane.f32.xlu0 %v3934
        %v4127 = vpop.xlane.xlu0 %4126
        %4128 = vmax.xlane.f32.xlu0 %v3935
        %v4129 = vpop.xlane.xlu0 %4128
        %4130 = vmax.xlane.f32.xlu0 %v3936
        %v4131 = vpop.xlane.xlu0 %4130
        %4132 = vmax.xlane.f32.xlu0 %v3937
        %v4133 = vpop.xlane.xlu0 %4132
        %4134 = vmax.xlane.f32.xlu0 %v3938
        %v4135 = vpop.xlane.xlu0 %4134
        %4136 = vmax.xlane.f32.xlu0 %v3939
        %v4137 = vpop.xlane.xlu0 %4136
        %4138 = vmax.xlane.f32.xlu0 %v3940
        %v4139 = vpop.xlane.xlu0 %4138
        %4140 = vmax.xlane.f32.xlu0 %v3941
        %v4141 = vpop.xlane.xlu0 %4140
        %4142 = vmax.xlane.f32.xlu0 %v3942
        %v4143 = vpop.xlane.xlu0 %4142
        %4144 = vmax.xlane.f32.xlu0 %v3943
        %v4145 = vpop.xlane.xlu0 %4144
        %4146 = vmax.xlane.f32.xlu0 %v3944
        %v4147 = vpop.xlane.xlu0 %4146
        %4148 = vmax.xlane.f32.xlu0 %v3945
        %v4149 = vpop.xlane.xlu0 %4148
        %4150 = vmax.xlane.f32.xlu0 %v3946
        %v4151 = vpop.xlane.xlu0 %4150
        %4152 = vmax.xlane.f32.xlu0 %v3947
        %v4153 = vpop.xlane.xlu0 %4152
        %4154 = vmax.xlane.f32.xlu0 %v3948
        %v4155 = vpop.xlane.xlu0 %4154
        %4156 = vmax.xlane.f32.xlu0 %v3949
        %v4157 = vpop.xlane.xlu0 %4156
        %4158 = vmax.xlane.f32.xlu0 %v3950
        %v4159 = vpop.xlane.xlu0 %4158
        %4160 = vmax.xlane.f32.xlu0 %v3951
        %v4161 = vpop.xlane.xlu0 %4160
        %4162 = vmax.xlane.f32.xlu0 %v3952
        %v4163 = vpop.xlane.xlu0 %4162
        %4164 = vmax.xlane.f32.xlu0 %v3953
        %v4165 = vpop.xlane.xlu0 %4164
        %4166 = vmax.xlane.f32.xlu0 %v3954
        %v4167 = vpop.xlane.xlu0 %4166
        %4168 = vmax.xlane.f32.xlu0 %v3955
        %v4169 = vpop.xlane.xlu0 %4168
        %4170 = vmax.xlane.f32.xlu0 %v3956
        %v4171 = vpop.xlane.xlu0 %4170
        %4172 = vmax.xlane.f32.xlu0 %v3957
        %v4173 = vpop.xlane.xlu0 %4172
        %4174 = vmax.xlane.f32.xlu0 %v3958
        %v4175 = vpop.xlane.xlu0 %4174
        %4176 = vmax.xlane.f32.xlu0 %v3959
        %v4177 = vpop.xlane.xlu0 %4176
        %4178 = vmax.xlane.f32.xlu0 %v3960
        %v4179 = vpop.xlane.xlu0 %4178
        %4180 = vmax.xlane.f32.xlu0 %v3961
        %v4181 = vpop.xlane.xlu0 %4180
        %4182 = vmax.xlane.f32.xlu0 %v3962
        %v4183 = vpop.xlane.xlu0 %4182
        %4184 = vmax.xlane.f32.xlu0 %v3963
        %v4185 = vpop.xlane.xlu0 %4184
        %4186 = vmax.xlane.f32.xlu0 %v3964
        %v4187 = vpop.xlane.xlu0 %4186
        %4188 = vmax.xlane.f32.xlu0 %v3965
        %v4189 = vpop.xlane.xlu0 %4188
        %4190 = vmax.xlane.f32.xlu0 %v3966
        %v4191 = vpop.xlane.xlu0 %4190
        %4192 = vmax.xlane.f32.xlu0 %v3967
        %v4193 = vpop.xlane.xlu0 %4192
        %4194 = vmax.xlane.f32.xlu0 %v3968
        %v4195 = vpop.xlane.xlu0 %4194
        %4196 = vmax.xlane.f32.xlu0 %v3969
        %v4197 = vpop.xlane.xlu0 %4196
        %4198 = vmax.xlane.f32.xlu0 %v3970
        %v4199 = vpop.xlane.xlu0 %4198
        %4200 = vmax.xlane.f32.xlu0 %v3971
        %v4201 = vpop.xlane.xlu0 %4200
        %4202 = vmax.xlane.f32.xlu0 %v3972
        %v4203 = vpop.xlane.xlu0 %4202
        %4204 = vmax.xlane.f32.xlu0 %v3973
        %v4205 = vpop.xlane.xlu0 %4204
        %4206 = vmax.xlane.f32.xlu0 %v3974
        %v4207 = vpop.xlane.xlu0 %4206
        %4208 = vmax.xlane.f32.xlu0 %v3975
        %v4209 = vpop.xlane.xlu0 %4208
        %4210 = vmax.xlane.f32.xlu0 %v3976
        %v4211 = vpop.xlane.xlu0 %4210
        %4212 = vmax.xlane.f32.xlu0 %v3977
        %v4213 = vpop.xlane.xlu0 %4212
        %4214 = vmax.xlane.f32.xlu0 %v3978
        %v4215 = vpop.xlane.xlu0 %4214
        %4216 = vmax.xlane.f32.xlu0 %v3979
        %v4217 = vpop.xlane.xlu0 %4216
        %4218 = vmax.xlane.f32.xlu0 %v3980
        %v4219 = vpop.xlane.xlu0 %4218
        %4220 = vmax.xlane.f32.xlu0 %v3981
        %v4221 = vpop.xlane.xlu0 %4220
        %4222 = vmax.xlane.f32.xlu0 %v3982
        %v4223 = vpop.xlane.xlu0 %4222
        %4224 = vmax.xlane.f32.xlu0 %v3983
        %v4225 = vpop.xlane.xlu0 %4224
        %4226 = vmax.xlane.f32.xlu0 %v3984
        %v4227 = vpop.xlane.xlu0 %4226
        %4228 = vmax.xlane.f32.xlu0 %v3985
        %v4229 = vpop.xlane.xlu0 %4228
        %4230 = vmax.xlane.f32.xlu0 %v3986
        %v4231 = vpop.xlane.xlu0 %4230
        %4232 = vmax.xlane.f32.xlu0 %v3987
        %v4233 = vpop.xlane.xlu0 %4232
        %4234 = vmax.xlane.f32.xlu0 %v3988
        %v4235 = vpop.xlane.xlu0 %4234
        %4236 = vmax.xlane.f32.xlu0 %v3989
        %v4237 = vpop.xlane.xlu0 %4236
        %4238 = vmax.xlane.f32.xlu0 %v3990
        %v4239 = vpop.xlane.xlu0 %4238
        %4240 = vmax.xlane.f32.xlu0 %v3991
        %v4241 = vpop.xlane.xlu0 %4240
        %4242 = vmax.xlane.f32.xlu0 %v3992
        %v4243 = vpop.xlane.xlu0 %4242
        %4244 = vmax.xlane.f32.xlu0 %v3993
        %v4245 = vpop.xlane.xlu0 %4244
        %4246 = vmax.xlane.f32.xlu0 %v3994
        %v4247 = vpop.xlane.xlu0 %4246
        %4248 = vmax.xlane.f32.xlu0 %v3995
        %v4249 = vpop.xlane.xlu0 %4248
        %4250 = vmax.xlane.f32.xlu0 %v3996
        %v4251 = vpop.xlane.xlu0 %4250
        %4252 = vmax.xlane.f32.xlu0 %v3997
        %v4253 = vpop.xlane.xlu0 %4252
        %vm4254 = vcmask 7168
        %4255 = vst.msk [vmem:[%s301] sm:$0xff] %vm4254, %v3999
        %4256 = vst.msk [vmem:[%s301 + $0x8] sm:$0xff] %vm4254, %v4001
        %4257 = vst.msk [vmem:[%s301 + $0x10] sm:$0xff] %vm4254, %v4003
        %4258 = vst.msk [vmem:[%s301 + $0x18] sm:$0xff] %vm4254, %v4005
        %4259 = vst.msk [vmem:[%s301 + $0x20] sm:$0xff] %vm4254, %v4007
        %4260 = vst.msk [vmem:[%s301 + $0x28] sm:$0xff] %vm4254, %v4009
        %4261 = vst.msk [vmem:[%s301 + $0x30] sm:$0xff] %vm4254, %v4011
        %4262 = vst.msk [vmem:[%s301 + $0x38] sm:$0xff] %vm4254, %v4013
        %4263 = vst.msk [vmem:[%s301 + $0x40] sm:$0xff] %vm4254, %v4015
        %4264 = vst.msk [vmem:[%s301 + $0x48] sm:$0xff] %vm4254, %v4017
        %4265 = vst.msk [vmem:[%s301 + $0x50] sm:$0xff] %vm4254, %v4019
        %4266 = vst.msk [vmem:[%s301 + $0x58] sm:$0xff] %vm4254, %v4021
        %4267 = vst.msk [vmem:[%s301 + $0x60] sm:$0xff] %vm4254, %v4023
        %4268 = vst.msk [vmem:[%s301 + $0x68] sm:$0xff] %vm4254, %v4025
        %4269 = vst.msk [vmem:[%s301 + $0x70] sm:$0xff] %vm4254, %v4027
        %4270 = vst.msk [vmem:[%s301 + $0x78] sm:$0xff] %vm4254, %v4029
        %4271 = vst.msk [vmem:[%s301 + $0x80] sm:$0xff] %vm4254, %v4031
        %4272 = vst.msk [vmem:[%s301 + $0x88] sm:$0xff] %vm4254, %v4033
        %4273 = vst.msk [vmem:[%s301 + $0x90] sm:$0xff] %vm4254, %v4035
        %4274 = vst.msk [vmem:[%s301 + $0x98] sm:$0xff] %vm4254, %v4037
        %4275 = vst.msk [vmem:[%s301 + $0xa0] sm:$0xff] %vm4254, %v4039
        %4276 = vst.msk [vmem:[%s301 + $0xa8] sm:$0xff] %vm4254, %v4041
        %4277 = vst.msk [vmem:[%s301 + $0xb0] sm:$0xff] %vm4254, %v4043
        %4278 = vst.msk [vmem:[%s301 + $0xb8] sm:$0xff] %vm4254, %v4045
        %4279 = vst.msk [vmem:[%s301 + $0xc0] sm:$0xff] %vm4254, %v4047
        %4280 = vst.msk [vmem:[%s301 + $0xc8] sm:$0xff] %vm4254, %v4049
        %4281 = vst.msk [vmem:[%s301 + $0xd0] sm:$0xff] %vm4254, %v4051
        %4282 = vst.msk [vmem:[%s301 + $0xd8] sm:$0xff] %vm4254, %v4053
        %4283 = vst.msk [vmem:[%s301 + $0xe0] sm:$0xff] %vm4254, %v4055
        %4284 = vst.msk [vmem:[%s301 + $0xe8] sm:$0xff] %vm4254, %v4057
        %4285 = vst.msk [vmem:[%s301 + $0xf0] sm:$0xff] %vm4254, %v4059
        %4286 = vst.msk [vmem:[%s301 + $0xf8] sm:$0xff] %vm4254, %v4061
        %4287 = vst.msk [vmem:[%s301 + $0x100] sm:$0xff] %vm4254, %v4063
        %4288 = vst.msk [vmem:[%s301 + $0x108] sm:$0xff] %vm4254, %v4065
        %4289 = vst.msk [vmem:[%s301 + $0x110] sm:$0xff] %vm4254, %v4067
        %4290 = vst.msk [vmem:[%s301 + $0x118] sm:$0xff] %vm4254, %v4069
        %4291 = vst.msk [vmem:[%s301 + $0x120] sm:$0xff] %vm4254, %v4071
        %4292 = vst.msk [vmem:[%s301 + $0x128] sm:$0xff] %vm4254, %v4073
        %4293 = vst.msk [vmem:[%s301 + $0x130] sm:$0xff] %vm4254, %v4075
        %4294 = vst.msk [vmem:[%s301 + $0x138] sm:$0xff] %vm4254, %v4077
        %4295 = vst.msk [vmem:[%s301 + $0x140] sm:$0xff] %vm4254, %v4079
        %4296 = vst.msk [vmem:[%s301 + $0x148] sm:$0xff] %vm4254, %v4081
        %4297 = vst.msk [vmem:[%s301 + $0x150] sm:$0xff] %vm4254, %v4083
        %4298 = vst.msk [vmem:[%s301 + $0x158] sm:$0xff] %vm4254, %v4085
        %4299 = vst.msk [vmem:[%s301 + $0x160] sm:$0xff] %vm4254, %v4087
        %4300 = vst.msk [vmem:[%s301 + $0x168] sm:$0xff] %vm4254, %v4089
        %4301 = vst.msk [vmem:[%s301 + $0x170] sm:$0xff] %vm4254, %v4091
        %4302 = vst.msk [vmem:[%s301 + $0x178] sm:$0xff] %vm4254, %v4093
        %4303 = vst.msk [vmem:[%s301 + $0x180] sm:$0xff] %vm4254, %v4095
        %4304 = vst.msk [vmem:[%s301 + $0x188] sm:$0xff] %vm4254, %v4097
        %4305 = vst.msk [vmem:[%s301 + $0x190] sm:$0xff] %vm4254, %v4099
        %4306 = vst.msk [vmem:[%s301 + $0x198] sm:$0xff] %vm4254, %v4101
        %4307 = vst.msk [vmem:[%s301 + $0x1a0] sm:$0xff] %vm4254, %v4103
        %4308 = vst.msk [vmem:[%s301 + $0x1a8] sm:$0xff] %vm4254, %v4105
        %4309 = vst.msk [vmem:[%s301 + $0x1b0] sm:$0xff] %vm4254, %v4107
        %4310 = vst.msk [vmem:[%s301 + $0x1b8] sm:$0xff] %vm4254, %v4109
        %4311 = vst.msk [vmem:[%s301 + $0x1c0] sm:$0xff] %vm4254, %v4111
        %4312 = vst.msk [vmem:[%s301 + $0x1c8] sm:$0xff] %vm4254, %v4113
        %4313 = vst.msk [vmem:[%s301 + $0x1d0] sm:$0xff] %vm4254, %v4115
        %4314 = vst.msk [vmem:[%s301 + $0x1d8] sm:$0xff] %vm4254, %v4117
        %4315 = vst.msk [vmem:[%s301 + $0x1e0] sm:$0xff] %vm4254, %v4119
        %4316 = vst.msk [vmem:[%s301 + $0x1e8] sm:$0xff] %vm4254, %v4121
        %4317 = vst.msk [vmem:[%s301 + $0x1f0] sm:$0xff] %vm4254, %v4123
        %4318 = vst.msk [vmem:[%s301 + $0x1f8] sm:$0xff] %vm4254, %v4125
        %4319 = vst.msk [vmem:[%s301 + $0x200] sm:$0xff] %vm4254, %v4127
        %4320 = vst.msk [vmem:[%s301 + $0x208] sm:$0xff] %vm4254, %v4129
        %4321 = vst.msk [vmem:[%s301 + $0x210] sm:$0xff] %vm4254, %v4131
        %4322 = vst.msk [vmem:[%s301 + $0x218] sm:$0xff] %vm4254, %v4133
        %4323 = vst.msk [vmem:[%s301 + $0x220] sm:$0xff] %vm4254, %v4135
        %4324 = vst.msk [vmem:[%s301 + $0x228] sm:$0xff] %vm4254, %v4137
        %4325 = vst.msk [vmem:[%s301 + $0x230] sm:$0xff] %vm4254, %v4139
        %4326 = vst.msk [vmem:[%s301 + $0x238] sm:$0xff] %vm4254, %v4141
        %4327 = vst.msk [vmem:[%s301 + $0x240] sm:$0xff] %vm4254, %v4143
        %4328 = vst.msk [vmem:[%s301 + $0x248] sm:$0xff] %vm4254, %v4145
        %4329 = vst.msk [vmem:[%s301 + $0x250] sm:$0xff] %vm4254, %v4147
        %4330 = vst.msk [vmem:[%s301 + $0x258] sm:$0xff] %vm4254, %v4149
        %4331 = vst.msk [vmem:[%s301 + $0x260] sm:$0xff] %vm4254, %v4151
        %4332 = vst.msk [vmem:[%s301 + $0x268] sm:$0xff] %vm4254, %v4153
        %4333 = vst.msk [vmem:[%s301 + $0x270] sm:$0xff] %vm4254, %v4155
        %4334 = vst.msk [vmem:[%s301 + $0x278] sm:$0xff] %vm4254, %v4157
        %4335 = vst.msk [vmem:[%s301 + $0x280] sm:$0xff] %vm4254, %v4159
        %4336 = vst.msk [vmem:[%s301 + $0x288] sm:$0xff] %vm4254, %v4161
        %4337 = vst.msk [vmem:[%s301 + $0x290] sm:$0xff] %vm4254, %v4163
        %4338 = vst.msk [vmem:[%s301 + $0x298] sm:$0xff] %vm4254, %v4165
        %4339 = vst.msk [vmem:[%s301 + $0x2a0] sm:$0xff] %vm4254, %v4167
        %4340 = vst.msk [vmem:[%s301 + $0x2a8] sm:$0xff] %vm4254, %v4169
        %4341 = vst.msk [vmem:[%s301 + $0x2b0] sm:$0xff] %vm4254, %v4171
        %4342 = vst.msk [vmem:[%s301 + $0x2b8] sm:$0xff] %vm4254, %v4173
        %4343 = vst.msk [vmem:[%s301 + $0x2c0] sm:$0xff] %vm4254, %v4175
        %4344 = vst.msk [vmem:[%s301 + $0x2c8] sm:$0xff] %vm4254, %v4177
        %4345 = vst.msk [vmem:[%s301 + $0x2d0] sm:$0xff] %vm4254, %v4179
        %4346 = vst.msk [vmem:[%s301 + $0x2d8] sm:$0xff] %vm4254, %v4181
        %4347 = vst.msk [vmem:[%s301 + $0x2e0] sm:$0xff] %vm4254, %v4183
        %4348 = vst.msk [vmem:[%s301 + $0x2e8] sm:$0xff] %vm4254, %v4185
        %4349 = vst.msk [vmem:[%s301 + $0x2f0] sm:$0xff] %vm4254, %v4187
        %4350 = vst.msk [vmem:[%s301 + $0x2f8] sm:$0xff] %vm4254, %v4189
        %4351 = vst.msk [vmem:[%s301 + $0x300] sm:$0xff] %vm4254, %v4191
        %4352 = vst.msk [vmem:[%s301 + $0x308] sm:$0xff] %vm4254, %v4193
        %4353 = vst.msk [vmem:[%s301 + $0x310] sm:$0xff] %vm4254, %v4195
        %4354 = vst.msk [vmem:[%s301 + $0x318] sm:$0xff] %vm4254, %v4197
        %4355 = vst.msk [vmem:[%s301 + $0x320] sm:$0xff] %vm4254, %v4199
        %4356 = vst.msk [vmem:[%s301 + $0x328] sm:$0xff] %vm4254, %v4201
        %4357 = vst.msk [vmem:[%s301 + $0x330] sm:$0xff] %vm4254, %v4203
        %4358 = vst.msk [vmem:[%s301 + $0x338] sm:$0xff] %vm4254, %v4205
        %4359 = vst.msk [vmem:[%s301 + $0x340] sm:$0xff] %vm4254, %v4207
        %4360 = vst.msk [vmem:[%s301 + $0x348] sm:$0xff] %vm4254, %v4209
        %4361 = vst.msk [vmem:[%s301 + $0x350] sm:$0xff] %vm4254, %v4211
        %4362 = vst.msk [vmem:[%s301 + $0x358] sm:$0xff] %vm4254, %v4213
        %4363 = vst.msk [vmem:[%s301 + $0x360] sm:$0xff] %vm4254, %v4215
        %4364 = vst.msk [vmem:[%s301 + $0x368] sm:$0xff] %vm4254, %v4217
        %4365 = vst.msk [vmem:[%s301 + $0x370] sm:$0xff] %vm4254, %v4219
        %4366 = vst.msk [vmem:[%s301 + $0x378] sm:$0xff] %vm4254, %v4221
        %4367 = vst.msk [vmem:[%s301 + $0x380] sm:$0xff] %vm4254, %v4223
        %4368 = vst.msk [vmem:[%s301 + $0x388] sm:$0xff] %vm4254, %v4225
        %4369 = vst.msk [vmem:[%s301 + $0x390] sm:$0xff] %vm4254, %v4227
        %4370 = vst.msk [vmem:[%s301 + $0x398] sm:$0xff] %vm4254, %v4229
        %4371 = vst.msk [vmem:[%s301 + $0x3a0] sm:$0xff] %vm4254, %v4231
        %4372 = vst.msk [vmem:[%s301 + $0x3a8] sm:$0xff] %vm4254, %v4233
        %4373 = vst.msk [vmem:[%s301 + $0x3b0] sm:$0xff] %vm4254, %v4235
        %4374 = vst.msk [vmem:[%s301 + $0x3b8] sm:$0xff] %vm4254, %v4237
        %4375 = vst.msk [vmem:[%s301 + $0x3c0] sm:$0xff] %vm4254, %v4239
        %4376 = vst.msk [vmem:[%s301 + $0x3c8] sm:$0xff] %vm4254, %v4241
        %4377 = vst.msk [vmem:[%s301 + $0x3d0] sm:$0xff] %vm4254, %v4243
        %4378 = vst.msk [vmem:[%s301 + $0x3d8] sm:$0xff] %vm4254, %v4245
        %4379 = vst.msk [vmem:[%s301 + $0x3e0] sm:$0xff] %vm4254, %v4247
        %4380 = vst.msk [vmem:[%s301 + $0x3e8] sm:$0xff] %vm4254, %v4249
        %4381 = vst.msk [vmem:[%s301 + $0x3f0] sm:$0xff] %vm4254, %v4251
        %4382 = vst.msk [vmem:[%s301 + $0x3f8] sm:$0xff] %vm4254, %v4253
      $region56: #{tpu_custom_call.1} parent=47 // pred_fallthru
        _
      %p4383 = scmp.lt.s32.totalorder %s22, 1
      %s4384 = scalar_select %p4383, %s22, 1
      %s4385 = smul.addr %s4384, 128
      %s4386 = smul.addr %s4385, 8
      %s4387 = scalar_lea.vmem %s7, %s4386
      // Predicated region
      $region57: #{tpu_custom_call.1} parent=47 // pred_check
        %p4388 = pneg %p202
      $region58: #{tpu_custom_call.1} parent=47 // pred_check_branch
        %4390 = sbr.rel (%p4388) target = $region60
      $region59: #{tpu_custom_call.1} parent=47 // pred_region
        _
      $region60: #{tpu_custom_call.1} parent=47 // pred_fallthru
        _
    $region48: #{tpu_custom_call.1} parent=5 // pred_fallthru
      _
    %p4391 = scmp.le.s32.totalorder 2, %s13
    // Predicated region
    $region61: #{tpu_custom_call.1} parent=5 // pred_check
      %p4392 = pneg %p4391
    $region62: #{tpu_custom_call.1} parent=5 // pred_check_branch
      %4394 = sbr.rel (%p4392) target = $region64
    $region63: #{tpu_custom_call.1} parent=5 // pred_region
      %s4395 = ssub.s32 %s13, 2
      // Predicated region
      $region65: #{tpu_custom_call.1} parent=63 // pred_check
        %p4396 = pneg %p208
      $region66: #{tpu_custom_call.1} parent=63 // pred_check_branch
        %4398 = sbr.rel (%p4396) target = $region68
      $region67: #{tpu_custom_call.1} parent=63 // pred_region
        %p4399 = scmp.lt.s32.totalorder %s24, 1
        %s4400 = scalar_select %p4399, %s24, 1
        %s4401 = smul.addr %s4400, 128
        %s4402 = smul.addr %s4401, 8
        %s4403 = scalar_lea.vmem %s7, %s4402
      $region68: #{tpu_custom_call.1} parent=63 // pred_fallthru
        _
    $region64: #{tpu_custom_call.1} parent=5 // pred_fallthru
      _
  $region6: #{tpu_custom_call.1} parent=0 // loop_footer
    %s17 = sadd.s32 1, %s13
  $region7: #{tpu_custom_call.1} parent=0 // loop_footer_branch
    %12 = sbr.rel target = $region3
  $region8: #{tpu_custom_call.1} parent=0 // loop_exit
    _

</llo_original>
